<compile_context>
chip_gen: v7x
topology: tpu7x:2x2x1
jax: 0.10.0
libtpu: 0.0.40
codegen_flags: <defaults>
</compile_context>

<pallas_src>
import math

import numpy as np
import jax
import jax.numpy as jnp
from jax.experimental import pallas as pl
from jax.experimental.pallas import tpu as pltpu

EMBED = 8            # embedding_size
NUM_HEADS = 2
HEAD_DIM = EMBED // NUM_HEADS
ENC_CH = 2048        # resnet50 output channels
H1, H2, H3 = 500, 100, 30
H1P, H2P = 512, 128  # lane-aligned paddings of H1 / H2
NEG_SLOPE = 0.01     # LeakyReLU default slope
LN_EPS = 1e-5
BN_EPS = 1e-5

# ---- packed-parameter layout (shared by wrapper and kernel) -----------------
# Matrix slab: (MAT_SLAB_ROWS, 128) f32.  name -> (row_start, rows_for_kernel, cols)
MAT_ROWS = {
    "lr_w3":  (0,   H2P, H3),      # (128, 30): rows 100..127 are zero padding
    "lr_w4":  (128, H3,  EMBED),   # (30, 8)
    "fc_w":   (160, 8,   EMBED),   # (8, 8)
    "w_in":   (168, 8,   3 * EMBED),   # fused QKV weight (8, 24)
    "wo":     (176, 8,   EMBED),   # (8, 8)
    "ffn_w1": (184, 8,   3 * EMBED),   # (8, 24)
    "ffn_w2": (192, 3 * EMBED, EMBED),  # (24, 8)
    "cls_w":  (216, 3 * EMBED, 1),      # (24, 1)
    "msum":   (240, 3 * EMBED, 3 * NUM_HEADS),  # (24, 6) head-sum matrix
    "mexp":   (264, 3 * NUM_HEADS, 3 * EMBED),  # (6, 24) head-expand matrix
    "msum8":  (272, 3 * EMBED, EMBED),          # (24, 8) token-sum matrix
    "mh":     (296, NUM_HEADS, EMBED),          # (2, 8)  head->lane expand
}
MAT_SLAB_ROWS = 304
MAT_SLAB_COLS = 128

# Vector slab: (16, 512) f32.  name -> (row, width_used_in_kernel)
VEC_ROWS = {
    "lr_b1": (0, H1P), "lr_b2": (1, H2P), "lr_b3": (2, H3), "lr_b4": (3, EMBED),
    "fc_b": (4, EMBED), "bn_scale": (5, EMBED), "bn_shift": (6, EMBED),
    "b_in": (7, 3 * EMBED), "bo": (8, EMBED),
    "ln1_g": (9, EMBED), "ln1_b": (10, EMBED),
    "ffn_b1": (11, 3 * EMBED), "ffn_b2": (12, EMBED),
    "ln2_g": (13, EMBED), "ln2_b": (14, EMBED), "cls_b": (15, 1),
}
VEC_SLAB_ROWS = 16
VEC_SLAB_COLS = 512


# ----------------------------------------------------------------------------
# Kernel: single grid-less invocation, everything VMEM-resident.
# ----------------------------------------------------------------------------
def _model_kernel(x12_ref, nm_ref, w1_ref, w2_ref, mat_ref, vec_ref, out_ref):
    B = nm_ref.shape[0]
    mats = mat_ref[...]          # (304, 128) f32
    vecs = vec_ref[...]          # (16, 512)  f32

    def mat(name):
        r0, nr, nc = MAT_ROWS[name]
        return mats[r0:r0 + nr, 0:nc]

    def vec(name):
        r, n = VEC_ROWS[name]
        return vecs[r:r + 1, 0:n]

    def leaky(x):
        return jnp.where(x > 0, x, NEG_SLOPE * x)

    def dense(x, w, b, act=True):
        y = jnp.dot(x, w, preferred_element_type=jnp.float32) + b
        return leaky(y) if act else y

    def layer_norm(x, g, b):
        mu = jnp.mean(x, axis=-1, keepdims=True)
        var = jnp.mean((x - mu) ** 2, axis=-1, keepdims=True)
        return (x - mu) * jax.lax.rsqrt(var + LN_EPS) * g + b

    # ---- latent reducer, both MRI latents fused into one (2B, .) batch ------
    h = jnp.dot(x12_ref[...], w1_ref[...], preferred_element_type=jnp.float32)
    h = leaky(h + vec("lr_b1"))                                   # (2B, 512) padded
    h = jnp.dot(h.astype(jnp.bfloat16), w2_ref[...],
                preferred_element_type=jnp.float32)
    h = leaky(h + vec("lr_b2"))                                   # (2B, 128) padded
    h = dense(h, mat("lr_w3"), vec("lr_b3"))                      # (2B, 30)
    h = dense(h, mat("lr_w4"), vec("lr_b4"))                      # (2B, 8)

    # ---- clinical branch: Linear -> LeakyReLU -> Dropout(eval) -> BN1d(eval)
    cl = dense(nm_ref[...], mat("fc_w"), vec("fc_b"))             # (B, 8)
    cl = cl * vec("bn_scale") + vec("bn_shift")

    # Token sequence [first, second, clinical] stacked along the batch axis.
    x3 = jnp.concatenate([h, cl], axis=0)                         # (3B, 8)

    # ---- Multi-head self-attention: fused QKV, head math on the MXU ---------
    qkv = dense(x3, mat("w_in"), vec("b_in"), act=False)          # (3B, 24)
    q = qkv[:, 0:EMBED]
    k = qkv[:, EMBED:2 * EMBED]
    v = qkv[:, 2 * EMBED:3 * EMBED]

    # key/value laid out token-major along lanes, replicated per query token.
    k_lane = jnp.concatenate([k[0:B], k[B:2 * B], k[2 * B:3 * B]], axis=1)  # (B, 24)
    v_lane = jnp.concatenate([v[0:B], v[B:2 * B], v[2 * B:3 * B]], axis=1)
    k_all = jnp.concatenate([k_lane, k_lane, k_lane], axis=0)     # (3B, 24)
    v_all = jnp.concatenate([v_lane, v_lane, v_lane], axis=0)
    q3 = jnp.concatenate([q, q, q], axis=1)                       # (3B, 24)

    scale = 1.0 / math.sqrt(HEAD_DIM)
    # per-(key-token, head) scores via one tiny matmul instead of XLU reductions
    s = jnp.dot(q3 * k_all, mat("msum"),
                preferred_element_type=jnp.float32) * scale       # (3B, 6)
    m = jnp.maximum(jnp.maximum(s[:, 0:2], s[:, 2:4]), s[:, 4:6])  # (3B, 2)
    e = jnp.exp(s - jnp.concatenate([m, m, m], axis=1))           # (3B, 6)
    denom = e[:, 0:2] + e[:, 2:4] + e[:, 4:6]                     # (3B, 2)
    w_rep = jnp.dot(e, mat("mexp"), preferred_element_type=jnp.float32)   # (3B, 24)
    ctx = jnp.dot(w_rep * v_all, mat("msum8"),
                  preferred_element_type=jnp.float32)             # (3B, 8)
    ctx = ctx / jnp.dot(denom, mat("mh"), preferred_element_type=jnp.float32)
    attn = dense(ctx, mat("wo"), vec("bo"), act=False)

    # ---- Add & Norm, FFN, Add & Norm (all 3 tokens at once) -----------------
    x1 = layer_norm(x3 + attn, vec("ln1_g"), vec("ln1_b"))
    f = dense(x1, mat("ffn_w1"), vec("ffn_b1"))
    f = dense(f, mat("ffn_w2"), vec("ffn_b2"), act=False)   # Dropout(eval) = id
    x2 = layer_norm(x1 + f, vec("ln2_g"), vec("ln2_b"))

    # permute(1,0,2).reshape(B, -1) == concat tokens along features.
    agg = jnp.concatenate([x2[0:B], x2[B:2 * B], x2[2 * B:3 * B]], axis=1)  # (B, 24)
    out_ref[...] = dense(agg, mat("cls_w"), vec("cls_b"), act=False)


# ----------------------------------------------------------------------------
# Wrapper
# ----------------------------------------------------------------------------
def model_forward(first_enc, second_enc, non_mri_combined, packed):
    w1p, w2p, mat_slab, vec_slab = packed
    B = first_enc.shape[0]
    # Fuse the two latent-reduce chains into one matmul batch; bf16 operands
    # (MXU-native) with f32 accumulation inside the kernel.
    x12 = jnp.concatenate([first_enc, second_enc], axis=0).astype(jnp.bfloat16)

    vmem = pl.BlockSpec(memory_space=pltpu.MemorySpace.VMEM)
    return pl.pallas_call(
        _model_kernel,
        out_shape=jax.ShapeDtypeStruct((B, 1), jnp.float32),
        in_specs=[vmem] * 6,
        out_specs=vmem,
        compiler_params=pltpu.CompilerParams(vmem_limit_bytes=16 << 20),
    )(x12, non_mri_combined, w1p, w2p, mat_slab, vec_slab)


# ----------------------------------------------------------------------------
# Parameter packing: pad/quantize the big weights, pack all small params into
# two tile-aligned slabs (one DMA each instead of ~24 descriptors).
# ----------------------------------------------------------------------------
def pack_params(p):
    (lr_w1, lr_b1, lr_w2, lr_b2, lr_w3, lr_b3, lr_w4, lr_b4,
     fc_w, fc_b, bn_scale, bn_shift, w_in, b_in, wo, bo,
     ln1_g, ln1_b, ffn_w1, ffn_b1, ffn_w2, ffn_b2,
     ln2_g, ln2_b, cls_w, cls_b) = p

    # Big weights: bf16, lane-aligned zero padding (padding is exactly neutral:
    # leaky(0)=0 and padded weight rows/cols are zero).
    w1p = jnp.zeros((ENC_CH, H1P), jnp.bfloat16).at[:, :H1].set(
        lr_w1.astype(jnp.bfloat16))
    w2p = jnp.zeros((H1P, H2P), jnp.bfloat16).at[:H1, :H2].set(
        lr_w2.astype(jnp.bfloat16))

    # Attention head mask matrices (constants baked into the matrix slab).
    head_of_lane = np.arange(EMBED) // HEAD_DIM
    mh = np.zeros((NUM_HEADS, EMBED), np.float32)
    mh[head_of_lane, np.arange(EMBED)] = 1.0
    msum = np.zeros((3 * EMBED, 3 * NUM_HEADS), np.float32)
    msum8 = np.zeros((3 * EMBED, EMBED), np.float32)
    for t in range(3):
        msum[t * EMBED:(t + 1) * EMBED, t * NUM_HEADS:(t + 1) * NUM_HEADS] = mh.T
        msum8[t * EMBED:(t + 1) * EMBED, :] = np.eye(EMBED, dtype=np.float32)
    mexp = np.ascontiguousarray(msum.T)

    mat_np = np.zeros((MAT_SLAB_ROWS, MAT_SLAB_COLS), np.float32)

    def put_mat(name, arr):
        r0, _, _ = MAT_ROWS[name]
        a = np.asarray(arr, np.float32)
        mat_np[r0:r0 + a.shape[0], :a.shape[1]] = a

    put_mat("lr_w3", lr_w3)
    put_mat("lr_w4", lr_w4)
    put_mat("fc_w", fc_w)
    put_mat("w_in", w_in)
    put_mat("wo", wo)
    put_mat("ffn_w1", ffn_w1)
    put_mat("ffn_w2", ffn_w2)
    put_mat("cls_w", cls_w)
    put_mat("msum", msum)
    put_mat("mexp", mexp)
    put_mat("msum8", msum8)
    put_mat("mh", mh)

    vec_np = np.zeros((VEC_SLAB_ROWS, VEC_SLAB_COLS), np.float32)

    def put_vec(name, arr):
        r, _ = VEC_ROWS[name]
        a = np.asarray(arr, np.float32).reshape(-1)
        vec_np[r, :a.shape[0]] = a

    for name, arr in [("lr_b1", lr_b1), ("lr_b2", lr_b2), ("lr_b3", lr_b3),
                      ("lr_b4", lr_b4), ("fc_b", fc_b), ("bn_scale", bn_scale),
                      ("bn_shift", bn_shift), ("b_in", b_in), ("bo", bo),
                      ("ln1_g", ln1_g), ("ln1_b", ln1_b), ("ffn_b1", ffn_b1),
                      ("ffn_b2", ffn_b2), ("ln2_g", ln2_g), ("ln2_b", ln2_b),
                      ("cls_b", cls_b)]:
        put_vec(name, arr)

    return w1p, w2p, jnp.asarray(mat_np), jnp.asarray(vec_np)


# ----------------------------------------------------------------------------
# Deterministic parameter init (shapes mirror the PyTorch module's __init__)
# ----------------------------------------------------------------------------
def init_params(key):
    def linear(k, fan_in, fan_out):
        k1, k2 = jax.random.split(k)
        bound = 1.0 / math.sqrt(fan_in)
        w = jax.random.uniform(k1, (fan_in, fan_out), jnp.float32, -bound, bound)
        b = jax.random.uniform(k2, (1, fan_out), jnp.float32, -bound, bound)
        return w, b

    keys = jax.random.split(key, 16)
    lr_w1, lr_b1 = linear(keys[0], ENC_CH, H1)
    lr_w2, lr_b2 = linear(keys[1], H1, H2)
    lr_w3, lr_b3 = linear(keys[2], H2, H3)
    lr_w4, lr_b4 = linear(keys[3], H3, EMBED)

    race_table = jax.random.normal(keys[4], (6, 3), jnp.float32)
    meno_table = jax.random.normal(keys[5], (3, 2), jnp.float32)

    fc_w, fc_b = linear(keys[6], 3 + 3 + 2, EMBED)
    # BatchNorm1d eval with fresh running stats: mean=0, var=1, gamma=1, beta=0
    bn_gamma = jnp.ones((1, EMBED), jnp.float32)
    bn_beta = jnp.zeros((1, EMBED), jnp.float32)
    bn_mean = jnp.zeros((1, EMBED), jnp.float32)
    bn_var = jnp.ones((1, EMBED), jnp.float32)
    bn_scale = bn_gamma / jnp.sqrt(bn_var + BN_EPS)
    bn_shift = bn_beta - bn_mean * bn_scale

    wq, bq = linear(keys[7], EMBED, EMBED)
    wk, bk = linear(keys[8], EMBED, EMBED)
    wv, bv = linear(keys[9], EMBED, EMBED)
    w_in = jnp.concatenate([wq, wk, wv], axis=1)   # fused QKV weight (8, 24)
    b_in = jnp.concatenate([bq, bk, bv], axis=1)   # fused QKV bias   (1, 24)
    wo, bo = linear(keys[10], EMBED, EMBED)

    ln1_g = jnp.ones((1, EMBED), jnp.float32)
    ln1_b = jnp.zeros((1, EMBED), jnp.float32)
    ffn_w1, ffn_b1 = linear(keys[11], EMBED, EMBED * 3)
    ffn_w2, ffn_b2 = linear(keys[12], EMBED * 3, EMBED)
    ln2_g = jnp.ones((1, EMBED), jnp.float32)
    ln2_b = jnp.zeros((1, EMBED), jnp.float32)

    cls_w, cls_b = linear(keys[13], EMBED * 3, 1)

    params = [lr_w1, lr_b1, lr_w2, lr_b2, lr_w3, lr_b3, lr_w4, lr_b4,
              fc_w, fc_b, bn_scale, bn_shift,
              w_in, b_in, wo, bo,
              ln1_g, ln1_b, ffn_w1, ffn_b1, ffn_w2, ffn_b2,
              ln2_g, ln2_b, cls_w, cls_b]
    return params, race_table, meno_table


# ----------------------------------------------------------------------------
# Pure-JAX reference (mirrors PyTorch eval-mode semantics) for validation.
# Uses the same bf16 lr_w1 / lr_w2 quantization as the kernel.
# ----------------------------------------------------------------------------
def reference_forward(first_enc, second_enc, nm, p):
    (lr_w1, lr_b1, lr_w2, lr_b2, lr_w3, lr_b3, lr_w4, lr_b4,
     fc_w, fc_b, bn_scale, bn_shift,
     w_in, b_in, wo, bo,
     ln1_g, ln1_b, ffn_w1, ffn_b1, ffn_w2, ffn_b2,
     ln2_g, ln2_b, cls_w, cls_b) = p

    leaky = lambda x: jnp.where(x > 0, x, NEG_SLOPE * x)

    def reduce(x):
        h = jnp.dot(x.astype(jnp.bfloat16), lr_w1.astype(jnp.bfloat16),
                    preferred_element_type=jnp.float32) + lr_b1
        h = leaky(h)
        h = jnp.dot(h.astype(jnp.bfloat16), lr_w2.astype(jnp.bfloat16),
                    preferred_element_type=jnp.float32) + lr_b2
        h = leaky(h)
        for w, b in [(lr_w3, lr_b3), (lr_w4, lr_b4)]:
            h = leaky(h @ w + b)
        return h

    r1, r2 = reduce(first_enc), reduce(second_enc)
    nm_out = leaky(nm @ fc_w + fc_b) * bn_scale + bn_shift

    x = jnp.stack([r1, r2, nm_out], axis=0)                   # (3, B, E)
    B = x.shape[1]
    wq, wk, wv = w_in[:, :EMBED], w_in[:, EMBED:2 * EMBED], w_in[:, 2 * EMBED:]
    bq, bk, bv = b_in[:, :EMBED], b_in[:, EMBED:2 * EMBED], b_in[:, 2 * EMBED:]
    q = (x @ wq + bq).reshape(3, B, NUM_HEADS, HEAD_DIM)
    k = (x @ wk + bk).reshape(3, B, NUM_HEADS, HEAD_DIM)
    v = (x @ wv + bv).reshape(3, B, NUM_HEADS, HEAD_DIM)
    scores = jnp.einsum('sbhd,tbhd->bhst', q, k) / math.sqrt(HEAD_DIM)
    probs = jax.nn.softmax(scores, axis=-1)
    o = jnp.einsum('bhst,tbhd->sbhd', probs, v).reshape(3, B, EMBED)
    attn = o @ wo + bo

    def ln(y, g, b):
        mu = jnp.mean(y, axis=-1, keepdims=True)
        var = jnp.mean((y - mu) ** 2, axis=-1, keepdims=True)
        return (y - mu) / jnp.sqrt(var + LN_EPS) * g + b

    x1 = ln(x + attn, ln1_g, ln1_b)
    f = leaky(x1 @ ffn_w1 + ffn_b1) @ ffn_w2 + ffn_b2
    x2 = ln(x1 + f, ln2_g, ln2_b)
    agg = jnp.transpose(x2, (1, 0, 2)).reshape(B, -1)
    return agg @ cls_w + cls_b


if __name__ == "__main__":
    B = 4
    key = jax.random.PRNGKey(0)
    k_par, k_fe, k_se, k_sc = jax.random.split(key, 4)

    params, race_table, meno_table = init_params(k_par)
    packed = pack_params(params)

    # Stand-ins for the (undefined) 3D ResNet-50 encoder outputs.
    first_enc = jax.random.normal(k_fe, (B, ENC_CH), jnp.float32)
    second_enc = jax.random.normal(k_se, (B, ENC_CH), jnp.float32)

    # non_mri_data flattened to (B, 12): 3 scalars, 6-way race OHE, 3-way menopause OHE.
    scalar_feats = jax.random.normal(k_sc, (B, 3), jnp.float32)
    race_idx = jnp.array([0, 2, 5, 1], dtype=jnp.int32)
    meno_idx = jnp.array([1, 0, 2, 1], dtype=jnp.int32)
    race_ohe = jax.nn.one_hot(race_idx, 6, dtype=jnp.float32)
    meno_ohe = jax.nn.one_hot(meno_idx, 3, dtype=jnp.float32)
    flat_non_mri = jnp.concatenate([scalar_feats, race_ohe, meno_ohe], axis=1)

    # Glue: argmax over one-hot + tiny embedding gathers stay in plain JAX.
    race_indices = jnp.argmax(flat_non_mri[:, 3:9], axis=1)
    meno_indices = jnp.argmax(flat_non_mri[:, 9:12], axis=1)
    combined_non_mri = jnp.concatenate(
        [flat_non_mri[:, :3],
         jnp.take(race_table, race_indices, axis=0),
         jnp.take(meno_table, meno_indices, axis=0)], axis=1)      # (B, 8)

    logits = model_forward(first_enc, second_enc, combined_non_mri, packed)
    logits = jax.block_until_ready(logits)

    ref = reference_forward(first_enc, second_enc, combined_non_mri, params)
    assert logits.shape == (B, 1)
    assert jnp.allclose(logits, ref, atol=5e-3, rtol=5e-3), (logits, ref)

    print("KERNEL_OK")
</pallas_src>

<mosaic_0001>
module attributes {stable_mosaic.version = 11 : i64} {
  func.func @_model_kernel(%arg0: memref<8x2048xbf16, #tpu.memory_space<vmem>>, %arg1: memref<4x8xf32, #tpu.memory_space<vmem>>, %arg2: memref<2048x512xbf16, #tpu.memory_space<vmem>>, %arg3: memref<512x128xbf16, #tpu.memory_space<vmem>>, %arg4: memref<304x128xf32, #tpu.memory_space<vmem>>, %arg5: memref<16x512xf32, #tpu.memory_space<vmem>>, %arg6: memref<4x1xf32, #tpu.memory_space<vmem>>) attributes {dimension_semantics = [], scalar_prefetch = 0 : i64, scratch_operands = 0 : i64, tpu.core_type = #tpu.core_type<tc>} {
    %c0 = arith.constant 0 : index
    %c0_0 = arith.constant 0 : index
    %0 = vector.load %arg4[%c0, %c0_0] : memref<304x128xf32, #tpu.memory_space<vmem>>, vector<304x128xf32>
    %c0_1 = arith.constant 0 : index
    %c0_2 = arith.constant 0 : index
    %1 = vector.load %arg5[%c0_1, %c0_2] : memref<16x512xf32, #tpu.memory_space<vmem>>, vector<16x512xf32>
    %c0_3 = arith.constant 0 : index
    %c0_4 = arith.constant 0 : index
    %2 = vector.load %arg0[%c0_3, %c0_4] : memref<8x2048xbf16, #tpu.memory_space<vmem>>, vector<8x2048xbf16>
    %c0_5 = arith.constant 0 : index
    %c0_6 = arith.constant 0 : index
    %3 = vector.load %arg2[%c0_5, %c0_6] : memref<2048x512xbf16, #tpu.memory_space<vmem>>, vector<2048x512xbf16>
    %cst = arith.constant dense<0.000000e+00> : vector<8x512xf32>
    %4 = tpu.matmul %2, %3, %cst {dimension_numbers = #tpu.dot_dimension_numbers<[1], [0], [0], [1], [0, 0, 1, 1], [], []>} : vector<8x2048xbf16>, vector<2048x512xbf16>, vector<8x512xf32> -> vector<8x512xf32>
    %5 = vector.extract_strided_slice %1 {offsets = [0, 0], sizes = [1, 512], strides = [1, 1]} : vector<16x512xf32> to vector<1x512xf32>
    %6 = vector.broadcast %5 : vector<1x512xf32> to vector<8x512xf32>
    %7 = arith.addf %4, %6 : vector<8x512xf32>
    %cst_7 = arith.constant 0.000000e+00 : f32
    %8 = vector.broadcast %cst_7 : f32 to vector<8x512xf32>
    %9 = arith.cmpf ogt, %7, %8 : vector<8x512xf32>
    %cst_8 = arith.constant 0.00999999977 : f32
    %10 = vector.broadcast %cst_8 : f32 to vector<8x512xf32>
    %11 = arith.mulf %10, %7 : vector<8x512xf32>
    %12 = arith.select %9, %7, %11 : vector<8x512xi1>, vector<8x512xf32>
    %13 = arith.truncf %12 : vector<8x512xf32> to vector<8x512xbf16>
    %c0_9 = arith.constant 0 : index
    %c0_10 = arith.constant 0 : index
    %14 = vector.load %arg3[%c0_9, %c0_10] : memref<512x128xbf16, #tpu.memory_space<vmem>>, vector<512x128xbf16>
    %cst_11 = arith.constant dense<0.000000e+00> : vector<8x128xf32>
    %15 = tpu.matmul %13, %14, %cst_11 {dimension_numbers = #tpu.dot_dimension_numbers<[1], [0], [0], [1], [0, 0, 1, 1], [], []>} : vector<8x512xbf16>, vector<512x128xbf16>, vector<8x128xf32> -> vector<8x128xf32>
    %16 = vector.extract_strided_slice %1 {offsets = [1, 0], sizes = [1, 128], strides = [1, 1]} : vector<16x512xf32> to vector<1x128xf32>
    %17 = vector.broadcast %16 : vector<1x128xf32> to vector<8x128xf32>
    %18 = arith.addf %15, %17 : vector<8x128xf32>
    %cst_12 = arith.constant 0.000000e+00 : f32
    %19 = vector.broadcast %cst_12 : f32 to vector<8x128xf32>
    %20 = arith.cmpf ogt, %18, %19 : vector<8x128xf32>
    %cst_13 = arith.constant 0.00999999977 : f32
    %21 = vector.broadcast %cst_13 : f32 to vector<8x128xf32>
    %22 = arith.mulf %21, %18 : vector<8x128xf32>
    %23 = arith.select %20, %18, %22 : vector<8x128xi1>, vector<8x128xf32>
    %24 = vector.extract_strided_slice %0 {offsets = [0, 0], sizes = [128, 30], strides = [1, 1]} : vector<304x128xf32> to vector<128x30xf32>
    %25 = vector.extract_strided_slice %1 {offsets = [2, 0], sizes = [1, 30], strides = [1, 1]} : vector<16x512xf32> to vector<1x30xf32>
    %cst_14 = arith.constant dense<0.000000e+00> : vector<8x30xf32>
    %26 = tpu.matmul %23, %24, %cst_14 {dimension_numbers = #tpu.dot_dimension_numbers<[1], [0], [0], [1], [0, 0, 1, 1], [], []>} : vector<8x128xf32>, vector<128x30xf32>, vector<8x30xf32> -> vector<8x30xf32>
    %27 = vector.broadcast %25 : vector<1x30xf32> to vector<8x30xf32>
    %28 = arith.addf %26, %27 : vector<8x30xf32>
    %cst_15 = arith.constant 0.000000e+00 : f32
    %29 = vector.broadcast %cst_15 : f32 to vector<8x30xf32>
    %30 = arith.cmpf ogt, %28, %29 : vector<8x30xf32>
    %cst_16 = arith.constant 0.00999999977 : f32
    %31 = vector.broadcast %cst_16 : f32 to vector<8x30xf32>
    %32 = arith.mulf %31, %28 : vector<8x30xf32>
    %33 = arith.select %30, %28, %32 : vector<8x30xi1>, vector<8x30xf32>
    %34 = vector.extract_strided_slice %0 {offsets = [128, 0], sizes = [30, 8], strides = [1, 1]} : vector<304x128xf32> to vector<30x8xf32>
    %35 = vector.extract_strided_slice %1 {offsets = [3, 0], sizes = [1, 8], strides = [1, 1]} : vector<16x512xf32> to vector<1x8xf32>
    %cst_17 = arith.constant dense<0.000000e+00> : vector<8x8xf32>
    %36 = tpu.matmul %33, %34, %cst_17 {dimension_numbers = #tpu.dot_dimension_numbers<[1], [0], [0], [1], [0, 0, 1, 1], [], []>} : vector<8x30xf32>, vector<30x8xf32>, vector<8x8xf32> -> vector<8x8xf32>
    %37 = vector.broadcast %35 : vector<1x8xf32> to vector<8x8xf32>
    %38 = arith.addf %36, %37 : vector<8x8xf32>
    %cst_18 = arith.constant 0.000000e+00 : f32
    %39 = vector.broadcast %cst_18 : f32 to vector<8x8xf32>
    %40 = arith.cmpf ogt, %38, %39 : vector<8x8xf32>
    %cst_19 = arith.constant 0.00999999977 : f32
    %41 = vector.broadcast %cst_19 : f32 to vector<8x8xf32>
    %42 = arith.mulf %41, %38 : vector<8x8xf32>
    %43 = arith.select %40, %38, %42 : vector<8x8xi1>, vector<8x8xf32>
    %c0_20 = arith.constant 0 : index
    %c0_21 = arith.constant 0 : index
    %44 = vector.load %arg1[%c0_20, %c0_21] : memref<4x8xf32, #tpu.memory_space<vmem>>, vector<4x8xf32>
    %45 = vector.extract_strided_slice %0 {offsets = [160, 0], sizes = [8, 8], strides = [1, 1]} : vector<304x128xf32> to vector<8x8xf32>
    %46 = vector.extract_strided_slice %1 {offsets = [4, 0], sizes = [1, 8], strides = [1, 1]} : vector<16x512xf32> to vector<1x8xf32>
    %cst_22 = arith.constant dense<0.000000e+00> : vector<4x8xf32>
    %47 = tpu.matmul %44, %45, %cst_22 {dimension_numbers = #tpu.dot_dimension_numbers<[1], [0], [0], [1], [0, 0, 1, 1], [], []>} : vector<4x8xf32>, vector<8x8xf32>, vector<4x8xf32> -> vector<4x8xf32>
    %48 = vector.broadcast %46 : vector<1x8xf32> to vector<4x8xf32>
    %49 = arith.addf %47, %48 : vector<4x8xf32>
    %cst_23 = arith.constant 0.000000e+00 : f32
    %50 = vector.broadcast %cst_23 : f32 to vector<4x8xf32>
    %51 = arith.cmpf ogt, %49, %50 : vector<4x8xf32>
    %cst_24 = arith.constant 0.00999999977 : f32
    %52 = vector.broadcast %cst_24 : f32 to vector<4x8xf32>
    %53 = arith.mulf %52, %49 : vector<4x8xf32>
    %54 = arith.select %51, %49, %53 : vector<4x8xi1>, vector<4x8xf32>
    %55 = vector.extract_strided_slice %1 {offsets = [5, 0], sizes = [1, 8], strides = [1, 1]} : vector<16x512xf32> to vector<1x8xf32>
    %56 = vector.broadcast %55 : vector<1x8xf32> to vector<4x8xf32>
    %57 = arith.mulf %54, %56 : vector<4x8xf32>
    %58 = vector.extract_strided_slice %1 {offsets = [6, 0], sizes = [1, 8], strides = [1, 1]} : vector<16x512xf32> to vector<1x8xf32>
    %59 = vector.broadcast %58 : vector<1x8xf32> to vector<4x8xf32>
    %60 = arith.addf %57, %59 : vector<4x8xf32>
    %61 = tpu.concatenate %43, %60 in 0 : vector<8x8xf32>, vector<4x8xf32> -> vector<12x8xf32>
    %62 = vector.extract_strided_slice %0 {offsets = [168, 0], sizes = [8, 24], strides = [1, 1]} : vector<304x128xf32> to vector<8x24xf32>
    %63 = vector.extract_strided_slice %1 {offsets = [7, 0], sizes = [1, 24], strides = [1, 1]} : vector<16x512xf32> to vector<1x24xf32>
    %cst_25 = arith.constant dense<0.000000e+00> : vector<12x24xf32>
    %64 = tpu.matmul %61, %62, %cst_25 {dimension_numbers = #tpu.dot_dimension_numbers<[1], [0], [0], [1], [0, 0, 1, 1], [], []>} : vector<12x8xf32>, vector<8x24xf32>, vector<12x24xf32> -> vector<12x24xf32>
    %65 = vector.broadcast %63 : vector<1x24xf32> to vector<12x24xf32>
    %66 = arith.addf %64, %65 : vector<12x24xf32>
    %67 = vector.extract_strided_slice %66 {offsets = [0, 0], sizes = [12, 8], strides = [1, 1]} : vector<12x24xf32> to vector<12x8xf32>
    %68 = vector.extract_strided_slice %66 {offsets = [0, 8], sizes = [12, 8], strides = [1, 1]} : vector<12x24xf32> to vector<12x8xf32>
    %69 = vector.extract_strided_slice %66 {offsets = [0, 16], sizes = [12, 8], strides = [1, 1]} : vector<12x24xf32> to vector<12x8xf32>
    %70 = vector.extract_strided_slice %68 {offsets = [0, 0], sizes = [4, 8], strides = [1, 1]} : vector<12x8xf32> to vector<4x8xf32>
    %71 = vector.extract_strided_slice %68 {offsets = [4, 0], sizes = [4, 8], strides = [1, 1]} : vector<12x8xf32> to vector<4x8xf32>
    %72 = vector.extract_strided_slice %68 {offsets = [8, 0], sizes = [4, 8], strides = [1, 1]} : vector<12x8xf32> to vector<4x8xf32>
    %73 = tpu.concatenate %70, %71, %72 in 1 : vector<4x8xf32>, vector<4x8xf32>, vector<4x8xf32> -> vector<4x24xf32>
    %74 = vector.extract_strided_slice %69 {offsets = [0, 0], sizes = [4, 8], strides = [1, 1]} : vector<12x8xf32> to vector<4x8xf32>
    %75 = vector.extract_strided_slice %69 {offsets = [4, 0], sizes = [4, 8], strides = [1, 1]} : vector<12x8xf32> to vector<4x8xf32>
    %76 = vector.extract_strided_slice %69 {offsets = [8, 0], sizes = [4, 8], strides = [1, 1]} : vector<12x8xf32> to vector<4x8xf32>
    %77 = tpu.concatenate %74, %75, %76 in 1 : vector<4x8xf32>, vector<4x8xf32>, vector<4x8xf32> -> vector<4x24xf32>
    %78 = tpu.concatenate %73, %73, %73 in 0 : vector<4x24xf32>, vector<4x24xf32>, vector<4x24xf32> -> vector<12x24xf32>
    %79 = tpu.concatenate %77, %77, %77 in 0 : vector<4x24xf32>, vector<4x24xf32>, vector<4x24xf32> -> vector<12x24xf32>
    %80 = tpu.concatenate %67, %67, %67 in 1 : vector<12x8xf32>, vector<12x8xf32>, vector<12x8xf32> -> vector<12x24xf32>
    %81 = arith.mulf %80, %78 : vector<12x24xf32>
    %82 = vector.extract_strided_slice %0 {offsets = [240, 0], sizes = [24, 6], strides = [1, 1]} : vector<304x128xf32> to vector<24x6xf32>
    %cst_26 = arith.constant dense<0.000000e+00> : vector<12x6xf32>
    %83 = tpu.matmul %81, %82, %cst_26 {dimension_numbers = #tpu.dot_dimension_numbers<[1], [0], [0], [1], [0, 0, 1, 1], [], []>} : vector<12x24xf32>, vector<24x6xf32>, vector<12x6xf32> -> vector<12x6xf32>
    %cst_27 = arith.constant 5.000000e-01 : f32
    %84 = vector.broadcast %cst_27 : f32 to vector<12x6xf32>
    %85 = arith.mulf %83, %84 : vector<12x6xf32>
    %86 = vector.extract_strided_slice %85 {offsets = [0, 0], sizes = [12, 2], strides = [1, 1]} : vector<12x6xf32> to vector<12x2xf32>
    %87 = vector.extract_strided_slice %85 {offsets = [0, 2], sizes = [12, 2], strides = [1, 1]} : vector<12x6xf32> to vector<12x2xf32>
    %88 = arith.maximumf %86, %87 : vector<12x2xf32>
    %89 = vector.extract_strided_slice %85 {offsets = [0, 4], sizes = [12, 2], strides = [1, 1]} : vector<12x6xf32> to vector<12x2xf32>
    %90 = arith.maximumf %88, %89 : vector<12x2xf32>
    %91 = tpu.concatenate %90, %90, %90 in 1 : vector<12x2xf32>, vector<12x2xf32>, vector<12x2xf32> -> vector<12x6xf32>
    %92 = arith.subf %85, %91 : vector<12x6xf32>
    %93 = math.exp %92 : vector<12x6xf32>
    %94 = vector.extract_strided_slice %93 {offsets = [0, 0], sizes = [12, 2], strides = [1, 1]} : vector<12x6xf32> to vector<12x2xf32>
    %95 = vector.extract_strided_slice %93 {offsets = [0, 2], sizes = [12, 2], strides = [1, 1]} : vector<12x6xf32> to vector<12x2xf32>
    %96 = arith.addf %94, %95 : vector<12x2xf32>
    %97 = vector.extract_strided_slice %93 {offsets = [0, 4], sizes = [12, 2], strides = [1, 1]} : vector<12x6xf32> to vector<12x2xf32>
    %98 = arith.addf %96, %97 : vector<12x2xf32>
    %99 = vector.extract_strided_slice %0 {offsets = [264, 0], sizes = [6, 24], strides = [1, 1]} : vector<304x128xf32> to vector<6x24xf32>
    %cst_28 = arith.constant dense<0.000000e+00> : vector<12x24xf32>
    %100 = tpu.matmul %93, %99, %cst_28 {dimension_numbers = #tpu.dot_dimension_numbers<[1], [0], [0], [1], [0, 0, 1, 1], [], []>} : vector<12x6xf32>, vector<6x24xf32>, vector<12x24xf32> -> vector<12x24xf32>
    %101 = arith.mulf %100, %79 : vector<12x24xf32>
    %102 = vector.extract_strided_slice %0 {offsets = [272, 0], sizes = [24, 8], strides = [1, 1]} : vector<304x128xf32> to vector<24x8xf32>
    %cst_29 = arith.constant dense<0.000000e+00> : vector<12x8xf32>
    %103 = tpu.matmul %101, %102, %cst_29 {dimension_numbers = #tpu.dot_dimension_numbers<[1], [0], [0], [1], [0, 0, 1, 1], [], []>} : vector<12x24xf32>, vector<24x8xf32>, vector<12x8xf32> -> vector<12x8xf32>
    %104 = vector.extract_strided_slice %0 {offsets = [296, 0], sizes = [2, 8], strides = [1, 1]} : vector<304x128xf32> to vector<2x8xf32>
    %cst_30 = arith.constant dense<0.000000e+00> : vector<12x8xf32>
    %105 = tpu.matmul %98, %104, %cst_30 {dimension_numbers = #tpu.dot_dimension_numbers<[1], [0], [0], [1], [0, 0, 1, 1], [], []>} : vector<12x2xf32>, vector<2x8xf32>, vector<12x8xf32> -> vector<12x8xf32>
    %106 = arith.divf %103, %105 : vector<12x8xf32>
    %107 = vector.extract_strided_slice %0 {offsets = [176, 0], sizes = [8, 8], strides = [1, 1]} : vector<304x128xf32> to vector<8x8xf32>
    %108 = vector.extract_strided_slice %1 {offsets = [8, 0], sizes = [1, 8], strides = [1, 1]} : vector<16x512xf32> to vector<1x8xf32>
    %cst_31 = arith.constant dense<0.000000e+00> : vector<12x8xf32>
    %109 = tpu.matmul %106, %107, %cst_31 {dimension_numbers = #tpu.dot_dimension_numbers<[1], [0], [0], [1], [0, 0, 1, 1], [], []>} : vector<12x8xf32>, vector<8x8xf32>, vector<12x8xf32> -> vector<12x8xf32>
    %110 = vector.broadcast %108 : vector<1x8xf32> to vector<12x8xf32>
    %111 = arith.addf %109, %110 : vector<12x8xf32>
    %112 = arith.addf %61, %111 : vector<12x8xf32>
    %113 = vector.extract_strided_slice %1 {offsets = [9, 0], sizes = [1, 8], strides = [1, 1]} : vector<16x512xf32> to vector<1x8xf32>
    %114 = vector.extract_strided_slice %1 {offsets = [10, 0], sizes = [1, 8], strides = [1, 1]} : vector<16x512xf32> to vector<1x8xf32>
    %cst_32 = arith.constant dense<0.000000e+00> : vector<12xf32>
    %115 = vector.multi_reduction <add>, %112, %cst_32 [1] : vector<12x8xf32> to vector<12xf32>
    %116 = vector.shape_cast %115 : vector<12xf32> to vector<12x1xf32>
    %cst_33 = arith.constant 8.000000e+00 : f32
    %117 = vector.broadcast %cst_33 : f32 to vector<12x1xf32>
    %118 = arith.divf %116, %117 : vector<12x1xf32>
    %119 = vector.broadcast %118 : vector<12x1xf32> to vector<12x8xf32>
    %120 = arith.subf %112, %119 : vector<12x8xf32>
    %121 = arith.mulf %120, %120 : vector<12x8xf32>
    %cst_34 = arith.constant dense<0.000000e+00> : vector<12xf32>
    %122 = vector.multi_reduction <add>, %121, %cst_34 [1] : vector<12x8xf32> to vector<12xf32>
    %123 = vector.shape_cast %122 : vector<12xf32> to vector<12x1xf32>
    %cst_35 = arith.constant 8.000000e+00 : f32
    %124 = vector.broadcast %cst_35 : f32 to vector<12x1xf32>
    %125 = arith.divf %123, %124 : vector<12x1xf32>
    %126 = vector.broadcast %118 : vector<12x1xf32> to vector<12x8xf32>
    %127 = arith.subf %112, %126 : vector<12x8xf32>
    %cst_36 = arith.constant 9.99999974E-6 : f32
    %128 = vector.broadcast %cst_36 : f32 to vector<12x1xf32>
    %129 = arith.addf %125, %128 : vector<12x1xf32>
    %130 = math.rsqrt %129 : vector<12x1xf32>
    %131 = vector.broadcast %130 : vector<12x1xf32> to vector<12x8xf32>
    %132 = arith.mulf %127, %131 : vector<12x8xf32>
    %133 = vector.broadcast %113 : vector<1x8xf32> to vector<12x8xf32>
    %134 = arith.mulf %132, %133 : vector<12x8xf32>
    %135 = vector.broadcast %114 : vector<1x8xf32> to vector<12x8xf32>
    %136 = arith.addf %134, %135 : vector<12x8xf32>
    %137 = vector.extract_strided_slice %0 {offsets = [184, 0], sizes = [8, 24], strides = [1, 1]} : vector<304x128xf32> to vector<8x24xf32>
    %138 = vector.extract_strided_slice %1 {offsets = [11, 0], sizes = [1, 24], strides = [1, 1]} : vector<16x512xf32> to vector<1x24xf32>
    %cst_37 = arith.constant dense<0.000000e+00> : vector<12x24xf32>
    %139 = tpu.matmul %136, %137, %cst_37 {dimension_numbers = #tpu.dot_dimension_numbers<[1], [0], [0], [1], [0, 0, 1, 1], [], []>} : vector<12x8xf32>, vector<8x24xf32>, vector<12x24xf32> -> vector<12x24xf32>
    %140 = vector.broadcast %138 : vector<1x24xf32> to vector<12x24xf32>
    %141 = arith.addf %139, %140 : vector<12x24xf32>
    %cst_38 = arith.constant 0.000000e+00 : f32
    %142 = vector.broadcast %cst_38 : f32 to vector<12x24xf32>
    %143 = arith.cmpf ogt, %141, %142 : vector<12x24xf32>
    %cst_39 = arith.constant 0.00999999977 : f32
    %144 = vector.broadcast %cst_39 : f32 to vector<12x24xf32>
    %145 = arith.mulf %144, %141 : vector<12x24xf32>
    %146 = arith.select %143, %141, %145 : vector<12x24xi1>, vector<12x24xf32>
    %147 = vector.extract_strided_slice %0 {offsets = [192, 0], sizes = [24, 8], strides = [1, 1]} : vector<304x128xf32> to vector<24x8xf32>
    %148 = vector.extract_strided_slice %1 {offsets = [12, 0], sizes = [1, 8], strides = [1, 1]} : vector<16x512xf32> to vector<1x8xf32>
    %cst_40 = arith.constant dense<0.000000e+00> : vector<12x8xf32>
    %149 = tpu.matmul %146, %147, %cst_40 {dimension_numbers = #tpu.dot_dimension_numbers<[1], [0], [0], [1], [0, 0, 1, 1], [], []>} : vector<12x24xf32>, vector<24x8xf32>, vector<12x8xf32> -> vector<12x8xf32>
    %150 = vector.broadcast %148 : vector<1x8xf32> to vector<12x8xf32>
    %151 = arith.addf %149, %150 : vector<12x8xf32>
    %152 = arith.addf %136, %151 : vector<12x8xf32>
    %153 = vector.extract_strided_slice %1 {offsets = [13, 0], sizes = [1, 8], strides = [1, 1]} : vector<16x512xf32> to vector<1x8xf32>
    %154 = vector.extract_strided_slice %1 {offsets = [14, 0], sizes = [1, 8], strides = [1, 1]} : vector<16x512xf32> to vector<1x8xf32>
    %cst_41 = arith.constant dense<0.000000e+00> : vector<12xf32>
    %155 = vector.multi_reduction <add>, %152, %cst_41 [1] : vector<12x8xf32> to vector<12xf32>
    %156 = vector.shape_cast %155 : vector<12xf32> to vector<12x1xf32>
    %cst_42 = arith.constant 8.000000e+00 : f32
    %157 = vector.broadcast %cst_42 : f32 to vector<12x1xf32>
    %158 = arith.divf %156, %157 : vector<12x1xf32>
    %159 = vector.broadcast %158 : vector<12x1xf32> to vector<12x8xf32>
    %160 = arith.subf %152, %159 : vector<12x8xf32>
    %161 = arith.mulf %160, %160 : vector<12x8xf32>
    %cst_43 = arith.constant dense<0.000000e+00> : vector<12xf32>
    %162 = vector.multi_reduction <add>, %161, %cst_43 [1] : vector<12x8xf32> to vector<12xf32>
    %163 = vector.shape_cast %162 : vector<12xf32> to vector<12x1xf32>
    %cst_44 = arith.constant 8.000000e+00 : f32
    %164 = vector.broadcast %cst_44 : f32 to vector<12x1xf32>
    %165 = arith.divf %163, %164 : vector<12x1xf32>
    %166 = vector.broadcast %158 : vector<12x1xf32> to vector<12x8xf32>
    %167 = arith.subf %152, %166 : vector<12x8xf32>
    %cst_45 = arith.constant 9.99999974E-6 : f32
    %168 = vector.broadcast %cst_45 : f32 to vector<12x1xf32>
    %169 = arith.addf %165, %168 : vector<12x1xf32>
    %170 = math.rsqrt %169 : vector<12x1xf32>
    %171 = vector.broadcast %170 : vector<12x1xf32> to vector<12x8xf32>
    %172 = arith.mulf %167, %171 : vector<12x8xf32>
    %173 = vector.broadcast %153 : vector<1x8xf32> to vector<12x8xf32>
    %174 = arith.mulf %172, %173 : vector<12x8xf32>
    %175 = vector.broadcast %154 : vector<1x8xf32> to vector<12x8xf32>
    %176 = arith.addf %174, %175 : vector<12x8xf32>
    %177 = vector.extract_strided_slice %176 {offsets = [0, 0], sizes = [4, 8], strides = [1, 1]} : vector<12x8xf32> to vector<4x8xf32>
    %178 = vector.extract_strided_slice %176 {offsets = [4, 0], sizes = [4, 8], strides = [1, 1]} : vector<12x8xf32> to vector<4x8xf32>
    %179 = vector.extract_strided_slice %176 {offsets = [8, 0], sizes = [4, 8], strides = [1, 1]} : vector<12x8xf32> to vector<4x8xf32>
    %180 = tpu.concatenate %177, %178, %179 in 1 : vector<4x8xf32>, vector<4x8xf32>, vector<4x8xf32> -> vector<4x24xf32>
    %181 = vector.extract_strided_slice %0 {offsets = [216, 0], sizes = [24, 1], strides = [1, 1]} : vector<304x128xf32> to vector<24x1xf32>
    %182 = vector.extract_strided_slice %1 {offsets = [15, 0], sizes = [1, 1], strides = [1, 1]} : vector<16x512xf32> to vector<1x1xf32>
    %cst_46 = arith.constant dense<0.000000e+00> : vector<4x1xf32>
    %183 = tpu.matmul %180, %181, %cst_46 {dimension_numbers = #tpu.dot_dimension_numbers<[1], [0], [0], [1], [0, 0, 1, 1], [], []>} : vector<4x24xf32>, vector<24x1xf32>, vector<4x1xf32> -> vector<4x1xf32>
    %184 = vector.broadcast %182 : vector<1x1xf32> to vector<4x1xf32>
    %185 = arith.addf %183, %184 : vector<4x1xf32>
    %c0_47 = arith.constant 0 : index
    %c0_48 = arith.constant 0 : index
    %186 = vector.load %arg6[%c0_47, %c0_48] : memref<4x1xf32, #tpu.memory_space<vmem>>, vector<4x1xf32>
    tpu.vector_store %arg6[%c0_47, %c0_48], %185 {strides = array<i32>} : memref<4x1xf32, #tpu.memory_space<vmem>>, vector<4x1xf32>,
    return
  }
}

</mosaic_0001>

<llo_original>
// kernel: tpu_custom_call.1
$region0: #{tpu_custom_call.1}
  #allocation0 [shape = 'u32[]', space=smem, size = 0x4, offset = 0x4, fixed_abs, tag = 'smem constant byte address 0x4 - core index']
  #allocation1 [shape = 'u32[144,128]{1,0:T(1,128)}', space=vmem, size = 0x12000, scoped, tag = 'internal scratch']
  %s0 = inlined_call_operand.hbm [shape: bf16[8,2048], index: 0, kind: input, shape index: {}]
  %s1 = inlined_call_operand.hbm [shape: f32[4,8], index: 1, kind: input, shape index: {}]
  %s2 = inlined_call_operand.hbm [shape: bf16[2048,512], index: 2, kind: input, shape index: {}]
  %s3 = inlined_call_operand.hbm [shape: bf16[512,128], index: 3, kind: input, shape index: {}]
  %s4 = inlined_call_operand.hbm [shape: f32[304,128], index: 4, kind: input, shape index: {}]
  %s5 = inlined_call_operand.hbm [shape: f32[16,512], index: 5, kind: input, shape index: {}]
  %s6 = inlined_call_operand.vmem [shape: f32[4,1], index: 6, kind: output, shape index: {}]
  %s7 = sld [smem:[#allocation0]]
  $region58: #{tpu_custom_call.1} parent=0
    _
  %s9 = ssub.s32 1, %s7
  %s10 = scalar_select 0, %s9, %s7
  $region1: #{tpu_custom_call.1} parent=0
    #allocation2 [shape = 'u8[32768]{0}', space=vmem, size = 0x8000, scoped, tag = 'input window, operand 0, single buffered']
    #allocation3 [shape = 's32[1]{0}', space=sflag, size = 0x4, scoped, tag = 'scoped memory for tpu_custom_call.1']
    #allocation4 [shape = 'u8[2048]{0}', space=vmem, size = 0x800, scoped, tag = 'input window, operand 1, single buffered']
    #allocation5 [shape = 's32[1]{0}', space=sflag, size = 0x4, scoped, tag = 'scoped memory for tpu_custom_call.1']
    #allocation6 [shape = 'u8[2097152]{0}', space=vmem, size = 0x200000, scoped, tag = 'input window, operand 2, single buffered']
    #allocation7 [shape = 'u8[131072]{0}', space=vmem, size = 0x20000, scoped, tag = 'input window, operand 3, single buffered']
    #allocation8 [shape = 's32[1]{0}', space=sflag, size = 0x4, scoped, tag = 'scoped memory for tpu_custom_call.1']
    #allocation9 [shape = 'u8[155648]{0}', space=vmem, size = 0x26000, scoped, tag = 'input window, operand 4, single buffered']
    #allocation10 [shape = 'u8[32768]{0}', space=vmem, size = 0x8000, scoped, tag = 'input window, operand 5, single buffered']
    #allocation11 [shape = 's32[1]{0}', space=sflag, size = 0x4, scoped, tag = 'scoped memory for tpu_custom_call.1']
    %11 = vsyncpa [#allocation3], 0
    %12 = vsyncpa [#allocation5], 0
    %13 = vsyncpa [#allocation8], 0
    %14 = vsyncpa [#allocation11], 0
    // Predicated region
    $region2: #{tpu_custom_call.1} parent=1 // pred_check
      _
    $region3: #{tpu_custom_call.1} parent=1 // pred_check_branch
      %16 = sbr.rel (0) target = $region5
    $region4: #{tpu_custom_call.1} parent=1 // pred_region
      %s18 = ssub.s32 1024, 1024
      %19 = vsyncadd [#allocation3], %s18
      %s21 = sshll.u32 [#allocation2], 4
      %s22 = int_to_ptr.vmem [resolvable:$true] %s21
      %24 = dma.hbm_to_vmem [thread:$0]  %s0, 1024, %s22, [#allocation3]
    $region5: #{tpu_custom_call.1} parent=1 // pred_fallthru
      _
    // Predicated region
    $region6: #{tpu_custom_call.1} parent=1 // pred_check
      _
    $region7: #{tpu_custom_call.1} parent=1 // pred_check_branch
      %26 = sbr.rel (0) target = $region9
    $region8: #{tpu_custom_call.1} parent=1 // pred_region
      %s28 = ssub.s32 64, 64
      %29 = vsyncadd [#allocation5], %s28
      %s31 = sshll.u32 [#allocation4], 4
      %s32 = int_to_ptr.vmem [resolvable:$true] %s31
      %34 = dma.hbm_to_vmem [thread:$0]  %s1, 64, %s32, [#allocation5]
    $region9: #{tpu_custom_call.1} parent=1 // pred_fallthru
      _
    // Predicated region
    $region10: #{tpu_custom_call.1} parent=1 // pred_check
      _
    $region11: #{tpu_custom_call.1} parent=1 // pred_check_branch
      %36 = sbr.rel (0) target = $region13
    $region12: #{tpu_custom_call.1} parent=1 // pred_region
      %s38 = ssub.s32 65536, 65536
      %39 = vsyncadd [#allocation5], %s38
      %s40 = sshll.u32 [#allocation6], 4
      %s41 = int_to_ptr.vmem [resolvable:$true] %s40
      %46 = dma.hbm_to_vmem [thread:$0]  %s2, 65536, %s41, [#allocation5], 256, 256, 16
    $region13: #{tpu_custom_call.1} parent=1 // pred_fallthru
      _
    // Predicated region
    $region14: #{tpu_custom_call.1} parent=1 // pred_check
      _
    $region15: #{tpu_custom_call.1} parent=1 // pred_check_branch
      %48 = sbr.rel (0) target = $region17
    $region16: #{tpu_custom_call.1} parent=1 // pred_region
      %s50 = ssub.s32 4096, 4096
      %51 = vsyncadd [#allocation8], %s50
      %s52 = sshll.u32 [#allocation7], 4
      %s53 = int_to_ptr.vmem [resolvable:$true] %s52
      %58 = dma.hbm_to_vmem [thread:$0]  %s3, 4096, %s53, [#allocation8], 64, 64, 4
    $region17: #{tpu_custom_call.1} parent=1 // pred_fallthru
      _
    // Predicated region
    $region18: #{tpu_custom_call.1} parent=1 // pred_check
      _
    $region19: #{tpu_custom_call.1} parent=1 // pred_check_branch
      %60 = sbr.rel (0) target = $region21
    $region20: #{tpu_custom_call.1} parent=1 // pred_region
      %s62 = ssub.s32 4864, 4864
      %63 = vsyncadd [#allocation8], %s62
      %s64 = sshll.u32 [#allocation9], 4
      %s65 = int_to_ptr.vmem [resolvable:$true] %s64
      %70 = dma.hbm_to_vmem [thread:$0]  %s4, 4864, %s65, [#allocation8], 128, 128, 8
    $region21: #{tpu_custom_call.1} parent=1 // pred_fallthru
      _
    // Predicated region
    $region22: #{tpu_custom_call.1} parent=1 // pred_check
      _
    $region23: #{tpu_custom_call.1} parent=1 // pred_check_branch
      %72 = sbr.rel (0) target = $region25
    $region24: #{tpu_custom_call.1} parent=1 // pred_region
      %s74 = ssub.s32 1024, 1024
      %75 = vsyncadd [#allocation11], %s74
      %s76 = sshll.u32 [#allocation10], 4
      %s77 = int_to_ptr.vmem [resolvable:$true] %s76
      %82 = dma.hbm_to_vmem [thread:$0]  %s5, 1024, %s77, [#allocation11], 512, 512, 32
    $region25: #{tpu_custom_call.1} parent=1 // pred_fallthru
      _
    // Predicated region
    $region26: #{tpu_custom_call.1} parent=1 // pred_check
      _
    $region27: #{tpu_custom_call.1} parent=1 // pred_check_branch
      %84 = sbr.rel (0) target = $region29
    $region28: #{tpu_custom_call.1} parent=1 // pred_region
      %85 = dma.done [#allocation3], 1024
    $region29: #{tpu_custom_call.1} parent=1 // pred_fallthru
      _
    // Predicated region
    $region30: #{tpu_custom_call.1} parent=1 // pred_check
      _
    $region31: #{tpu_custom_call.1} parent=1 // pred_check_branch
      %87 = sbr.rel (0) target = $region33
    $region32: #{tpu_custom_call.1} parent=1 // pred_region
      %88 = dma.done [#allocation5], 64
    $region33: #{tpu_custom_call.1} parent=1 // pred_fallthru
      _
    // Predicated region
    $region34: #{tpu_custom_call.1} parent=1 // pred_check
      _
    $region35: #{tpu_custom_call.1} parent=1 // pred_check_branch
      %90 = sbr.rel (0) target = $region37
    $region36: #{tpu_custom_call.1} parent=1 // pred_region
      %91 = dma.done [#allocation5], 65536
    $region37: #{tpu_custom_call.1} parent=1 // pred_fallthru
      _
    // Predicated region
    $region38: #{tpu_custom_call.1} parent=1 // pred_check
      _
    $region39: #{tpu_custom_call.1} parent=1 // pred_check_branch
      %93 = sbr.rel (0) target = $region41
    $region40: #{tpu_custom_call.1} parent=1 // pred_region
      %94 = dma.done [#allocation8], 4096
    $region41: #{tpu_custom_call.1} parent=1 // pred_fallthru
      _
    // Predicated region
    $region42: #{tpu_custom_call.1} parent=1 // pred_check
      _
    $region43: #{tpu_custom_call.1} parent=1 // pred_check_branch
      %96 = sbr.rel (0) target = $region45
    $region44: #{tpu_custom_call.1} parent=1 // pred_region
      %97 = dma.done [#allocation8], 4864
    $region45: #{tpu_custom_call.1} parent=1 // pred_fallthru
      _
    // Predicated region
    $region46: #{tpu_custom_call.1} parent=1 // pred_check
      _
    $region47: #{tpu_custom_call.1} parent=1 // pred_check_branch
      %99 = sbr.rel (0) target = $region49
    $region48: #{tpu_custom_call.1} parent=1 // pred_region
      %100 = dma.done [#allocation11], 1024
    $region49: #{tpu_custom_call.1} parent=1 // pred_fallthru
      _
    %v102 = vld [vmem:[#allocation9] sm:$0xff]
    %v103 = vld [vmem:[#allocation9 + $0x8] sm:$0xff]
    %v104 = vld [vmem:[#allocation9 + $0x10] sm:$0xff]
    %v105 = vld [vmem:[#allocation9 + $0x18] sm:$0xff]
    %v106 = vld [vmem:[#allocation9 + $0x20] sm:$0xff]
    %v107 = vld [vmem:[#allocation9 + $0x28] sm:$0xff]
    %v108 = vld [vmem:[#allocation9 + $0x30] sm:$0xff]
    %v109 = vld [vmem:[#allocation9 + $0x38] sm:$0xff]
    %v110 = vld [vmem:[#allocation9 + $0x40] sm:$0xff]
    %v111 = vld [vmem:[#allocation9 + $0x48] sm:$0xff]
    %v112 = vld [vmem:[#allocation9 + $0x50] sm:$0xff]
    %v113 = vld [vmem:[#allocation9 + $0x58] sm:$0xff]
    %v114 = vld [vmem:[#allocation9 + $0x60] sm:$0xff]
    %v115 = vld [vmem:[#allocation9 + $0x68] sm:$0xff]
    %v116 = vld [vmem:[#allocation9 + $0x70] sm:$0xff]
    %v117 = vld [vmem:[#allocation9 + $0x78] sm:$0xff]
    %v118 = vld [vmem:[#allocation9 + $0x80] sm:$0xff]
    %v119 = vld [vmem:[#allocation9 + $0x88] sm:$0xff]
    %v120 = vld [vmem:[#allocation9 + $0x90] sm:$0xff]
    %v121 = vld [vmem:[#allocation9 + $0x98] sm:$0xff]
    %v122 = vld [vmem:[#allocation9 + $0xa0] sm:$0xff]
    %v123 = vld [vmem:[#allocation9 + $0xa8] sm:$0xff]
    %v124 = vld [vmem:[#allocation9 + $0xb0] sm:$0xff]
    %v125 = vld [vmem:[#allocation9 + $0xb8] sm:$0xff]
    %v126 = vld [vmem:[#allocation9 + $0xc0] sm:$0xff]
    %v127 = vld [vmem:[#allocation9 + $0xc8] sm:$0xff]
    %v128 = vld [vmem:[#allocation9 + $0xd0] sm:$0xff]
    %v129 = vld [vmem:[#allocation9 + $0xd8] sm:$0xff]
    %v130 = vld [vmem:[#allocation9 + $0xe0] sm:$0xff]
    %v131 = vld [vmem:[#allocation9 + $0xe8] sm:$0xff]
    %v132 = vld [vmem:[#allocation9 + $0xf0] sm:$0xff]
    %v133 = vld [vmem:[#allocation9 + $0xf8] sm:$0xff]
    %v134 = vld [vmem:[#allocation9 + $0x100] sm:$0xff]
    %v135 = vld [vmem:[#allocation9 + $0x108] sm:$0xff]
    %v136 = vld [vmem:[#allocation9 + $0x110] sm:$0xff]
    %v137 = vld [vmem:[#allocation9 + $0x118] sm:$0xff]
    %v138 = vld [vmem:[#allocation9 + $0x120] sm:$0xff]
    %v139 = vld [vmem:[#allocation9 + $0x128] sm:$0xff]
    %v140 = vld [vmem:[#allocation10] sm:$0xff]
    %v141 = vld [vmem:[#allocation10 + $0x8] sm:$0xff]
    %v142 = vld [vmem:[#allocation10 + $0x10] sm:$0xff]
    %v143 = vld [vmem:[#allocation10 + $0x18] sm:$0xff]
    %v144 = vld [vmem:[#allocation10 + $0x20] sm:$0xff]
    %v145 = vld [vmem:[#allocation2] sm:$0xff]
    %v146 = vld [vmem:[#allocation2 + $0x8] sm:$0xff]
    %v147 = vld [vmem:[#allocation2 + $0x10] sm:$0xff]
    %v148 = vld [vmem:[#allocation2 + $0x18] sm:$0xff]
    %v149 = vld [vmem:[#allocation2 + $0x20] sm:$0xff]
    %v150 = vld [vmem:[#allocation2 + $0x28] sm:$0xff]
    %v151 = vld [vmem:[#allocation2 + $0x30] sm:$0xff]
    %v152 = vld [vmem:[#allocation2 + $0x38] sm:$0xff]
    %v153 = vld [vmem:[#allocation6] sm:$0xff]
    %v154 = vld [vmem:[#allocation6 + $0x8] sm:$0xff]
    %v155 = vld [vmem:[#allocation6 + $0x10] sm:$0xff]
    %v156 = vld [vmem:[#allocation6 + $0x18] sm:$0xff]
    %v157 = vld [vmem:[#allocation6 + $0x20] sm:$0xff]
    %v158 = vld [vmem:[#allocation6 + $0x28] sm:$0xff]
    %v159 = vld [vmem:[#allocation6 + $0x30] sm:$0xff]
    %v160 = vld [vmem:[#allocation6 + $0x38] sm:$0xff]
    %v161 = vld [vmem:[#allocation6 + $0x40] sm:$0xff]
    %v162 = vld [vmem:[#allocation6 + $0x48] sm:$0xff]
    %v163 = vld [vmem:[#allocation6 + $0x50] sm:$0xff]
    %v164 = vld [vmem:[#allocation6 + $0x58] sm:$0xff]
    %v165 = vld [vmem:[#allocation6 + $0x60] sm:$0xff]
    %v166 = vld [vmem:[#allocation6 + $0x68] sm:$0xff]
    %v167 = vld [vmem:[#allocation6 + $0x70] sm:$0xff]
    %v168 = vld [vmem:[#allocation6 + $0x78] sm:$0xff]
    %v169 = vld [vmem:[#allocation6 + $0x80] sm:$0xff]
    %v170 = vld [vmem:[#allocation6 + $0x88] sm:$0xff]
    %v171 = vld [vmem:[#allocation6 + $0x90] sm:$0xff]
    %v172 = vld [vmem:[#allocation6 + $0x98] sm:$0xff]
    %v173 = vld [vmem:[#allocation6 + $0xa0] sm:$0xff]
    %v174 = vld [vmem:[#allocation6 + $0xa8] sm:$0xff]
    %v175 = vld [vmem:[#allocation6 + $0xb0] sm:$0xff]
    %v176 = vld [vmem:[#allocation6 + $0xb8] sm:$0xff]
    %v177 = vld [vmem:[#allocation6 + $0xc0] sm:$0xff]
    %v178 = vld [vmem:[#allocation6 + $0xc8] sm:$0xff]
    %v179 = vld [vmem:[#allocation6 + $0xd0] sm:$0xff]
    %v180 = vld [vmem:[#allocation6 + $0xd8] sm:$0xff]
    %v181 = vld [vmem:[#allocation6 + $0xe0] sm:$0xff]
    %v182 = vld [vmem:[#allocation6 + $0xe8] sm:$0xff]
    %v183 = vld [vmem:[#allocation6 + $0xf0] sm:$0xff]
    %v184 = vld [vmem:[#allocation6 + $0xf8] sm:$0xff]
    %v185 = vld [vmem:[#allocation6 + $0x100] sm:$0xff]
    %v186 = vld [vmem:[#allocation6 + $0x108] sm:$0xff]
    %v187 = vld [vmem:[#allocation6 + $0x110] sm:$0xff]
    %v188 = vld [vmem:[#allocation6 + $0x118] sm:$0xff]
    %v189 = vld [vmem:[#allocation6 + $0x120] sm:$0xff]
    %v190 = vld [vmem:[#allocation6 + $0x128] sm:$0xff]
    %v191 = vld [vmem:[#allocation6 + $0x130] sm:$0xff]
    %v192 = vld [vmem:[#allocation6 + $0x138] sm:$0xff]
    %v193 = vld [vmem:[#allocation6 + $0x140] sm:$0xff]
    %v194 = vld [vmem:[#allocation6 + $0x148] sm:$0xff]
    %v195 = vld [vmem:[#allocation6 + $0x150] sm:$0xff]
    %v196 = vld [vmem:[#allocation6 + $0x158] sm:$0xff]
    %v197 = vld [vmem:[#allocation6 + $0x160] sm:$0xff]
    %v198 = vld [vmem:[#allocation6 + $0x168] sm:$0xff]
    %v199 = vld [vmem:[#allocation6 + $0x170] sm:$0xff]
    %v200 = vld [vmem:[#allocation6 + $0x178] sm:$0xff]
    %v201 = vld [vmem:[#allocation6 + $0x180] sm:$0xff]
    %v202 = vld [vmem:[#allocation6 + $0x188] sm:$0xff]
    %v203 = vld [vmem:[#allocation6 + $0x190] sm:$0xff]
    %v204 = vld [vmem:[#allocation6 + $0x198] sm:$0xff]
    %v205 = vld [vmem:[#allocation6 + $0x1a0] sm:$0xff]
    %v206 = vld [vmem:[#allocation6 + $0x1a8] sm:$0xff]
    %v207 = vld [vmem:[#allocation6 + $0x1b0] sm:$0xff]
    %v208 = vld [vmem:[#allocation6 + $0x1b8] sm:$0xff]
    %v209 = vld [vmem:[#allocation6 + $0x1c0] sm:$0xff]
    %v210 = vld [vmem:[#allocation6 + $0x1c8] sm:$0xff]
    %v211 = vld [vmem:[#allocation6 + $0x1d0] sm:$0xff]
    %v212 = vld [vmem:[#allocation6 + $0x1d8] sm:$0xff]
    %v213 = vld [vmem:[#allocation6 + $0x1e0] sm:$0xff]
    %v214 = vld [vmem:[#allocation6 + $0x1e8] sm:$0xff]
    %v215 = vld [vmem:[#allocation6 + $0x1f0] sm:$0xff]
    %v216 = vld [vmem:[#allocation6 + $0x1f8] sm:$0xff]
    %v217 = vld [vmem:[#allocation6 + $0x200] sm:$0xff]
    %v218 = vld [vmem:[#allocation6 + $0x208] sm:$0xff]
    %v219 = vld [vmem:[#allocation6 + $0x210] sm:$0xff]
    %v220 = vld [vmem:[#allocation6 + $0x218] sm:$0xff]
    %v221 = vld [vmem:[#allocation6 + $0x220] sm:$0xff]
    %v222 = vld [vmem:[#allocation6 + $0x228] sm:$0xff]
    %v223 = vld [vmem:[#allocation6 + $0x230] sm:$0xff]
    %v224 = vld [vmem:[#allocation6 + $0x238] sm:$0xff]
    %v225 = vld [vmem:[#allocation6 + $0x240] sm:$0xff]
    %v226 = vld [vmem:[#allocation6 + $0x248] sm:$0xff]
    %v227 = vld [vmem:[#allocation6 + $0x250] sm:$0xff]
    %v228 = vld [vmem:[#allocation6 + $0x258] sm:$0xff]
    %v229 = vld [vmem:[#allocation6 + $0x260] sm:$0xff]
    %v230 = vld [vmem:[#allocation6 + $0x268] sm:$0xff]
    %v231 = vld [vmem:[#allocation6 + $0x270] sm:$0xff]
    %v232 = vld [vmem:[#allocation6 + $0x278] sm:$0xff]
    %v233 = vld [vmem:[#allocation6 + $0x280] sm:$0xff]
    %v234 = vld [vmem:[#allocation6 + $0x288] sm:$0xff]
    %v235 = vld [vmem:[#allocation6 + $0x290] sm:$0xff]
    %v236 = vld [vmem:[#allocation6 + $0x298] sm:$0xff]
    %v237 = vld [vmem:[#allocation6 + $0x2a0] sm:$0xff]
    %v238 = vld [vmem:[#allocation6 + $0x2a8] sm:$0xff]
    %v239 = vld [vmem:[#allocation6 + $0x2b0] sm:$0xff]
    %v240 = vld [vmem:[#allocation6 + $0x2b8] sm:$0xff]
    %v241 = vld [vmem:[#allocation6 + $0x2c0] sm:$0xff]
    %v242 = vld [vmem:[#allocation6 + $0x2c8] sm:$0xff]
    %v243 = vld [vmem:[#allocation6 + $0x2d0] sm:$0xff]
    %v244 = vld [vmem:[#allocation6 + $0x2d8] sm:$0xff]
    %v245 = vld [vmem:[#allocation6 + $0x2e0] sm:$0xff]
    %v246 = vld [vmem:[#allocation6 + $0x2e8] sm:$0xff]
    %v247 = vld [vmem:[#allocation6 + $0x2f0] sm:$0xff]
    %v248 = vld [vmem:[#allocation6 + $0x2f8] sm:$0xff]
    %v249 = vld [vmem:[#allocation6 + $0x300] sm:$0xff]
    %v250 = vld [vmem:[#allocation6 + $0x308] sm:$0xff]
    %v251 = vld [vmem:[#allocation6 + $0x310] sm:$0xff]
    %v252 = vld [vmem:[#allocation6 + $0x318] sm:$0xff]
    %v253 = vld [vmem:[#allocation6 + $0x320] sm:$0xff]
    %v254 = vld [vmem:[#allocation6 + $0x328] sm:$0xff]
    %v255 = vld [vmem:[#allocation6 + $0x330] sm:$0xff]
    %v256 = vld [vmem:[#allocation6 + $0x338] sm:$0xff]
    %v257 = vld [vmem:[#allocation6 + $0x340] sm:$0xff]
    %v258 = vld [vmem:[#allocation6 + $0x348] sm:$0xff]
    %v259 = vld [vmem:[#allocation6 + $0x350] sm:$0xff]
    %v260 = vld [vmem:[#allocation6 + $0x358] sm:$0xff]
    %v261 = vld [vmem:[#allocation6 + $0x360] sm:$0xff]
    %v262 = vld [vmem:[#allocation6 + $0x368] sm:$0xff]
    %v263 = vld [vmem:[#allocation6 + $0x370] sm:$0xff]
    %v264 = vld [vmem:[#allocation6 + $0x378] sm:$0xff]
    %v265 = vld [vmem:[#allocation6 + $0x380] sm:$0xff]
    %v266 = vld [vmem:[#allocation6 + $0x388] sm:$0xff]
    %v267 = vld [vmem:[#allocation6 + $0x390] sm:$0xff]
    %v268 = vld [vmem:[#allocation6 + $0x398] sm:$0xff]
    %v269 = vld [vmem:[#allocation6 + $0x3a0] sm:$0xff]
    %v270 = vld [vmem:[#allocation6 + $0x3a8] sm:$0xff]
    %v271 = vld [vmem:[#allocation6 + $0x3b0] sm:$0xff]
    %v272 = vld [vmem:[#allocation6 + $0x3b8] sm:$0xff]
    %v273 = vld [vmem:[#allocation6 + $0x3c0] sm:$0xff]
    %v274 = vld [vmem:[#allocation6 + $0x3c8] sm:$0xff]
    %v275 = vld [vmem:[#allocation6 + $0x3d0] sm:$0xff]
    %v276 = vld [vmem:[#allocation6 + $0x3d8] sm:$0xff]
    %v277 = vld [vmem:[#allocation6 + $0x3e0] sm:$0xff]
    %v278 = vld [vmem:[#allocation6 + $0x3e8] sm:$0xff]
    %v279 = vld [vmem:[#allocation6 + $0x3f0] sm:$0xff]
    %v280 = vld [vmem:[#allocation6 + $0x3f8] sm:$0xff]
    %v281 = vld [vmem:[#allocation6 + $0x400] sm:$0xff]
    %v282 = vld [vmem:[#allocation6 + $0x408] sm:$0xff]
    %v283 = vld [vmem:[#allocation6 + $0x410] sm:$0xff]
    %v284 = vld [vmem:[#allocation6 + $0x418] sm:$0xff]
    %v285 = vld [vmem:[#allocation6 + $0x420] sm:$0xff]
    %v286 = vld [vmem:[#allocation6 + $0x428] sm:$0xff]
    %v287 = vld [vmem:[#allocation6 + $0x430] sm:$0xff]
    %v288 = vld [vmem:[#allocation6 + $0x438] sm:$0xff]
    %v289 = vld [vmem:[#allocation6 + $0x440] sm:$0xff]
    %v290 = vld [vmem:[#allocation6 + $0x448] sm:$0xff]
    %v291 = vld [vmem:[#allocation6 + $0x450] sm:$0xff]
    %v292 = vld [vmem:[#allocation6 + $0x458] sm:$0xff]
    %v293 = vld [vmem:[#allocation6 + $0x460] sm:$0xff]
    %v294 = vld [vmem:[#allocation6 + $0x468] sm:$0xff]
    %v295 = vld [vmem:[#allocation6 + $0x470] sm:$0xff]
    %v296 = vld [vmem:[#allocation6 + $0x478] sm:$0xff]
    %v297 = vld [vmem:[#allocation6 + $0x480] sm:$0xff]
    %v298 = vld [vmem:[#allocation6 + $0x488] sm:$0xff]
    %v299 = vld [vmem:[#allocation6 + $0x490] sm:$0xff]
    %v300 = vld [vmem:[#allocation6 + $0x498] sm:$0xff]
    %v301 = vld [vmem:[#allocation6 + $0x4a0] sm:$0xff]
    %v302 = vld [vmem:[#allocation6 + $0x4a8] sm:$0xff]
    %v303 = vld [vmem:[#allocation6 + $0x4b0] sm:$0xff]
    %v304 = vld [vmem:[#allocation6 + $0x4b8] sm:$0xff]
    %v305 = vld [vmem:[#allocation6 + $0x4c0] sm:$0xff]
    %v306 = vld [vmem:[#allocation6 + $0x4c8] sm:$0xff]
    %v307 = vld [vmem:[#allocation6 + $0x4d0] sm:$0xff]
    %v308 = vld [vmem:[#allocation6 + $0x4d8] sm:$0xff]
    %v309 = vld [vmem:[#allocation6 + $0x4e0] sm:$0xff]
    %v310 = vld [vmem:[#allocation6 + $0x4e8] sm:$0xff]
    %v311 = vld [vmem:[#allocation6 + $0x4f0] sm:$0xff]
    %v312 = vld [vmem:[#allocation6 + $0x4f8] sm:$0xff]
    %v313 = vld [vmem:[#allocation6 + $0x500] sm:$0xff]
    %v314 = vld [vmem:[#allocation6 + $0x508] sm:$0xff]
    %v315 = vld [vmem:[#allocation6 + $0x510] sm:$0xff]
    %v316 = vld [vmem:[#allocation6 + $0x518] sm:$0xff]
    %v317 = vld [vmem:[#allocation6 + $0x520] sm:$0xff]
    %v318 = vld [vmem:[#allocation6 + $0x528] sm:$0xff]
    %v319 = vld [vmem:[#allocation6 + $0x530] sm:$0xff]
    %v320 = vld [vmem:[#allocation6 + $0x538] sm:$0xff]
    %v321 = vld [vmem:[#allocation6 + $0x540] sm:$0xff]
    %v322 = vld [vmem:[#allocation6 + $0x548] sm:$0xff]
    %v323 = vld [vmem:[#allocation6 + $0x550] sm:$0xff]
    %v324 = vld [vmem:[#allocation6 + $0x558] sm:$0xff]
    %v325 = vld [vmem:[#allocation6 + $0x560] sm:$0xff]
    %v326 = vld [vmem:[#allocation6 + $0x568] sm:$0xff]
    %v327 = vld [vmem:[#allocation6 + $0x570] sm:$0xff]
    %v328 = vld [vmem:[#allocation6 + $0x578] sm:$0xff]
    %v329 = vld [vmem:[#allocation6 + $0x580] sm:$0xff]
    %v330 = vld [vmem:[#allocation6 + $0x588] sm:$0xff]
    %v331 = vld [vmem:[#allocation6 + $0x590] sm:$0xff]
    %v332 = vld [vmem:[#allocation6 + $0x598] sm:$0xff]
    %v333 = vld [vmem:[#allocation6 + $0x5a0] sm:$0xff]
    %v334 = vld [vmem:[#allocation6 + $0x5a8] sm:$0xff]
    %v335 = vld [vmem:[#allocation6 + $0x5b0] sm:$0xff]
    %v336 = vld [vmem:[#allocation6 + $0x5b8] sm:$0xff]
    %v337 = vld [vmem:[#allocation6 + $0x5c0] sm:$0xff]
    %v338 = vld [vmem:[#allocation6 + $0x5c8] sm:$0xff]
    %v339 = vld [vmem:[#allocation6 + $0x5d0] sm:$0xff]
    %v340 = vld [vmem:[#allocation6 + $0x5d8] sm:$0xff]
    %v341 = vld [vmem:[#allocation6 + $0x5e0] sm:$0xff]
    %v342 = vld [vmem:[#allocation6 + $0x5e8] sm:$0xff]
    %v343 = vld [vmem:[#allocation6 + $0x5f0] sm:$0xff]
    %v344 = vld [vmem:[#allocation6 + $0x5f8] sm:$0xff]
    %v345 = vld [vmem:[#allocation6 + $0x600] sm:$0xff]
    %v346 = vld [vmem:[#allocation6 + $0x608] sm:$0xff]
    %v347 = vld [vmem:[#allocation6 + $0x610] sm:$0xff]
    %v348 = vld [vmem:[#allocation6 + $0x618] sm:$0xff]
    %v349 = vld [vmem:[#allocation6 + $0x620] sm:$0xff]
    %v350 = vld [vmem:[#allocation6 + $0x628] sm:$0xff]
    %v351 = vld [vmem:[#allocation6 + $0x630] sm:$0xff]
    %v352 = vld [vmem:[#allocation6 + $0x638] sm:$0xff]
    %v353 = vld [vmem:[#allocation6 + $0x640] sm:$0xff]
    %v354 = vld [vmem:[#allocation6 + $0x648] sm:$0xff]
    %v355 = vld [vmem:[#allocation6 + $0x650] sm:$0xff]
    %v356 = vld [vmem:[#allocation6 + $0x658] sm:$0xff]
    %v357 = vld [vmem:[#allocation6 + $0x660] sm:$0xff]
    %v358 = vld [vmem:[#allocation6 + $0x668] sm:$0xff]
    %v359 = vld [vmem:[#allocation6 + $0x670] sm:$0xff]
    %v360 = vld [vmem:[#allocation6 + $0x678] sm:$0xff]
    %v361 = vld [vmem:[#allocation6 + $0x680] sm:$0xff]
    %v362 = vld [vmem:[#allocation6 + $0x688] sm:$0xff]
    %v363 = vld [vmem:[#allocation6 + $0x690] sm:$0xff]
    %v364 = vld [vmem:[#allocation6 + $0x698] sm:$0xff]
    %v365 = vld [vmem:[#allocation6 + $0x6a0] sm:$0xff]
    %v366 = vld [vmem:[#allocation6 + $0x6a8] sm:$0xff]
    %v367 = vld [vmem:[#allocation6 + $0x6b0] sm:$0xff]
    %v368 = vld [vmem:[#allocation6 + $0x6b8] sm:$0xff]
    %v369 = vld [vmem:[#allocation6 + $0x6c0] sm:$0xff]
    %v370 = vld [vmem:[#allocation6 + $0x6c8] sm:$0xff]
    %v371 = vld [vmem:[#allocation6 + $0x6d0] sm:$0xff]
    %v372 = vld [vmem:[#allocation6 + $0x6d8] sm:$0xff]
    %v373 = vld [vmem:[#allocation6 + $0x6e0] sm:$0xff]
    %v374 = vld [vmem:[#allocation6 + $0x6e8] sm:$0xff]
    %v375 = vld [vmem:[#allocation6 + $0x6f0] sm:$0xff]
    %v376 = vld [vmem:[#allocation6 + $0x6f8] sm:$0xff]
    %v377 = vld [vmem:[#allocation6 + $0x700] sm:$0xff]
    %v378 = vld [vmem:[#allocation6 + $0x708] sm:$0xff]
    %v379 = vld [vmem:[#allocation6 + $0x710] sm:$0xff]
    %v380 = vld [vmem:[#allocation6 + $0x718] sm:$0xff]
    %v381 = vld [vmem:[#allocation6 + $0x720] sm:$0xff]
    %v382 = vld [vmem:[#allocation6 + $0x728] sm:$0xff]
    %v383 = vld [vmem:[#allocation6 + $0x730] sm:$0xff]
    %v384 = vld [vmem:[#allocation6 + $0x738] sm:$0xff]
    %v385 = vld [vmem:[#allocation6 + $0x740] sm:$0xff]
    %v386 = vld [vmem:[#allocation6 + $0x748] sm:$0xff]
    %v387 = vld [vmem:[#allocation6 + $0x750] sm:$0xff]
    %v388 = vld [vmem:[#allocation6 + $0x758] sm:$0xff]
    %v389 = vld [vmem:[#allocation6 + $0x760] sm:$0xff]
    %v390 = vld [vmem:[#allocation6 + $0x768] sm:$0xff]
    %v391 = vld [vmem:[#allocation6 + $0x770] sm:$0xff]
    %v392 = vld [vmem:[#allocation6 + $0x778] sm:$0xff]
    %v393 = vld [vmem:[#allocation6 + $0x780] sm:$0xff]
    %v394 = vld [vmem:[#allocation6 + $0x788] sm:$0xff]
    %v395 = vld [vmem:[#allocation6 + $0x790] sm:$0xff]
    %v396 = vld [vmem:[#allocation6 + $0x798] sm:$0xff]
    %v397 = vld [vmem:[#allocation6 + $0x7a0] sm:$0xff]
    %v398 = vld [vmem:[#allocation6 + $0x7a8] sm:$0xff]
    %v399 = vld [vmem:[#allocation6 + $0x7b0] sm:$0xff]
    %v400 = vld [vmem:[#allocation6 + $0x7b8] sm:$0xff]
    %v401 = vld [vmem:[#allocation6 + $0x7c0] sm:$0xff]
    %v402 = vld [vmem:[#allocation6 + $0x7c8] sm:$0xff]
    %v403 = vld [vmem:[#allocation6 + $0x7d0] sm:$0xff]
    %v404 = vld [vmem:[#allocation6 + $0x7d8] sm:$0xff]
    %v405 = vld [vmem:[#allocation6 + $0x7e0] sm:$0xff]
    %v406 = vld [vmem:[#allocation6 + $0x7e8] sm:$0xff]
    %v407 = vld [vmem:[#allocation6 + $0x7f0] sm:$0xff]
    %v408 = vld [vmem:[#allocation6 + $0x7f8] sm:$0xff]
    %v409 = vld [vmem:[#allocation6 + $0x800] sm:$0xff]
    %v410 = vld [vmem:[#allocation6 + $0x808] sm:$0xff]
    %v411 = vld [vmem:[#allocation6 + $0x810] sm:$0xff]
    %v412 = vld [vmem:[#allocation6 + $0x818] sm:$0xff]
    %v413 = vld [vmem:[#allocation6 + $0x820] sm:$0xff]
    %v414 = vld [vmem:[#allocation6 + $0x828] sm:$0xff]
    %v415 = vld [vmem:[#allocation6 + $0x830] sm:$0xff]
    %v416 = vld [vmem:[#allocation6 + $0x838] sm:$0xff]
    %v417 = vld [vmem:[#allocation6 + $0x840] sm:$0xff]
    %v418 = vld [vmem:[#allocation6 + $0x848] sm:$0xff]
    %v419 = vld [vmem:[#allocation6 + $0x850] sm:$0xff]
    %v420 = vld [vmem:[#allocation6 + $0x858] sm:$0xff]
    %v421 = vld [vmem:[#allocation6 + $0x860] sm:$0xff]
    %v422 = vld [vmem:[#allocation6 + $0x868] sm:$0xff]
    %v423 = vld [vmem:[#allocation6 + $0x870] sm:$0xff]
    %v424 = vld [vmem:[#allocation6 + $0x878] sm:$0xff]
    %v425 = vld [vmem:[#allocation6 + $0x880] sm:$0xff]
    %v426 = vld [vmem:[#allocation6 + $0x888] sm:$0xff]
    %v427 = vld [vmem:[#allocation6 + $0x890] sm:$0xff]
    %v428 = vld [vmem:[#allocation6 + $0x898] sm:$0xff]
    %v429 = vld [vmem:[#allocation6 + $0x8a0] sm:$0xff]
    %v430 = vld [vmem:[#allocation6 + $0x8a8] sm:$0xff]
    %v431 = vld [vmem:[#allocation6 + $0x8b0] sm:$0xff]
    %v432 = vld [vmem:[#allocation6 + $0x8b8] sm:$0xff]
    %v433 = vld [vmem:[#allocation6 + $0x8c0] sm:$0xff]
    %v434 = vld [vmem:[#allocation6 + $0x8c8] sm:$0xff]
    %v435 = vld [vmem:[#allocation6 + $0x8d0] sm:$0xff]
    %v436 = vld [vmem:[#allocation6 + $0x8d8] sm:$0xff]
    %v437 = vld [vmem:[#allocation6 + $0x8e0] sm:$0xff]
    %v438 = vld [vmem:[#allocation6 + $0x8e8] sm:$0xff]
    %v439 = vld [vmem:[#allocation6 + $0x8f0] sm:$0xff]
    %v440 = vld [vmem:[#allocation6 + $0x8f8] sm:$0xff]
    %v441 = vld [vmem:[#allocation6 + $0x900] sm:$0xff]
    %v442 = vld [vmem:[#allocation6 + $0x908] sm:$0xff]
    %v443 = vld [vmem:[#allocation6 + $0x910] sm:$0xff]
    %v444 = vld [vmem:[#allocation6 + $0x918] sm:$0xff]
    %v445 = vld [vmem:[#allocation6 + $0x920] sm:$0xff]
    %v446 = vld [vmem:[#allocation6 + $0x928] sm:$0xff]
    %v447 = vld [vmem:[#allocation6 + $0x930] sm:$0xff]
    %v448 = vld [vmem:[#allocation6 + $0x938] sm:$0xff]
    %v449 = vld [vmem:[#allocation6 + $0x940] sm:$0xff]
    %v450 = vld [vmem:[#allocation6 + $0x948] sm:$0xff]
    %v451 = vld [vmem:[#allocation6 + $0x950] sm:$0xff]
    %v452 = vld [vmem:[#allocation6 + $0x958] sm:$0xff]
    %v453 = vld [vmem:[#allocation6 + $0x960] sm:$0xff]
    %v454 = vld [vmem:[#allocation6 + $0x968] sm:$0xff]
    %v455 = vld [vmem:[#allocation6 + $0x970] sm:$0xff]
    %v456 = vld [vmem:[#allocation6 + $0x978] sm:$0xff]
    %v457 = vld [vmem:[#allocation6 + $0x980] sm:$0xff]
    %v458 = vld [vmem:[#allocation6 + $0x988] sm:$0xff]
    %v459 = vld [vmem:[#allocation6 + $0x990] sm:$0xff]
    %v460 = vld [vmem:[#allocation6 + $0x998] sm:$0xff]
    %v461 = vld [vmem:[#allocation6 + $0x9a0] sm:$0xff]
    %v462 = vld [vmem:[#allocation6 + $0x9a8] sm:$0xff]
    %v463 = vld [vmem:[#allocation6 + $0x9b0] sm:$0xff]
    %v464 = vld [vmem:[#allocation6 + $0x9b8] sm:$0xff]
    %v465 = vld [vmem:[#allocation6 + $0x9c0] sm:$0xff]
    %v466 = vld [vmem:[#allocation6 + $0x9c8] sm:$0xff]
    %v467 = vld [vmem:[#allocation6 + $0x9d0] sm:$0xff]
    %v468 = vld [vmem:[#allocation6 + $0x9d8] sm:$0xff]
    %v469 = vld [vmem:[#allocation6 + $0x9e0] sm:$0xff]
    %v470 = vld [vmem:[#allocation6 + $0x9e8] sm:$0xff]
    %v471 = vld [vmem:[#allocation6 + $0x9f0] sm:$0xff]
    %v472 = vld [vmem:[#allocation6 + $0x9f8] sm:$0xff]
    %v473 = vld [vmem:[#allocation6 + $0xa00] sm:$0xff]
    %v474 = vld [vmem:[#allocation6 + $0xa08] sm:$0xff]
    %v475 = vld [vmem:[#allocation6 + $0xa10] sm:$0xff]
    %v476 = vld [vmem:[#allocation6 + $0xa18] sm:$0xff]
    %v477 = vld [vmem:[#allocation6 + $0xa20] sm:$0xff]
    %v478 = vld [vmem:[#allocation6 + $0xa28] sm:$0xff]
    %v479 = vld [vmem:[#allocation6 + $0xa30] sm:$0xff]
    %v480 = vld [vmem:[#allocation6 + $0xa38] sm:$0xff]
    %v481 = vld [vmem:[#allocation6 + $0xa40] sm:$0xff]
    %v482 = vld [vmem:[#allocation6 + $0xa48] sm:$0xff]
    %v483 = vld [vmem:[#allocation6 + $0xa50] sm:$0xff]
    %v484 = vld [vmem:[#allocation6 + $0xa58] sm:$0xff]
    %v485 = vld [vmem:[#allocation6 + $0xa60] sm:$0xff]
    %v486 = vld [vmem:[#allocation6 + $0xa68] sm:$0xff]
    %v487 = vld [vmem:[#allocation6 + $0xa70] sm:$0xff]
    %v488 = vld [vmem:[#allocation6 + $0xa78] sm:$0xff]
    %v489 = vld [vmem:[#allocation6 + $0xa80] sm:$0xff]
    %v490 = vld [vmem:[#allocation6 + $0xa88] sm:$0xff]
    %v491 = vld [vmem:[#allocation6 + $0xa90] sm:$0xff]
    %v492 = vld [vmem:[#allocation6 + $0xa98] sm:$0xff]
    %v493 = vld [vmem:[#allocation6 + $0xaa0] sm:$0xff]
    %v494 = vld [vmem:[#allocation6 + $0xaa8] sm:$0xff]
    %v495 = vld [vmem:[#allocation6 + $0xab0] sm:$0xff]
    %v496 = vld [vmem:[#allocation6 + $0xab8] sm:$0xff]
    %v497 = vld [vmem:[#allocation6 + $0xac0] sm:$0xff]
    %v498 = vld [vmem:[#allocation6 + $0xac8] sm:$0xff]
    %v499 = vld [vmem:[#allocation6 + $0xad0] sm:$0xff]
    %v500 = vld [vmem:[#allocation6 + $0xad8] sm:$0xff]
    %v501 = vld [vmem:[#allocation6 + $0xae0] sm:$0xff]
    %v502 = vld [vmem:[#allocation6 + $0xae8] sm:$0xff]
    %v503 = vld [vmem:[#allocation6 + $0xaf0] sm:$0xff]
    %v504 = vld [vmem:[#allocation6 + $0xaf8] sm:$0xff]
    %v505 = vld [vmem:[#allocation6 + $0xb00] sm:$0xff]
    %v506 = vld [vmem:[#allocation6 + $0xb08] sm:$0xff]
    %v507 = vld [vmem:[#allocation6 + $0xb10] sm:$0xff]
    %v508 = vld [vmem:[#allocation6 + $0xb18] sm:$0xff]
    %v509 = vld [vmem:[#allocation6 + $0xb20] sm:$0xff]
    %v510 = vld [vmem:[#allocation6 + $0xb28] sm:$0xff]
    %v511 = vld [vmem:[#allocation6 + $0xb30] sm:$0xff]
    %v512 = vld [vmem:[#allocation6 + $0xb38] sm:$0xff]
    %v513 = vld [vmem:[#allocation6 + $0xb40] sm:$0xff]
    %v514 = vld [vmem:[#allocation6 + $0xb48] sm:$0xff]
    %v515 = vld [vmem:[#allocation6 + $0xb50] sm:$0xff]
    %v516 = vld [vmem:[#allocation6 + $0xb58] sm:$0xff]
    %v517 = vld [vmem:[#allocation6 + $0xb60] sm:$0xff]
    %v518 = vld [vmem:[#allocation6 + $0xb68] sm:$0xff]
    %v519 = vld [vmem:[#allocation6 + $0xb70] sm:$0xff]
    %v520 = vld [vmem:[#allocation6 + $0xb78] sm:$0xff]
    %v521 = vld [vmem:[#allocation6 + $0xb80] sm:$0xff]
    %v522 = vld [vmem:[#allocation6 + $0xb88] sm:$0xff]
    %v523 = vld [vmem:[#allocation6 + $0xb90] sm:$0xff]
    %v524 = vld [vmem:[#allocation6 + $0xb98] sm:$0xff]
    %v525 = vld [vmem:[#allocation6 + $0xba0] sm:$0xff]
    %v526 = vld [vmem:[#allocation6 + $0xba8] sm:$0xff]
    %v527 = vld [vmem:[#allocation6 + $0xbb0] sm:$0xff]
    %v528 = vld [vmem:[#allocation6 + $0xbb8] sm:$0xff]
    %v529 = vld [vmem:[#allocation6 + $0xbc0] sm:$0xff]
    %v530 = vld [vmem:[#allocation6 + $0xbc8] sm:$0xff]
    %v531 = vld [vmem:[#allocation6 + $0xbd0] sm:$0xff]
    %v532 = vld [vmem:[#allocation6 + $0xbd8] sm:$0xff]
    %v533 = vld [vmem:[#allocation6 + $0xbe0] sm:$0xff]
    %v534 = vld [vmem:[#allocation6 + $0xbe8] sm:$0xff]
    %v535 = vld [vmem:[#allocation6 + $0xbf0] sm:$0xff]
    %v536 = vld [vmem:[#allocation6 + $0xbf8] sm:$0xff]
    %v537 = vld [vmem:[#allocation6 + $0xc00] sm:$0xff]
    %v538 = vld [vmem:[#allocation6 + $0xc08] sm:$0xff]
    %v539 = vld [vmem:[#allocation6 + $0xc10] sm:$0xff]
    %v540 = vld [vmem:[#allocation6 + $0xc18] sm:$0xff]
    %v541 = vld [vmem:[#allocation6 + $0xc20] sm:$0xff]
    %v542 = vld [vmem:[#allocation6 + $0xc28] sm:$0xff]
    %v543 = vld [vmem:[#allocation6 + $0xc30] sm:$0xff]
    %v544 = vld [vmem:[#allocation6 + $0xc38] sm:$0xff]
    %v545 = vld [vmem:[#allocation6 + $0xc40] sm:$0xff]
    %v546 = vld [vmem:[#allocation6 + $0xc48] sm:$0xff]
    %v547 = vld [vmem:[#allocation6 + $0xc50] sm:$0xff]
    %v548 = vld [vmem:[#allocation6 + $0xc58] sm:$0xff]
    %v549 = vld [vmem:[#allocation6 + $0xc60] sm:$0xff]
    %v550 = vld [vmem:[#allocation6 + $0xc68] sm:$0xff]
    %v551 = vld [vmem:[#allocation6 + $0xc70] sm:$0xff]
    %v552 = vld [vmem:[#allocation6 + $0xc78] sm:$0xff]
    %v553 = vld [vmem:[#allocation6 + $0xc80] sm:$0xff]
    %v554 = vld [vmem:[#allocation6 + $0xc88] sm:$0xff]
    %v555 = vld [vmem:[#allocation6 + $0xc90] sm:$0xff]
    %v556 = vld [vmem:[#allocation6 + $0xc98] sm:$0xff]
    %v557 = vld [vmem:[#allocation6 + $0xca0] sm:$0xff]
    %v558 = vld [vmem:[#allocation6 + $0xca8] sm:$0xff]
    %v559 = vld [vmem:[#allocation6 + $0xcb0] sm:$0xff]
    %v560 = vld [vmem:[#allocation6 + $0xcb8] sm:$0xff]
    %v561 = vld [vmem:[#allocation6 + $0xcc0] sm:$0xff]
    %v562 = vld [vmem:[#allocation6 + $0xcc8] sm:$0xff]
    %v563 = vld [vmem:[#allocation6 + $0xcd0] sm:$0xff]
    %v564 = vld [vmem:[#allocation6 + $0xcd8] sm:$0xff]
    %v565 = vld [vmem:[#allocation6 + $0xce0] sm:$0xff]
    %v566 = vld [vmem:[#allocation6 + $0xce8] sm:$0xff]
    %v567 = vld [vmem:[#allocation6 + $0xcf0] sm:$0xff]
    %v568 = vld [vmem:[#allocation6 + $0xcf8] sm:$0xff]
    %v569 = vld [vmem:[#allocation6 + $0xd00] sm:$0xff]
    %v570 = vld [vmem:[#allocation6 + $0xd08] sm:$0xff]
    %v571 = vld [vmem:[#allocation6 + $0xd10] sm:$0xff]
    %v572 = vld [vmem:[#allocation6 + $0xd18] sm:$0xff]
    %v573 = vld [vmem:[#allocation6 + $0xd20] sm:$0xff]
    %v574 = vld [vmem:[#allocation6 + $0xd28] sm:$0xff]
    %v575 = vld [vmem:[#allocation6 + $0xd30] sm:$0xff]
    %v576 = vld [vmem:[#allocation6 + $0xd38] sm:$0xff]
    %v577 = vld [vmem:[#allocation6 + $0xd40] sm:$0xff]
    %v578 = vld [vmem:[#allocation6 + $0xd48] sm:$0xff]
    %v579 = vld [vmem:[#allocation6 + $0xd50] sm:$0xff]
    %v580 = vld [vmem:[#allocation6 + $0xd58] sm:$0xff]
    %v581 = vld [vmem:[#allocation6 + $0xd60] sm:$0xff]
    %v582 = vld [vmem:[#allocation6 + $0xd68] sm:$0xff]
    %v583 = vld [vmem:[#allocation6 + $0xd70] sm:$0xff]
    %v584 = vld [vmem:[#allocation6 + $0xd78] sm:$0xff]
    %v585 = vld [vmem:[#allocation6 + $0xd80] sm:$0xff]
    %v586 = vld [vmem:[#allocation6 + $0xd88] sm:$0xff]
    %v587 = vld [vmem:[#allocation6 + $0xd90] sm:$0xff]
    %v588 = vld [vmem:[#allocation6 + $0xd98] sm:$0xff]
    %v589 = vld [vmem:[#allocation6 + $0xda0] sm:$0xff]
    %v590 = vld [vmem:[#allocation6 + $0xda8] sm:$0xff]
    %v591 = vld [vmem:[#allocation6 + $0xdb0] sm:$0xff]
    %v592 = vld [vmem:[#allocation6 + $0xdb8] sm:$0xff]
    %v593 = vld [vmem:[#allocation6 + $0xdc0] sm:$0xff]
    %v594 = vld [vmem:[#allocation6 + $0xdc8] sm:$0xff]
    %v595 = vld [vmem:[#allocation6 + $0xdd0] sm:$0xff]
    %v596 = vld [vmem:[#allocation6 + $0xdd8] sm:$0xff]
    %v597 = vld [vmem:[#allocation6 + $0xde0] sm:$0xff]
    %v598 = vld [vmem:[#allocation6 + $0xde8] sm:$0xff]
    %v599 = vld [vmem:[#allocation6 + $0xdf0] sm:$0xff]
    %v600 = vld [vmem:[#allocation6 + $0xdf8] sm:$0xff]
    %v601 = vld [vmem:[#allocation6 + $0xe00] sm:$0xff]
    %v602 = vld [vmem:[#allocation6 + $0xe08] sm:$0xff]
    %v603 = vld [vmem:[#allocation6 + $0xe10] sm:$0xff]
    %v604 = vld [vmem:[#allocation6 + $0xe18] sm:$0xff]
    %v605 = vld [vmem:[#allocation6 + $0xe20] sm:$0xff]
    %v606 = vld [vmem:[#allocation6 + $0xe28] sm:$0xff]
    %v607 = vld [vmem:[#allocation6 + $0xe30] sm:$0xff]
    %v608 = vld [vmem:[#allocation6 + $0xe38] sm:$0xff]
    %v609 = vld [vmem:[#allocation6 + $0xe40] sm:$0xff]
    %v610 = vld [vmem:[#allocation6 + $0xe48] sm:$0xff]
    %v611 = vld [vmem:[#allocation6 + $0xe50] sm:$0xff]
    %v612 = vld [vmem:[#allocation6 + $0xe58] sm:$0xff]
    %v613 = vld [vmem:[#allocation6 + $0xe60] sm:$0xff]
    %v614 = vld [vmem:[#allocation6 + $0xe68] sm:$0xff]
    %v615 = vld [vmem:[#allocation6 + $0xe70] sm:$0xff]
    %v616 = vld [vmem:[#allocation6 + $0xe78] sm:$0xff]
    %v617 = vld [vmem:[#allocation6 + $0xe80] sm:$0xff]
    %v618 = vld [vmem:[#allocation6 + $0xe88] sm:$0xff]
    %v619 = vld [vmem:[#allocation6 + $0xe90] sm:$0xff]
    %v620 = vld [vmem:[#allocation6 + $0xe98] sm:$0xff]
    %v621 = vld [vmem:[#allocation6 + $0xea0] sm:$0xff]
    %v622 = vld [vmem:[#allocation6 + $0xea8] sm:$0xff]
    %v623 = vld [vmem:[#allocation6 + $0xeb0] sm:$0xff]
    %v624 = vld [vmem:[#allocation6 + $0xeb8] sm:$0xff]
    %v625 = vld [vmem:[#allocation6 + $0xec0] sm:$0xff]
    %v626 = vld [vmem:[#allocation6 + $0xec8] sm:$0xff]
    %v627 = vld [vmem:[#allocation6 + $0xed0] sm:$0xff]
    %v628 = vld [vmem:[#allocation6 + $0xed8] sm:$0xff]
    %v629 = vld [vmem:[#allocation6 + $0xee0] sm:$0xff]
    %v630 = vld [vmem:[#allocation6 + $0xee8] sm:$0xff]
    %v631 = vld [vmem:[#allocation6 + $0xef0] sm:$0xff]
    %v632 = vld [vmem:[#allocation6 + $0xef8] sm:$0xff]
    %v633 = vld [vmem:[#allocation6 + $0xf00] sm:$0xff]
    %v634 = vld [vmem:[#allocation6 + $0xf08] sm:$0xff]
    %v635 = vld [vmem:[#allocation6 + $0xf10] sm:$0xff]
    %v636 = vld [vmem:[#allocation6 + $0xf18] sm:$0xff]
    %v637 = vld [vmem:[#allocation6 + $0xf20] sm:$0xff]
    %v638 = vld [vmem:[#allocation6 + $0xf28] sm:$0xff]
    %v639 = vld [vmem:[#allocation6 + $0xf30] sm:$0xff]
    %v640 = vld [vmem:[#allocation6 + $0xf38] sm:$0xff]
    %v641 = vld [vmem:[#allocation6 + $0xf40] sm:$0xff]
    %v642 = vld [vmem:[#allocation6 + $0xf48] sm:$0xff]
    %v643 = vld [vmem:[#allocation6 + $0xf50] sm:$0xff]
    %v644 = vld [vmem:[#allocation6 + $0xf58] sm:$0xff]
    %v645 = vld [vmem:[#allocation6 + $0xf60] sm:$0xff]
    %v646 = vld [vmem:[#allocation6 + $0xf68] sm:$0xff]
    %v647 = vld [vmem:[#allocation6 + $0xf70] sm:$0xff]
    %v648 = vld [vmem:[#allocation6 + $0xf78] sm:$0xff]
    %v649 = vld [vmem:[#allocation6 + $0xf80] sm:$0xff]
    %v650 = vld [vmem:[#allocation6 + $0xf88] sm:$0xff]
    %v651 = vld [vmem:[#allocation6 + $0xf90] sm:$0xff]
    %v652 = vld [vmem:[#allocation6 + $0xf98] sm:$0xff]
    %v653 = vld [vmem:[#allocation6 + $0xfa0] sm:$0xff]
    %v654 = vld [vmem:[#allocation6 + $0xfa8] sm:$0xff]
    %v655 = vld [vmem:[#allocation6 + $0xfb0] sm:$0xff]
    %v656 = vld [vmem:[#allocation6 + $0xfb8] sm:$0xff]
    %v657 = vld [vmem:[#allocation6 + $0xfc0] sm:$0xff]
    %v658 = vld [vmem:[#allocation6 + $0xfc8] sm:$0xff]
    %v659 = vld [vmem:[#allocation6 + $0xfd0] sm:$0xff]
    %v660 = vld [vmem:[#allocation6 + $0xfd8] sm:$0xff]
    %v661 = vld [vmem:[#allocation6 + $0xfe0] sm:$0xff]
    %v662 = vld [vmem:[#allocation6 + $0xfe8] sm:$0xff]
    %v663 = vld [vmem:[#allocation6 + $0xff0] sm:$0xff]
    %v664 = vld [vmem:[#allocation6 + $0xff8] sm:$0xff]
    %v665 = vlaneseq
    %v666 = vshrl.u32 %v665, 7
    %v667 = vsub.s32 0, %v666
    %v668 = vrot.slane %v140, %v667
    %v669 = vlaneseq
    %v670 = vshrl.u32 %v669, 7
    %v671 = vsub.s32 0, %v670
    %v672 = vrot.slane %v141, %v671
    %v673 = vlaneseq
    %v674 = vshrl.u32 %v673, 7
    %v675 = vsub.s32 0, %v674
    %v676 = vrot.slane %v142, %v675
    %v677 = vlaneseq
    %v678 = vshrl.u32 %v677, 7
    %v679 = vsub.s32 0, %v678
    %v680 = vrot.slane %v143, %v679
    %v689 = vunpack.c.l.b16 %v145
    %v690 = vunpack.c.h.b16 %v145
    %v691 = vunpack.c.l.b16 %v146
    %v692 = vunpack.c.h.b16 %v146
    %v693 = vunpack.c.l.b16 %v147
    %v694 = vunpack.c.h.b16 %v147
    %v695 = vunpack.c.l.b16 %v148
    %v696 = vunpack.c.h.b16 %v148
    %v697 = vunpack.c.l.b16 %v149
    %v698 = vunpack.c.h.b16 %v149
    %v699 = vunpack.c.l.b16 %v150
    %v700 = vunpack.c.h.b16 %v150
    %v701 = vunpack.c.l.b16 %v151
    %v702 = vunpack.c.h.b16 %v151
    %v703 = vunpack.c.l.b16 %v152
    %v704 = vunpack.c.h.b16 %v152
    %v705 = vpack.c.b16 %v689, %v689
    %v706 = vpack.c.b16 %v690, %v690
    %v707 = vpack.c.b16 %v691, %v691
    %v708 = vpack.c.b16 %v692, %v692
    %v709 = vpack.c.b16 %v693, %v693
    %v710 = vpack.c.b16 %v694, %v694
    %v711 = vpack.c.b16 %v695, %v695
    %v712 = vpack.c.b16 %v696, %v696
    %v713 = vpack.c.b16 %v697, %v697
    %v714 = vpack.c.b16 %v698, %v698
    %v715 = vpack.c.b16 %v699, %v699
    %v716 = vpack.c.b16 %v700, %v700
    %v717 = vpack.c.b16 %v701, %v701
    %v718 = vpack.c.b16 %v702, %v702
    %v719 = vpack.c.b16 %v703, %v703
    %v720 = vpack.c.b16 %v704, %v704
    %v1249 = vunpack.c.l.b16 %v153
    %v1250 = vunpack.c.h.b16 %v153
    %v1251 = vunpack.c.l.b16 %v154
    %v1252 = vunpack.c.h.b16 %v154
    %v1253 = vunpack.c.l.b16 %v155
    %v1254 = vunpack.c.h.b16 %v155
    %v1255 = vunpack.c.l.b16 %v156
    %v1256 = vunpack.c.h.b16 %v156
    %v1257 = vunpack.c.l.b16 %v157
    %v1258 = vunpack.c.h.b16 %v157
    %v1259 = vunpack.c.l.b16 %v158
    %v1260 = vunpack.c.h.b16 %v158
    %v1261 = vunpack.c.l.b16 %v159
    %v1262 = vunpack.c.h.b16 %v159
    %v1263 = vunpack.c.l.b16 %v160
    %v1264 = vunpack.c.h.b16 %v160
    %v1265 = vunpack.c.l.b16 %v161
    %v1266 = vunpack.c.h.b16 %v161
    %v1267 = vunpack.c.l.b16 %v162
    %v1268 = vunpack.c.h.b16 %v162
    %v1269 = vunpack.c.l.b16 %v163
    %v1270 = vunpack.c.h.b16 %v163
    %v1271 = vunpack.c.l.b16 %v164
    %v1272 = vunpack.c.h.b16 %v164
    %v1273 = vunpack.c.l.b16 %v165
    %v1274 = vunpack.c.h.b16 %v165
    %v1275 = vunpack.c.l.b16 %v166
    %v1276 = vunpack.c.h.b16 %v166
    %v1277 = vunpack.c.l.b16 %v167
    %v1278 = vunpack.c.h.b16 %v167
    %v1279 = vunpack.c.l.b16 %v168
    %v1280 = vunpack.c.h.b16 %v168
    %v1281 = vunpack.c.l.b16 %v169
    %v1282 = vunpack.c.h.b16 %v169
    %v1283 = vunpack.c.l.b16 %v170
    %v1284 = vunpack.c.h.b16 %v170
    %v1285 = vunpack.c.l.b16 %v171
    %v1286 = vunpack.c.h.b16 %v171
    %v1287 = vunpack.c.l.b16 %v172
    %v1288 = vunpack.c.h.b16 %v172
    %v1289 = vunpack.c.l.b16 %v173
    %v1290 = vunpack.c.h.b16 %v173
    %v1291 = vunpack.c.l.b16 %v174
    %v1292 = vunpack.c.h.b16 %v174
    %v1293 = vunpack.c.l.b16 %v175
    %v1294 = vunpack.c.h.b16 %v175
    %v1295 = vunpack.c.l.b16 %v176
    %v1296 = vunpack.c.h.b16 %v176
    %v1297 = vunpack.c.l.b16 %v177
    %v1298 = vunpack.c.h.b16 %v177
    %v1299 = vunpack.c.l.b16 %v178
    %v1300 = vunpack.c.h.b16 %v178
    %v1301 = vunpack.c.l.b16 %v179
    %v1302 = vunpack.c.h.b16 %v179
    %v1303 = vunpack.c.l.b16 %v180
    %v1304 = vunpack.c.h.b16 %v180
    %v1305 = vunpack.c.l.b16 %v181
    %v1306 = vunpack.c.h.b16 %v181
    %v1307 = vunpack.c.l.b16 %v182
    %v1308 = vunpack.c.h.b16 %v182
    %v1309 = vunpack.c.l.b16 %v183
    %v1310 = vunpack.c.h.b16 %v183
    %v1311 = vunpack.c.l.b16 %v184
    %v1312 = vunpack.c.h.b16 %v184
    %v1313 = vunpack.c.l.b16 %v185
    %v1314 = vunpack.c.h.b16 %v185
    %v1315 = vunpack.c.l.b16 %v186
    %v1316 = vunpack.c.h.b16 %v186
    %v1317 = vunpack.c.l.b16 %v187
    %v1318 = vunpack.c.h.b16 %v187
    %v1319 = vunpack.c.l.b16 %v188
    %v1320 = vunpack.c.h.b16 %v188
    %v1321 = vunpack.c.l.b16 %v189
    %v1322 = vunpack.c.h.b16 %v189
    %v1323 = vunpack.c.l.b16 %v190
    %v1324 = vunpack.c.h.b16 %v190
    %v1325 = vunpack.c.l.b16 %v191
    %v1326 = vunpack.c.h.b16 %v191
    %v1327 = vunpack.c.l.b16 %v192
    %v1328 = vunpack.c.h.b16 %v192
    %v1329 = vunpack.c.l.b16 %v193
    %v1330 = vunpack.c.h.b16 %v193
    %v1331 = vunpack.c.l.b16 %v194
    %v1332 = vunpack.c.h.b16 %v194
    %v1333 = vunpack.c.l.b16 %v195
    %v1334 = vunpack.c.h.b16 %v195
    %v1335 = vunpack.c.l.b16 %v196
    %v1336 = vunpack.c.h.b16 %v196
    %v1337 = vunpack.c.l.b16 %v197
    %v1338 = vunpack.c.h.b16 %v197
    %v1339 = vunpack.c.l.b16 %v198
    %v1340 = vunpack.c.h.b16 %v198
    %v1341 = vunpack.c.l.b16 %v199
    %v1342 = vunpack.c.h.b16 %v199
    %v1343 = vunpack.c.l.b16 %v200
    %v1344 = vunpack.c.h.b16 %v200
    %v1345 = vunpack.c.l.b16 %v201
    %v1346 = vunpack.c.h.b16 %v201
    %v1347 = vunpack.c.l.b16 %v202
    %v1348 = vunpack.c.h.b16 %v202
    %v1349 = vunpack.c.l.b16 %v203
    %v1350 = vunpack.c.h.b16 %v203
    %v1351 = vunpack.c.l.b16 %v204
    %v1352 = vunpack.c.h.b16 %v204
    %v1353 = vunpack.c.l.b16 %v205
    %v1354 = vunpack.c.h.b16 %v205
    %v1355 = vunpack.c.l.b16 %v206
    %v1356 = vunpack.c.h.b16 %v206
    %v1357 = vunpack.c.l.b16 %v207
    %v1358 = vunpack.c.h.b16 %v207
    %v1359 = vunpack.c.l.b16 %v208
    %v1360 = vunpack.c.h.b16 %v208
    %v1361 = vunpack.c.l.b16 %v209
    %v1362 = vunpack.c.h.b16 %v209
    %v1363 = vunpack.c.l.b16 %v210
    %v1364 = vunpack.c.h.b16 %v210
    %v1365 = vunpack.c.l.b16 %v211
    %v1366 = vunpack.c.h.b16 %v211
    %v1367 = vunpack.c.l.b16 %v212
    %v1368 = vunpack.c.h.b16 %v212
    %v1369 = vunpack.c.l.b16 %v213
    %v1370 = vunpack.c.h.b16 %v213
    %v1371 = vunpack.c.l.b16 %v214
    %v1372 = vunpack.c.h.b16 %v214
    %v1373 = vunpack.c.l.b16 %v215
    %v1374 = vunpack.c.h.b16 %v215
    %v1375 = vunpack.c.l.b16 %v216
    %v1376 = vunpack.c.h.b16 %v216
    %v1377 = vunpack.c.l.b16 %v217
    %v1378 = vunpack.c.h.b16 %v217
    %v1379 = vunpack.c.l.b16 %v218
    %v1380 = vunpack.c.h.b16 %v218
    %v1381 = vunpack.c.l.b16 %v219
    %v1382 = vunpack.c.h.b16 %v219
    %v1383 = vunpack.c.l.b16 %v220
    %v1384 = vunpack.c.h.b16 %v220
    %v1385 = vunpack.c.l.b16 %v221
    %v1386 = vunpack.c.h.b16 %v221
    %v1387 = vunpack.c.l.b16 %v222
    %v1388 = vunpack.c.h.b16 %v222
    %v1389 = vunpack.c.l.b16 %v223
    %v1390 = vunpack.c.h.b16 %v223
    %v1391 = vunpack.c.l.b16 %v224
    %v1392 = vunpack.c.h.b16 %v224
    %v1393 = vunpack.c.l.b16 %v225
    %v1394 = vunpack.c.h.b16 %v225
    %v1395 = vunpack.c.l.b16 %v226
    %v1396 = vunpack.c.h.b16 %v226
    %v1397 = vunpack.c.l.b16 %v227
    %v1398 = vunpack.c.h.b16 %v227
    %v1399 = vunpack.c.l.b16 %v228
    %v1400 = vunpack.c.h.b16 %v228
    %v1401 = vunpack.c.l.b16 %v229
    %v1402 = vunpack.c.h.b16 %v229
    %v1403 = vunpack.c.l.b16 %v230
    %v1404 = vunpack.c.h.b16 %v230
    %v1405 = vunpack.c.l.b16 %v231
    %v1406 = vunpack.c.h.b16 %v231
    %v1407 = vunpack.c.l.b16 %v232
    %v1408 = vunpack.c.h.b16 %v232
    %v1409 = vunpack.c.l.b16 %v233
    %v1410 = vunpack.c.h.b16 %v233
    %v1411 = vunpack.c.l.b16 %v234
    %v1412 = vunpack.c.h.b16 %v234
    %v1413 = vunpack.c.l.b16 %v235
    %v1414 = vunpack.c.h.b16 %v235
    %v1415 = vunpack.c.l.b16 %v236
    %v1416 = vunpack.c.h.b16 %v236
    %v1417 = vunpack.c.l.b16 %v237
    %v1418 = vunpack.c.h.b16 %v237
    %v1419 = vunpack.c.l.b16 %v238
    %v1420 = vunpack.c.h.b16 %v238
    %v1421 = vunpack.c.l.b16 %v239
    %v1422 = vunpack.c.h.b16 %v239
    %v1423 = vunpack.c.l.b16 %v240
    %v1424 = vunpack.c.h.b16 %v240
    %v1425 = vunpack.c.l.b16 %v241
    %v1426 = vunpack.c.h.b16 %v241
    %v1427 = vunpack.c.l.b16 %v242
    %v1428 = vunpack.c.h.b16 %v242
    %v1429 = vunpack.c.l.b16 %v243
    %v1430 = vunpack.c.h.b16 %v243
    %v1431 = vunpack.c.l.b16 %v244
    %v1432 = vunpack.c.h.b16 %v244
    %v1433 = vunpack.c.l.b16 %v245
    %v1434 = vunpack.c.h.b16 %v245
    %v1435 = vunpack.c.l.b16 %v246
    %v1436 = vunpack.c.h.b16 %v246
    %v1437 = vunpack.c.l.b16 %v247
    %v1438 = vunpack.c.h.b16 %v247
    %v1439 = vunpack.c.l.b16 %v248
    %v1440 = vunpack.c.h.b16 %v248
    %v1441 = vunpack.c.l.b16 %v249
    %v1442 = vunpack.c.h.b16 %v249
    %v1443 = vunpack.c.l.b16 %v250
    %v1444 = vunpack.c.h.b16 %v250
    %v1445 = vunpack.c.l.b16 %v251
    %v1446 = vunpack.c.h.b16 %v251
    %v1447 = vunpack.c.l.b16 %v252
    %v1448 = vunpack.c.h.b16 %v252
    %v1449 = vunpack.c.l.b16 %v253
    %v1450 = vunpack.c.h.b16 %v253
    %v1451 = vunpack.c.l.b16 %v254
    %v1452 = vunpack.c.h.b16 %v254
    %v1453 = vunpack.c.l.b16 %v255
    %v1454 = vunpack.c.h.b16 %v255
    %v1455 = vunpack.c.l.b16 %v256
    %v1456 = vunpack.c.h.b16 %v256
    %v1457 = vunpack.c.l.b16 %v257
    %v1458 = vunpack.c.h.b16 %v257
    %v1459 = vunpack.c.l.b16 %v258
    %v1460 = vunpack.c.h.b16 %v258
    %v1461 = vunpack.c.l.b16 %v259
    %v1462 = vunpack.c.h.b16 %v259
    %v1463 = vunpack.c.l.b16 %v260
    %v1464 = vunpack.c.h.b16 %v260
    %v1465 = vunpack.c.l.b16 %v261
    %v1466 = vunpack.c.h.b16 %v261
    %v1467 = vunpack.c.l.b16 %v262
    %v1468 = vunpack.c.h.b16 %v262
    %v1469 = vunpack.c.l.b16 %v263
    %v1470 = vunpack.c.h.b16 %v263
    %v1471 = vunpack.c.l.b16 %v264
    %v1472 = vunpack.c.h.b16 %v264
    %v1473 = vunpack.c.l.b16 %v265
    %v1474 = vunpack.c.h.b16 %v265
    %v1475 = vunpack.c.l.b16 %v266
    %v1476 = vunpack.c.h.b16 %v266
    %v1477 = vunpack.c.l.b16 %v267
    %v1478 = vunpack.c.h.b16 %v267
    %v1479 = vunpack.c.l.b16 %v268
    %v1480 = vunpack.c.h.b16 %v268
    %v1481 = vunpack.c.l.b16 %v269
    %v1482 = vunpack.c.h.b16 %v269
    %v1483 = vunpack.c.l.b16 %v270
    %v1484 = vunpack.c.h.b16 %v270
    %v1485 = vunpack.c.l.b16 %v271
    %v1486 = vunpack.c.h.b16 %v271
    %v1487 = vunpack.c.l.b16 %v272
    %v1488 = vunpack.c.h.b16 %v272
    %v1489 = vunpack.c.l.b16 %v273
    %v1490 = vunpack.c.h.b16 %v273
    %v1491 = vunpack.c.l.b16 %v274
    %v1492 = vunpack.c.h.b16 %v274
    %v1493 = vunpack.c.l.b16 %v275
    %v1494 = vunpack.c.h.b16 %v275
    %v1495 = vunpack.c.l.b16 %v276
    %v1496 = vunpack.c.h.b16 %v276
    %v1497 = vunpack.c.l.b16 %v277
    %v1498 = vunpack.c.h.b16 %v277
    %v1499 = vunpack.c.l.b16 %v278
    %v1500 = vunpack.c.h.b16 %v278
    %v1501 = vunpack.c.l.b16 %v279
    %v1502 = vunpack.c.h.b16 %v279
    %v1503 = vunpack.c.l.b16 %v280
    %v1504 = vunpack.c.h.b16 %v280
    %v1505 = vunpack.c.l.b16 %v281
    %v1506 = vunpack.c.h.b16 %v281
    %v1507 = vunpack.c.l.b16 %v282
    %v1508 = vunpack.c.h.b16 %v282
    %v1509 = vunpack.c.l.b16 %v283
    %v1510 = vunpack.c.h.b16 %v283
    %v1511 = vunpack.c.l.b16 %v284
    %v1512 = vunpack.c.h.b16 %v284
    %v1513 = vunpack.c.l.b16 %v285
    %v1514 = vunpack.c.h.b16 %v285
    %v1515 = vunpack.c.l.b16 %v286
    %v1516 = vunpack.c.h.b16 %v286
    %v1517 = vunpack.c.l.b16 %v287
    %v1518 = vunpack.c.h.b16 %v287
    %v1519 = vunpack.c.l.b16 %v288
    %v1520 = vunpack.c.h.b16 %v288
    %v1521 = vunpack.c.l.b16 %v289
    %v1522 = vunpack.c.h.b16 %v289
    %v1523 = vunpack.c.l.b16 %v290
    %v1524 = vunpack.c.h.b16 %v290
    %v1525 = vunpack.c.l.b16 %v291
    %v1526 = vunpack.c.h.b16 %v291
    %v1527 = vunpack.c.l.b16 %v292
    %v1528 = vunpack.c.h.b16 %v292
    %v1529 = vunpack.c.l.b16 %v293
    %v1530 = vunpack.c.h.b16 %v293
    %v1531 = vunpack.c.l.b16 %v294
    %v1532 = vunpack.c.h.b16 %v294
    %v1533 = vunpack.c.l.b16 %v295
    %v1534 = vunpack.c.h.b16 %v295
    %v1535 = vunpack.c.l.b16 %v296
    %v1536 = vunpack.c.h.b16 %v296
    %v1537 = vunpack.c.l.b16 %v297
    %v1538 = vunpack.c.h.b16 %v297
    %v1539 = vunpack.c.l.b16 %v298
    %v1540 = vunpack.c.h.b16 %v298
    %v1541 = vunpack.c.l.b16 %v299
    %v1542 = vunpack.c.h.b16 %v299
    %v1543 = vunpack.c.l.b16 %v300
    %v1544 = vunpack.c.h.b16 %v300
    %v1545 = vunpack.c.l.b16 %v301
    %v1546 = vunpack.c.h.b16 %v301
    %v1547 = vunpack.c.l.b16 %v302
    %v1548 = vunpack.c.h.b16 %v302
    %v1549 = vunpack.c.l.b16 %v303
    %v1550 = vunpack.c.h.b16 %v303
    %v1551 = vunpack.c.l.b16 %v304
    %v1552 = vunpack.c.h.b16 %v304
    %v1553 = vunpack.c.l.b16 %v305
    %v1554 = vunpack.c.h.b16 %v305
    %v1555 = vunpack.c.l.b16 %v306
    %v1556 = vunpack.c.h.b16 %v306
    %v1557 = vunpack.c.l.b16 %v307
    %v1558 = vunpack.c.h.b16 %v307
    %v1559 = vunpack.c.l.b16 %v308
    %v1560 = vunpack.c.h.b16 %v308
    %v1561 = vunpack.c.l.b16 %v309
    %v1562 = vunpack.c.h.b16 %v309
    %v1563 = vunpack.c.l.b16 %v310
    %v1564 = vunpack.c.h.b16 %v310
    %v1565 = vunpack.c.l.b16 %v311
    %v1566 = vunpack.c.h.b16 %v311
    %v1567 = vunpack.c.l.b16 %v312
    %v1568 = vunpack.c.h.b16 %v312
    %v1569 = vunpack.c.l.b16 %v313
    %v1570 = vunpack.c.h.b16 %v313
    %v1571 = vunpack.c.l.b16 %v314
    %v1572 = vunpack.c.h.b16 %v314
    %v1573 = vunpack.c.l.b16 %v315
    %v1574 = vunpack.c.h.b16 %v315
    %v1575 = vunpack.c.l.b16 %v316
    %v1576 = vunpack.c.h.b16 %v316
    %v1577 = vunpack.c.l.b16 %v317
    %v1578 = vunpack.c.h.b16 %v317
    %v1579 = vunpack.c.l.b16 %v318
    %v1580 = vunpack.c.h.b16 %v318
    %v1581 = vunpack.c.l.b16 %v319
    %v1582 = vunpack.c.h.b16 %v319
    %v1583 = vunpack.c.l.b16 %v320
    %v1584 = vunpack.c.h.b16 %v320
    %v1585 = vunpack.c.l.b16 %v321
    %v1586 = vunpack.c.h.b16 %v321
    %v1587 = vunpack.c.l.b16 %v322
    %v1588 = vunpack.c.h.b16 %v322
    %v1589 = vunpack.c.l.b16 %v323
    %v1590 = vunpack.c.h.b16 %v323
    %v1591 = vunpack.c.l.b16 %v324
    %v1592 = vunpack.c.h.b16 %v324
    %v1593 = vunpack.c.l.b16 %v325
    %v1594 = vunpack.c.h.b16 %v325
    %v1595 = vunpack.c.l.b16 %v326
    %v1596 = vunpack.c.h.b16 %v326
    %v1597 = vunpack.c.l.b16 %v327
    %v1598 = vunpack.c.h.b16 %v327
    %v1599 = vunpack.c.l.b16 %v328
    %v1600 = vunpack.c.h.b16 %v328
    %v1601 = vunpack.c.l.b16 %v329
    %v1602 = vunpack.c.h.b16 %v329
    %v1603 = vunpack.c.l.b16 %v330
    %v1604 = vunpack.c.h.b16 %v330
    %v1605 = vunpack.c.l.b16 %v331
    %v1606 = vunpack.c.h.b16 %v331
    %v1607 = vunpack.c.l.b16 %v332
    %v1608 = vunpack.c.h.b16 %v332
    %v1609 = vunpack.c.l.b16 %v333
    %v1610 = vunpack.c.h.b16 %v333
    %v1611 = vunpack.c.l.b16 %v334
    %v1612 = vunpack.c.h.b16 %v334
    %v1613 = vunpack.c.l.b16 %v335
    %v1614 = vunpack.c.h.b16 %v335
    %v1615 = vunpack.c.l.b16 %v336
    %v1616 = vunpack.c.h.b16 %v336
    %v1617 = vunpack.c.l.b16 %v337
    %v1618 = vunpack.c.h.b16 %v337
    %v1619 = vunpack.c.l.b16 %v338
    %v1620 = vunpack.c.h.b16 %v338
    %v1621 = vunpack.c.l.b16 %v339
    %v1622 = vunpack.c.h.b16 %v339
    %v1623 = vunpack.c.l.b16 %v340
    %v1624 = vunpack.c.h.b16 %v340
    %v1625 = vunpack.c.l.b16 %v341
    %v1626 = vunpack.c.h.b16 %v341
    %v1627 = vunpack.c.l.b16 %v342
    %v1628 = vunpack.c.h.b16 %v342
    %v1629 = vunpack.c.l.b16 %v343
    %v1630 = vunpack.c.h.b16 %v343
    %v1631 = vunpack.c.l.b16 %v344
    %v1632 = vunpack.c.h.b16 %v344
    %v1633 = vunpack.c.l.b16 %v345
    %v1634 = vunpack.c.h.b16 %v345
    %v1635 = vunpack.c.l.b16 %v346
    %v1636 = vunpack.c.h.b16 %v346
    %v1637 = vunpack.c.l.b16 %v347
    %v1638 = vunpack.c.h.b16 %v347
    %v1639 = vunpack.c.l.b16 %v348
    %v1640 = vunpack.c.h.b16 %v348
    %v1641 = vunpack.c.l.b16 %v349
    %v1642 = vunpack.c.h.b16 %v349
    %v1643 = vunpack.c.l.b16 %v350
    %v1644 = vunpack.c.h.b16 %v350
    %v1645 = vunpack.c.l.b16 %v351
    %v1646 = vunpack.c.h.b16 %v351
    %v1647 = vunpack.c.l.b16 %v352
    %v1648 = vunpack.c.h.b16 %v352
    %v1649 = vunpack.c.l.b16 %v353
    %v1650 = vunpack.c.h.b16 %v353
    %v1651 = vunpack.c.l.b16 %v354
    %v1652 = vunpack.c.h.b16 %v354
    %v1653 = vunpack.c.l.b16 %v355
    %v1654 = vunpack.c.h.b16 %v355
    %v1655 = vunpack.c.l.b16 %v356
    %v1656 = vunpack.c.h.b16 %v356
    %v1657 = vunpack.c.l.b16 %v357
    %v1658 = vunpack.c.h.b16 %v357
    %v1659 = vunpack.c.l.b16 %v358
    %v1660 = vunpack.c.h.b16 %v358
    %v1661 = vunpack.c.l.b16 %v359
    %v1662 = vunpack.c.h.b16 %v359
    %v1663 = vunpack.c.l.b16 %v360
    %v1664 = vunpack.c.h.b16 %v360
    %v1665 = vunpack.c.l.b16 %v361
    %v1666 = vunpack.c.h.b16 %v361
    %v1667 = vunpack.c.l.b16 %v362
    %v1668 = vunpack.c.h.b16 %v362
    %v1669 = vunpack.c.l.b16 %v363
    %v1670 = vunpack.c.h.b16 %v363
    %v1671 = vunpack.c.l.b16 %v364
    %v1672 = vunpack.c.h.b16 %v364
    %v1673 = vunpack.c.l.b16 %v365
    %v1674 = vunpack.c.h.b16 %v365
    %v1675 = vunpack.c.l.b16 %v366
    %v1676 = vunpack.c.h.b16 %v366
    %v1677 = vunpack.c.l.b16 %v367
    %v1678 = vunpack.c.h.b16 %v367
    %v1679 = vunpack.c.l.b16 %v368
    %v1680 = vunpack.c.h.b16 %v368
    %v1681 = vunpack.c.l.b16 %v369
    %v1682 = vunpack.c.h.b16 %v369
    %v1683 = vunpack.c.l.b16 %v370
    %v1684 = vunpack.c.h.b16 %v370
    %v1685 = vunpack.c.l.b16 %v371
    %v1686 = vunpack.c.h.b16 %v371
    %v1687 = vunpack.c.l.b16 %v372
    %v1688 = vunpack.c.h.b16 %v372
    %v1689 = vunpack.c.l.b16 %v373
    %v1690 = vunpack.c.h.b16 %v373
    %v1691 = vunpack.c.l.b16 %v374
    %v1692 = vunpack.c.h.b16 %v374
    %v1693 = vunpack.c.l.b16 %v375
    %v1694 = vunpack.c.h.b16 %v375
    %v1695 = vunpack.c.l.b16 %v376
    %v1696 = vunpack.c.h.b16 %v376
    %v1697 = vunpack.c.l.b16 %v377
    %v1698 = vunpack.c.h.b16 %v377
    %v1699 = vunpack.c.l.b16 %v378
    %v1700 = vunpack.c.h.b16 %v378
    %v1701 = vunpack.c.l.b16 %v379
    %v1702 = vunpack.c.h.b16 %v379
    %v1703 = vunpack.c.l.b16 %v380
    %v1704 = vunpack.c.h.b16 %v380
    %v1705 = vunpack.c.l.b16 %v381
    %v1706 = vunpack.c.h.b16 %v381
    %v1707 = vunpack.c.l.b16 %v382
    %v1708 = vunpack.c.h.b16 %v382
    %v1709 = vunpack.c.l.b16 %v383
    %v1710 = vunpack.c.h.b16 %v383
    %v1711 = vunpack.c.l.b16 %v384
    %v1712 = vunpack.c.h.b16 %v384
    %v1713 = vunpack.c.l.b16 %v385
    %v1714 = vunpack.c.h.b16 %v385
    %v1715 = vunpack.c.l.b16 %v386
    %v1716 = vunpack.c.h.b16 %v386
    %v1717 = vunpack.c.l.b16 %v387
    %v1718 = vunpack.c.h.b16 %v387
    %v1719 = vunpack.c.l.b16 %v388
    %v1720 = vunpack.c.h.b16 %v388
    %v1721 = vunpack.c.l.b16 %v389
    %v1722 = vunpack.c.h.b16 %v389
    %v1723 = vunpack.c.l.b16 %v390
    %v1724 = vunpack.c.h.b16 %v390
    %v1725 = vunpack.c.l.b16 %v391
    %v1726 = vunpack.c.h.b16 %v391
    %v1727 = vunpack.c.l.b16 %v392
    %v1728 = vunpack.c.h.b16 %v392
    %v1729 = vunpack.c.l.b16 %v393
    %v1730 = vunpack.c.h.b16 %v393
    %v1731 = vunpack.c.l.b16 %v394
    %v1732 = vunpack.c.h.b16 %v394
    %v1733 = vunpack.c.l.b16 %v395
    %v1734 = vunpack.c.h.b16 %v395
    %v1735 = vunpack.c.l.b16 %v396
    %v1736 = vunpack.c.h.b16 %v396
    %v1737 = vunpack.c.l.b16 %v397
    %v1738 = vunpack.c.h.b16 %v397
    %v1739 = vunpack.c.l.b16 %v398
    %v1740 = vunpack.c.h.b16 %v398
    %v1741 = vunpack.c.l.b16 %v399
    %v1742 = vunpack.c.h.b16 %v399
    %v1743 = vunpack.c.l.b16 %v400
    %v1744 = vunpack.c.h.b16 %v400
    %v1745 = vunpack.c.l.b16 %v401
    %v1746 = vunpack.c.h.b16 %v401
    %v1747 = vunpack.c.l.b16 %v402
    %v1748 = vunpack.c.h.b16 %v402
    %v1749 = vunpack.c.l.b16 %v403
    %v1750 = vunpack.c.h.b16 %v403
    %v1751 = vunpack.c.l.b16 %v404
    %v1752 = vunpack.c.h.b16 %v404
    %v1753 = vunpack.c.l.b16 %v405
    %v1754 = vunpack.c.h.b16 %v405
    %v1755 = vunpack.c.l.b16 %v406
    %v1756 = vunpack.c.h.b16 %v406
    %v1757 = vunpack.c.l.b16 %v407
    %v1758 = vunpack.c.h.b16 %v407
    %v1759 = vunpack.c.l.b16 %v408
    %v1760 = vunpack.c.h.b16 %v408
    %v1761 = vunpack.c.l.b16 %v409
    %v1762 = vunpack.c.h.b16 %v409
    %v1763 = vunpack.c.l.b16 %v410
    %v1764 = vunpack.c.h.b16 %v410
    %v1765 = vunpack.c.l.b16 %v411
    %v1766 = vunpack.c.h.b16 %v411
    %v1767 = vunpack.c.l.b16 %v412
    %v1768 = vunpack.c.h.b16 %v412
    %v1769 = vunpack.c.l.b16 %v413
    %v1770 = vunpack.c.h.b16 %v413
    %v1771 = vunpack.c.l.b16 %v414
    %v1772 = vunpack.c.h.b16 %v414
    %v1773 = vunpack.c.l.b16 %v415
    %v1774 = vunpack.c.h.b16 %v415
    %v1775 = vunpack.c.l.b16 %v416
    %v1776 = vunpack.c.h.b16 %v416
    %v1777 = vunpack.c.l.b16 %v417
    %v1778 = vunpack.c.h.b16 %v417
    %v1779 = vunpack.c.l.b16 %v418
    %v1780 = vunpack.c.h.b16 %v418
    %v1781 = vunpack.c.l.b16 %v419
    %v1782 = vunpack.c.h.b16 %v419
    %v1783 = vunpack.c.l.b16 %v420
    %v1784 = vunpack.c.h.b16 %v420
    %v1785 = vunpack.c.l.b16 %v421
    %v1786 = vunpack.c.h.b16 %v421
    %v1787 = vunpack.c.l.b16 %v422
    %v1788 = vunpack.c.h.b16 %v422
    %v1789 = vunpack.c.l.b16 %v423
    %v1790 = vunpack.c.h.b16 %v423
    %v1791 = vunpack.c.l.b16 %v424
    %v1792 = vunpack.c.h.b16 %v424
    %v1793 = vunpack.c.l.b16 %v425
    %v1794 = vunpack.c.h.b16 %v425
    %v1795 = vunpack.c.l.b16 %v426
    %v1796 = vunpack.c.h.b16 %v426
    %v1797 = vunpack.c.l.b16 %v427
    %v1798 = vunpack.c.h.b16 %v427
    %v1799 = vunpack.c.l.b16 %v428
    %v1800 = vunpack.c.h.b16 %v428
    %v1801 = vunpack.c.l.b16 %v429
    %v1802 = vunpack.c.h.b16 %v429
    %v1803 = vunpack.c.l.b16 %v430
    %v1804 = vunpack.c.h.b16 %v430
    %v1805 = vunpack.c.l.b16 %v431
    %v1806 = vunpack.c.h.b16 %v431
    %v1807 = vunpack.c.l.b16 %v432
    %v1808 = vunpack.c.h.b16 %v432
    %v1809 = vunpack.c.l.b16 %v433
    %v1810 = vunpack.c.h.b16 %v433
    %v1811 = vunpack.c.l.b16 %v434
    %v1812 = vunpack.c.h.b16 %v434
    %v1813 = vunpack.c.l.b16 %v435
    %v1814 = vunpack.c.h.b16 %v435
    %v1815 = vunpack.c.l.b16 %v436
    %v1816 = vunpack.c.h.b16 %v436
    %v1817 = vunpack.c.l.b16 %v437
    %v1818 = vunpack.c.h.b16 %v437
    %v1819 = vunpack.c.l.b16 %v438
    %v1820 = vunpack.c.h.b16 %v438
    %v1821 = vunpack.c.l.b16 %v439
    %v1822 = vunpack.c.h.b16 %v439
    %v1823 = vunpack.c.l.b16 %v440
    %v1824 = vunpack.c.h.b16 %v440
    %v1825 = vunpack.c.l.b16 %v441
    %v1826 = vunpack.c.h.b16 %v441
    %v1827 = vunpack.c.l.b16 %v442
    %v1828 = vunpack.c.h.b16 %v442
    %v1829 = vunpack.c.l.b16 %v443
    %v1830 = vunpack.c.h.b16 %v443
    %v1831 = vunpack.c.l.b16 %v444
    %v1832 = vunpack.c.h.b16 %v444
    %v1833 = vunpack.c.l.b16 %v445
    %v1834 = vunpack.c.h.b16 %v445
    %v1835 = vunpack.c.l.b16 %v446
    %v1836 = vunpack.c.h.b16 %v446
    %v1837 = vunpack.c.l.b16 %v447
    %v1838 = vunpack.c.h.b16 %v447
    %v1839 = vunpack.c.l.b16 %v448
    %v1840 = vunpack.c.h.b16 %v448
    %v1841 = vunpack.c.l.b16 %v449
    %v1842 = vunpack.c.h.b16 %v449
    %v1843 = vunpack.c.l.b16 %v450
    %v1844 = vunpack.c.h.b16 %v450
    %v1845 = vunpack.c.l.b16 %v451
    %v1846 = vunpack.c.h.b16 %v451
    %v1847 = vunpack.c.l.b16 %v452
    %v1848 = vunpack.c.h.b16 %v452
    %v1849 = vunpack.c.l.b16 %v453
    %v1850 = vunpack.c.h.b16 %v453
    %v1851 = vunpack.c.l.b16 %v454
    %v1852 = vunpack.c.h.b16 %v454
    %v1853 = vunpack.c.l.b16 %v455
    %v1854 = vunpack.c.h.b16 %v455
    %v1855 = vunpack.c.l.b16 %v456
    %v1856 = vunpack.c.h.b16 %v456
    %v1857 = vunpack.c.l.b16 %v457
    %v1858 = vunpack.c.h.b16 %v457
    %v1859 = vunpack.c.l.b16 %v458
    %v1860 = vunpack.c.h.b16 %v458
    %v1861 = vunpack.c.l.b16 %v459
    %v1862 = vunpack.c.h.b16 %v459
    %v1863 = vunpack.c.l.b16 %v460
    %v1864 = vunpack.c.h.b16 %v460
    %v1865 = vunpack.c.l.b16 %v461
    %v1866 = vunpack.c.h.b16 %v461
    %v1867 = vunpack.c.l.b16 %v462
    %v1868 = vunpack.c.h.b16 %v462
    %v1869 = vunpack.c.l.b16 %v463
    %v1870 = vunpack.c.h.b16 %v463
    %v1871 = vunpack.c.l.b16 %v464
    %v1872 = vunpack.c.h.b16 %v464
    %v1873 = vunpack.c.l.b16 %v465
    %v1874 = vunpack.c.h.b16 %v465
    %v1875 = vunpack.c.l.b16 %v466
    %v1876 = vunpack.c.h.b16 %v466
    %v1877 = vunpack.c.l.b16 %v467
    %v1878 = vunpack.c.h.b16 %v467
    %v1879 = vunpack.c.l.b16 %v468
    %v1880 = vunpack.c.h.b16 %v468
    %v1881 = vunpack.c.l.b16 %v469
    %v1882 = vunpack.c.h.b16 %v469
    %v1883 = vunpack.c.l.b16 %v470
    %v1884 = vunpack.c.h.b16 %v470
    %v1885 = vunpack.c.l.b16 %v471
    %v1886 = vunpack.c.h.b16 %v471
    %v1887 = vunpack.c.l.b16 %v472
    %v1888 = vunpack.c.h.b16 %v472
    %v1889 = vunpack.c.l.b16 %v473
    %v1890 = vunpack.c.h.b16 %v473
    %v1891 = vunpack.c.l.b16 %v474
    %v1892 = vunpack.c.h.b16 %v474
    %v1893 = vunpack.c.l.b16 %v475
    %v1894 = vunpack.c.h.b16 %v475
    %v1895 = vunpack.c.l.b16 %v476
    %v1896 = vunpack.c.h.b16 %v476
    %v1897 = vunpack.c.l.b16 %v477
    %v1898 = vunpack.c.h.b16 %v477
    %v1899 = vunpack.c.l.b16 %v478
    %v1900 = vunpack.c.h.b16 %v478
    %v1901 = vunpack.c.l.b16 %v479
    %v1902 = vunpack.c.h.b16 %v479
    %v1903 = vunpack.c.l.b16 %v480
    %v1904 = vunpack.c.h.b16 %v480
    %v1905 = vunpack.c.l.b16 %v481
    %v1906 = vunpack.c.h.b16 %v481
    %v1907 = vunpack.c.l.b16 %v482
    %v1908 = vunpack.c.h.b16 %v482
    %v1909 = vunpack.c.l.b16 %v483
    %v1910 = vunpack.c.h.b16 %v483
    %v1911 = vunpack.c.l.b16 %v484
    %v1912 = vunpack.c.h.b16 %v484
    %v1913 = vunpack.c.l.b16 %v485
    %v1914 = vunpack.c.h.b16 %v485
    %v1915 = vunpack.c.l.b16 %v486
    %v1916 = vunpack.c.h.b16 %v486
    %v1917 = vunpack.c.l.b16 %v487
    %v1918 = vunpack.c.h.b16 %v487
    %v1919 = vunpack.c.l.b16 %v488
    %v1920 = vunpack.c.h.b16 %v488
    %v1921 = vunpack.c.l.b16 %v489
    %v1922 = vunpack.c.h.b16 %v489
    %v1923 = vunpack.c.l.b16 %v490
    %v1924 = vunpack.c.h.b16 %v490
    %v1925 = vunpack.c.l.b16 %v491
    %v1926 = vunpack.c.h.b16 %v491
    %v1927 = vunpack.c.l.b16 %v492
    %v1928 = vunpack.c.h.b16 %v492
    %v1929 = vunpack.c.l.b16 %v493
    %v1930 = vunpack.c.h.b16 %v493
    %v1931 = vunpack.c.l.b16 %v494
    %v1932 = vunpack.c.h.b16 %v494
    %v1933 = vunpack.c.l.b16 %v495
    %v1934 = vunpack.c.h.b16 %v495
    %v1935 = vunpack.c.l.b16 %v496
    %v1936 = vunpack.c.h.b16 %v496
    %v1937 = vunpack.c.l.b16 %v497
    %v1938 = vunpack.c.h.b16 %v497
    %v1939 = vunpack.c.l.b16 %v498
    %v1940 = vunpack.c.h.b16 %v498
    %v1941 = vunpack.c.l.b16 %v499
    %v1942 = vunpack.c.h.b16 %v499
    %v1943 = vunpack.c.l.b16 %v500
    %v1944 = vunpack.c.h.b16 %v500
    %v1945 = vunpack.c.l.b16 %v501
    %v1946 = vunpack.c.h.b16 %v501
    %v1947 = vunpack.c.l.b16 %v502
    %v1948 = vunpack.c.h.b16 %v502
    %v1949 = vunpack.c.l.b16 %v503
    %v1950 = vunpack.c.h.b16 %v503
    %v1951 = vunpack.c.l.b16 %v504
    %v1952 = vunpack.c.h.b16 %v504
    %v1953 = vunpack.c.l.b16 %v505
    %v1954 = vunpack.c.h.b16 %v505
    %v1955 = vunpack.c.l.b16 %v506
    %v1956 = vunpack.c.h.b16 %v506
    %v1957 = vunpack.c.l.b16 %v507
    %v1958 = vunpack.c.h.b16 %v507
    %v1959 = vunpack.c.l.b16 %v508
    %v1960 = vunpack.c.h.b16 %v508
    %v1961 = vunpack.c.l.b16 %v509
    %v1962 = vunpack.c.h.b16 %v509
    %v1963 = vunpack.c.l.b16 %v510
    %v1964 = vunpack.c.h.b16 %v510
    %v1965 = vunpack.c.l.b16 %v511
    %v1966 = vunpack.c.h.b16 %v511
    %v1967 = vunpack.c.l.b16 %v512
    %v1968 = vunpack.c.h.b16 %v512
    %v1969 = vunpack.c.l.b16 %v513
    %v1970 = vunpack.c.h.b16 %v513
    %v1971 = vunpack.c.l.b16 %v514
    %v1972 = vunpack.c.h.b16 %v514
    %v1973 = vunpack.c.l.b16 %v515
    %v1974 = vunpack.c.h.b16 %v515
    %v1975 = vunpack.c.l.b16 %v516
    %v1976 = vunpack.c.h.b16 %v516
    %v1977 = vunpack.c.l.b16 %v517
    %v1978 = vunpack.c.h.b16 %v517
    %v1979 = vunpack.c.l.b16 %v518
    %v1980 = vunpack.c.h.b16 %v518
    %v1981 = vunpack.c.l.b16 %v519
    %v1982 = vunpack.c.h.b16 %v519
    %v1983 = vunpack.c.l.b16 %v520
    %v1984 = vunpack.c.h.b16 %v520
    %v1985 = vunpack.c.l.b16 %v521
    %v1986 = vunpack.c.h.b16 %v521
    %v1987 = vunpack.c.l.b16 %v522
    %v1988 = vunpack.c.h.b16 %v522
    %v1989 = vunpack.c.l.b16 %v523
    %v1990 = vunpack.c.h.b16 %v523
    %v1991 = vunpack.c.l.b16 %v524
    %v1992 = vunpack.c.h.b16 %v524
    %v1993 = vunpack.c.l.b16 %v525
    %v1994 = vunpack.c.h.b16 %v525
    %v1995 = vunpack.c.l.b16 %v526
    %v1996 = vunpack.c.h.b16 %v526
    %v1997 = vunpack.c.l.b16 %v527
    %v1998 = vunpack.c.h.b16 %v527
    %v1999 = vunpack.c.l.b16 %v528
    %v2000 = vunpack.c.h.b16 %v528
    %v2001 = vunpack.c.l.b16 %v529
    %v2002 = vunpack.c.h.b16 %v529
    %v2003 = vunpack.c.l.b16 %v530
    %v2004 = vunpack.c.h.b16 %v530
    %v2005 = vunpack.c.l.b16 %v531
    %v2006 = vunpack.c.h.b16 %v531
    %v2007 = vunpack.c.l.b16 %v532
    %v2008 = vunpack.c.h.b16 %v532
    %v2009 = vunpack.c.l.b16 %v533
    %v2010 = vunpack.c.h.b16 %v533
    %v2011 = vunpack.c.l.b16 %v534
    %v2012 = vunpack.c.h.b16 %v534
    %v2013 = vunpack.c.l.b16 %v535
    %v2014 = vunpack.c.h.b16 %v535
    %v2015 = vunpack.c.l.b16 %v536
    %v2016 = vunpack.c.h.b16 %v536
    %v2017 = vunpack.c.l.b16 %v537
    %v2018 = vunpack.c.h.b16 %v537
    %v2019 = vunpack.c.l.b16 %v538
    %v2020 = vunpack.c.h.b16 %v538
    %v2021 = vunpack.c.l.b16 %v539
    %v2022 = vunpack.c.h.b16 %v539
    %v2023 = vunpack.c.l.b16 %v540
    %v2024 = vunpack.c.h.b16 %v540
    %v2025 = vunpack.c.l.b16 %v541
    %v2026 = vunpack.c.h.b16 %v541
    %v2027 = vunpack.c.l.b16 %v542
    %v2028 = vunpack.c.h.b16 %v542
    %v2029 = vunpack.c.l.b16 %v543
    %v2030 = vunpack.c.h.b16 %v543
    %v2031 = vunpack.c.l.b16 %v544
    %v2032 = vunpack.c.h.b16 %v544
    %v2033 = vunpack.c.l.b16 %v545
    %v2034 = vunpack.c.h.b16 %v545
    %v2035 = vunpack.c.l.b16 %v546
    %v2036 = vunpack.c.h.b16 %v546
    %v2037 = vunpack.c.l.b16 %v547
    %v2038 = vunpack.c.h.b16 %v547
    %v2039 = vunpack.c.l.b16 %v548
    %v2040 = vunpack.c.h.b16 %v548
    %v2041 = vunpack.c.l.b16 %v549
    %v2042 = vunpack.c.h.b16 %v549
    %v2043 = vunpack.c.l.b16 %v550
    %v2044 = vunpack.c.h.b16 %v550
    %v2045 = vunpack.c.l.b16 %v551
    %v2046 = vunpack.c.h.b16 %v551
    %v2047 = vunpack.c.l.b16 %v552
    %v2048 = vunpack.c.h.b16 %v552
    %v2049 = vunpack.c.l.b16 %v553
    %v2050 = vunpack.c.h.b16 %v553
    %v2051 = vunpack.c.l.b16 %v554
    %v2052 = vunpack.c.h.b16 %v554
    %v2053 = vunpack.c.l.b16 %v555
    %v2054 = vunpack.c.h.b16 %v555
    %v2055 = vunpack.c.l.b16 %v556
    %v2056 = vunpack.c.h.b16 %v556
    %v2057 = vunpack.c.l.b16 %v557
    %v2058 = vunpack.c.h.b16 %v557
    %v2059 = vunpack.c.l.b16 %v558
    %v2060 = vunpack.c.h.b16 %v558
    %v2061 = vunpack.c.l.b16 %v559
    %v2062 = vunpack.c.h.b16 %v559
    %v2063 = vunpack.c.l.b16 %v560
    %v2064 = vunpack.c.h.b16 %v560
    %v2065 = vunpack.c.l.b16 %v561
    %v2066 = vunpack.c.h.b16 %v561
    %v2067 = vunpack.c.l.b16 %v562
    %v2068 = vunpack.c.h.b16 %v562
    %v2069 = vunpack.c.l.b16 %v563
    %v2070 = vunpack.c.h.b16 %v563
    %v2071 = vunpack.c.l.b16 %v564
    %v2072 = vunpack.c.h.b16 %v564
    %v2073 = vunpack.c.l.b16 %v565
    %v2074 = vunpack.c.h.b16 %v565
    %v2075 = vunpack.c.l.b16 %v566
    %v2076 = vunpack.c.h.b16 %v566
    %v2077 = vunpack.c.l.b16 %v567
    %v2078 = vunpack.c.h.b16 %v567
    %v2079 = vunpack.c.l.b16 %v568
    %v2080 = vunpack.c.h.b16 %v568
    %v2081 = vunpack.c.l.b16 %v569
    %v2082 = vunpack.c.h.b16 %v569
    %v2083 = vunpack.c.l.b16 %v570
    %v2084 = vunpack.c.h.b16 %v570
    %v2085 = vunpack.c.l.b16 %v571
    %v2086 = vunpack.c.h.b16 %v571
    %v2087 = vunpack.c.l.b16 %v572
    %v2088 = vunpack.c.h.b16 %v572
    %v2089 = vunpack.c.l.b16 %v573
    %v2090 = vunpack.c.h.b16 %v573
    %v2091 = vunpack.c.l.b16 %v574
    %v2092 = vunpack.c.h.b16 %v574
    %v2093 = vunpack.c.l.b16 %v575
    %v2094 = vunpack.c.h.b16 %v575
    %v2095 = vunpack.c.l.b16 %v576
    %v2096 = vunpack.c.h.b16 %v576
    %v2097 = vunpack.c.l.b16 %v577
    %v2098 = vunpack.c.h.b16 %v577
    %v2099 = vunpack.c.l.b16 %v578
    %v2100 = vunpack.c.h.b16 %v578
    %v2101 = vunpack.c.l.b16 %v579
    %v2102 = vunpack.c.h.b16 %v579
    %v2103 = vunpack.c.l.b16 %v580
    %v2104 = vunpack.c.h.b16 %v580
    %v2105 = vunpack.c.l.b16 %v581
    %v2106 = vunpack.c.h.b16 %v581
    %v2107 = vunpack.c.l.b16 %v582
    %v2108 = vunpack.c.h.b16 %v582
    %v2109 = vunpack.c.l.b16 %v583
    %v2110 = vunpack.c.h.b16 %v583
    %v2111 = vunpack.c.l.b16 %v584
    %v2112 = vunpack.c.h.b16 %v584
    %v2113 = vunpack.c.l.b16 %v585
    %v2114 = vunpack.c.h.b16 %v585
    %v2115 = vunpack.c.l.b16 %v586
    %v2116 = vunpack.c.h.b16 %v586
    %v2117 = vunpack.c.l.b16 %v587
    %v2118 = vunpack.c.h.b16 %v587
    %v2119 = vunpack.c.l.b16 %v588
    %v2120 = vunpack.c.h.b16 %v588
    %v2121 = vunpack.c.l.b16 %v589
    %v2122 = vunpack.c.h.b16 %v589
    %v2123 = vunpack.c.l.b16 %v590
    %v2124 = vunpack.c.h.b16 %v590
    %v2125 = vunpack.c.l.b16 %v591
    %v2126 = vunpack.c.h.b16 %v591
    %v2127 = vunpack.c.l.b16 %v592
    %v2128 = vunpack.c.h.b16 %v592
    %v2129 = vunpack.c.l.b16 %v593
    %v2130 = vunpack.c.h.b16 %v593
    %v2131 = vunpack.c.l.b16 %v594
    %v2132 = vunpack.c.h.b16 %v594
    %v2133 = vunpack.c.l.b16 %v595
    %v2134 = vunpack.c.h.b16 %v595
    %v2135 = vunpack.c.l.b16 %v596
    %v2136 = vunpack.c.h.b16 %v596
    %v2137 = vunpack.c.l.b16 %v597
    %v2138 = vunpack.c.h.b16 %v597
    %v2139 = vunpack.c.l.b16 %v598
    %v2140 = vunpack.c.h.b16 %v598
    %v2141 = vunpack.c.l.b16 %v599
    %v2142 = vunpack.c.h.b16 %v599
    %v2143 = vunpack.c.l.b16 %v600
    %v2144 = vunpack.c.h.b16 %v600
    %v2145 = vunpack.c.l.b16 %v601
    %v2146 = vunpack.c.h.b16 %v601
    %v2147 = vunpack.c.l.b16 %v602
    %v2148 = vunpack.c.h.b16 %v602
    %v2149 = vunpack.c.l.b16 %v603
    %v2150 = vunpack.c.h.b16 %v603
    %v2151 = vunpack.c.l.b16 %v604
    %v2152 = vunpack.c.h.b16 %v604
    %v2153 = vunpack.c.l.b16 %v605
    %v2154 = vunpack.c.h.b16 %v605
    %v2155 = vunpack.c.l.b16 %v606
    %v2156 = vunpack.c.h.b16 %v606
    %v2157 = vunpack.c.l.b16 %v607
    %v2158 = vunpack.c.h.b16 %v607
    %v2159 = vunpack.c.l.b16 %v608
    %v2160 = vunpack.c.h.b16 %v608
    %v2161 = vunpack.c.l.b16 %v609
    %v2162 = vunpack.c.h.b16 %v609
    %v2163 = vunpack.c.l.b16 %v610
    %v2164 = vunpack.c.h.b16 %v610
    %v2165 = vunpack.c.l.b16 %v611
    %v2166 = vunpack.c.h.b16 %v611
    %v2167 = vunpack.c.l.b16 %v612
    %v2168 = vunpack.c.h.b16 %v612
    %v2169 = vunpack.c.l.b16 %v613
    %v2170 = vunpack.c.h.b16 %v613
    %v2171 = vunpack.c.l.b16 %v614
    %v2172 = vunpack.c.h.b16 %v614
    %v2173 = vunpack.c.l.b16 %v615
    %v2174 = vunpack.c.h.b16 %v615
    %v2175 = vunpack.c.l.b16 %v616
    %v2176 = vunpack.c.h.b16 %v616
    %v2177 = vunpack.c.l.b16 %v617
    %v2178 = vunpack.c.h.b16 %v617
    %v2179 = vunpack.c.l.b16 %v618
    %v2180 = vunpack.c.h.b16 %v618
    %v2181 = vunpack.c.l.b16 %v619
    %v2182 = vunpack.c.h.b16 %v619
    %v2183 = vunpack.c.l.b16 %v620
    %v2184 = vunpack.c.h.b16 %v620
    %v2185 = vunpack.c.l.b16 %v621
    %v2186 = vunpack.c.h.b16 %v621
    %v2187 = vunpack.c.l.b16 %v622
    %v2188 = vunpack.c.h.b16 %v622
    %v2189 = vunpack.c.l.b16 %v623
    %v2190 = vunpack.c.h.b16 %v623
    %v2191 = vunpack.c.l.b16 %v624
    %v2192 = vunpack.c.h.b16 %v624
    %v2193 = vunpack.c.l.b16 %v625
    %v2194 = vunpack.c.h.b16 %v625
    %v2195 = vunpack.c.l.b16 %v626
    %v2196 = vunpack.c.h.b16 %v626
    %v2197 = vunpack.c.l.b16 %v627
    %v2198 = vunpack.c.h.b16 %v627
    %v2199 = vunpack.c.l.b16 %v628
    %v2200 = vunpack.c.h.b16 %v628
    %v2201 = vunpack.c.l.b16 %v629
    %v2202 = vunpack.c.h.b16 %v629
    %v2203 = vunpack.c.l.b16 %v630
    %v2204 = vunpack.c.h.b16 %v630
    %v2205 = vunpack.c.l.b16 %v631
    %v2206 = vunpack.c.h.b16 %v631
    %v2207 = vunpack.c.l.b16 %v632
    %v2208 = vunpack.c.h.b16 %v632
    %v2209 = vunpack.c.l.b16 %v633
    %v2210 = vunpack.c.h.b16 %v633
    %v2211 = vunpack.c.l.b16 %v634
    %v2212 = vunpack.c.h.b16 %v634
    %v2213 = vunpack.c.l.b16 %v635
    %v2214 = vunpack.c.h.b16 %v635
    %v2215 = vunpack.c.l.b16 %v636
    %v2216 = vunpack.c.h.b16 %v636
    %v2217 = vunpack.c.l.b16 %v637
    %v2218 = vunpack.c.h.b16 %v637
    %v2219 = vunpack.c.l.b16 %v638
    %v2220 = vunpack.c.h.b16 %v638
    %v2221 = vunpack.c.l.b16 %v639
    %v2222 = vunpack.c.h.b16 %v639
    %v2223 = vunpack.c.l.b16 %v640
    %v2224 = vunpack.c.h.b16 %v640
    %v2225 = vunpack.c.l.b16 %v641
    %v2226 = vunpack.c.h.b16 %v641
    %v2227 = vunpack.c.l.b16 %v642
    %v2228 = vunpack.c.h.b16 %v642
    %v2229 = vunpack.c.l.b16 %v643
    %v2230 = vunpack.c.h.b16 %v643
    %v2231 = vunpack.c.l.b16 %v644
    %v2232 = vunpack.c.h.b16 %v644
    %v2233 = vunpack.c.l.b16 %v645
    %v2234 = vunpack.c.h.b16 %v645
    %v2235 = vunpack.c.l.b16 %v646
    %v2236 = vunpack.c.h.b16 %v646
    %v2237 = vunpack.c.l.b16 %v647
    %v2238 = vunpack.c.h.b16 %v647
    %v2239 = vunpack.c.l.b16 %v648
    %v2240 = vunpack.c.h.b16 %v648
    %v2241 = vunpack.c.l.b16 %v649
    %v2242 = vunpack.c.h.b16 %v649
    %v2243 = vunpack.c.l.b16 %v650
    %v2244 = vunpack.c.h.b16 %v650
    %v2245 = vunpack.c.l.b16 %v651
    %v2246 = vunpack.c.h.b16 %v651
    %v2247 = vunpack.c.l.b16 %v652
    %v2248 = vunpack.c.h.b16 %v652
    %v2249 = vunpack.c.l.b16 %v653
    %v2250 = vunpack.c.h.b16 %v653
    %v2251 = vunpack.c.l.b16 %v654
    %v2252 = vunpack.c.h.b16 %v654
    %v2253 = vunpack.c.l.b16 %v655
    %v2254 = vunpack.c.h.b16 %v655
    %v2255 = vunpack.c.l.b16 %v656
    %v2256 = vunpack.c.h.b16 %v656
    %v2257 = vunpack.c.l.b16 %v657
    %v2258 = vunpack.c.h.b16 %v657
    %v2259 = vunpack.c.l.b16 %v658
    %v2260 = vunpack.c.h.b16 %v658
    %v2261 = vunpack.c.l.b16 %v659
    %v2262 = vunpack.c.h.b16 %v659
    %v2263 = vunpack.c.l.b16 %v660
    %v2264 = vunpack.c.h.b16 %v660
    %v2265 = vunpack.c.l.b16 %v661
    %v2266 = vunpack.c.h.b16 %v661
    %v2267 = vunpack.c.l.b16 %v662
    %v2268 = vunpack.c.h.b16 %v662
    %v2269 = vunpack.c.l.b16 %v663
    %v2270 = vunpack.c.h.b16 %v663
    %v2271 = vunpack.c.l.b16 %v664
    %v2272 = vunpack.c.h.b16 %v664
    %v2273 = vpack.c.b16 %v1253, %v1249
    %v2274 = vpack.c.b16 %v1254, %v1250
    %v2275 = vpack.c.b16 %v1255, %v1251
    %v2276 = vpack.c.b16 %v1256, %v1252
    %v2277 = vpack.c.b16 %v1261, %v1257
    %v2278 = vpack.c.b16 %v1262, %v1258
    %v2279 = vpack.c.b16 %v1263, %v1259
    %v2280 = vpack.c.b16 %v1264, %v1260
    %v2281 = vpack.c.b16 %v1269, %v1265
    %v2282 = vpack.c.b16 %v1270, %v1266
    %v2283 = vpack.c.b16 %v1271, %v1267
    %v2284 = vpack.c.b16 %v1272, %v1268
    %v2285 = vpack.c.b16 %v1277, %v1273
    %v2286 = vpack.c.b16 %v1278, %v1274
    %v2287 = vpack.c.b16 %v1279, %v1275
    %v2288 = vpack.c.b16 %v1280, %v1276
    %v2289 = vpack.c.b16 %v1285, %v1281
    %v2290 = vpack.c.b16 %v1286, %v1282
    %v2291 = vpack.c.b16 %v1287, %v1283
    %v2292 = vpack.c.b16 %v1288, %v1284
    %v2293 = vpack.c.b16 %v1293, %v1289
    %v2294 = vpack.c.b16 %v1294, %v1290
    %v2295 = vpack.c.b16 %v1295, %v1291
    %v2296 = vpack.c.b16 %v1296, %v1292
    %v2297 = vpack.c.b16 %v1301, %v1297
    %v2298 = vpack.c.b16 %v1302, %v1298
    %v2299 = vpack.c.b16 %v1303, %v1299
    %v2300 = vpack.c.b16 %v1304, %v1300
    %v2301 = vpack.c.b16 %v1309, %v1305
    %v2302 = vpack.c.b16 %v1310, %v1306
    %v2303 = vpack.c.b16 %v1311, %v1307
    %v2304 = vpack.c.b16 %v1312, %v1308
    %v2305 = vpack.c.b16 %v1317, %v1313
    %v2306 = vpack.c.b16 %v1318, %v1314
    %v2307 = vpack.c.b16 %v1319, %v1315
    %v2308 = vpack.c.b16 %v1320, %v1316
    %v2309 = vpack.c.b16 %v1325, %v1321
    %v2310 = vpack.c.b16 %v1326, %v1322
    %v2311 = vpack.c.b16 %v1327, %v1323
    %v2312 = vpack.c.b16 %v1328, %v1324
    %v2313 = vpack.c.b16 %v1333, %v1329
    %v2314 = vpack.c.b16 %v1334, %v1330
    %v2315 = vpack.c.b16 %v1335, %v1331
    %v2316 = vpack.c.b16 %v1336, %v1332
    %v2317 = vpack.c.b16 %v1341, %v1337
    %v2318 = vpack.c.b16 %v1342, %v1338
    %v2319 = vpack.c.b16 %v1343, %v1339
    %v2320 = vpack.c.b16 %v1344, %v1340
    %v2321 = vpack.c.b16 %v1349, %v1345
    %v2322 = vpack.c.b16 %v1350, %v1346
    %v2323 = vpack.c.b16 %v1351, %v1347
    %v2324 = vpack.c.b16 %v1352, %v1348
    %v2325 = vpack.c.b16 %v1357, %v1353
    %v2326 = vpack.c.b16 %v1358, %v1354
    %v2327 = vpack.c.b16 %v1359, %v1355
    %v2328 = vpack.c.b16 %v1360, %v1356
    %v2329 = vpack.c.b16 %v1365, %v1361
    %v2330 = vpack.c.b16 %v1366, %v1362
    %v2331 = vpack.c.b16 %v1367, %v1363
    %v2332 = vpack.c.b16 %v1368, %v1364
    %v2333 = vpack.c.b16 %v1373, %v1369
    %v2334 = vpack.c.b16 %v1374, %v1370
    %v2335 = vpack.c.b16 %v1375, %v1371
    %v2336 = vpack.c.b16 %v1376, %v1372
    %v2337 = vpack.c.b16 %v1381, %v1377
    %v2338 = vpack.c.b16 %v1382, %v1378
    %v2339 = vpack.c.b16 %v1383, %v1379
    %v2340 = vpack.c.b16 %v1384, %v1380
    %v2341 = vpack.c.b16 %v1389, %v1385
    %v2342 = vpack.c.b16 %v1390, %v1386
    %v2343 = vpack.c.b16 %v1391, %v1387
    %v2344 = vpack.c.b16 %v1392, %v1388
    %v2345 = vpack.c.b16 %v1397, %v1393
    %v2346 = vpack.c.b16 %v1398, %v1394
    %v2347 = vpack.c.b16 %v1399, %v1395
    %v2348 = vpack.c.b16 %v1400, %v1396
    %v2349 = vpack.c.b16 %v1405, %v1401
    %v2350 = vpack.c.b16 %v1406, %v1402
    %v2351 = vpack.c.b16 %v1407, %v1403
    %v2352 = vpack.c.b16 %v1408, %v1404
    %v2353 = vpack.c.b16 %v1413, %v1409
    %v2354 = vpack.c.b16 %v1414, %v1410
    %v2355 = vpack.c.b16 %v1415, %v1411
    %v2356 = vpack.c.b16 %v1416, %v1412
    %v2357 = vpack.c.b16 %v1421, %v1417
    %v2358 = vpack.c.b16 %v1422, %v1418
    %v2359 = vpack.c.b16 %v1423, %v1419
    %v2360 = vpack.c.b16 %v1424, %v1420
    %v2361 = vpack.c.b16 %v1429, %v1425
    %v2362 = vpack.c.b16 %v1430, %v1426
    %v2363 = vpack.c.b16 %v1431, %v1427
    %v2364 = vpack.c.b16 %v1432, %v1428
    %v2365 = vpack.c.b16 %v1437, %v1433
    %v2366 = vpack.c.b16 %v1438, %v1434
    %v2367 = vpack.c.b16 %v1439, %v1435
    %v2368 = vpack.c.b16 %v1440, %v1436
    %v2369 = vpack.c.b16 %v1445, %v1441
    %v2370 = vpack.c.b16 %v1446, %v1442
    %v2371 = vpack.c.b16 %v1447, %v1443
    %v2372 = vpack.c.b16 %v1448, %v1444
    %v2373 = vpack.c.b16 %v1453, %v1449
    %v2374 = vpack.c.b16 %v1454, %v1450
    %v2375 = vpack.c.b16 %v1455, %v1451
    %v2376 = vpack.c.b16 %v1456, %v1452
    %v2377 = vpack.c.b16 %v1461, %v1457
    %v2378 = vpack.c.b16 %v1462, %v1458
    %v2379 = vpack.c.b16 %v1463, %v1459
    %v2380 = vpack.c.b16 %v1464, %v1460
    %v2381 = vpack.c.b16 %v1469, %v1465
    %v2382 = vpack.c.b16 %v1470, %v1466
    %v2383 = vpack.c.b16 %v1471, %v1467
    %v2384 = vpack.c.b16 %v1472, %v1468
    %v2385 = vpack.c.b16 %v1477, %v1473
    %v2386 = vpack.c.b16 %v1478, %v1474
    %v2387 = vpack.c.b16 %v1479, %v1475
    %v2388 = vpack.c.b16 %v1480, %v1476
    %v2389 = vpack.c.b16 %v1485, %v1481
    %v2390 = vpack.c.b16 %v1486, %v1482
    %v2391 = vpack.c.b16 %v1487, %v1483
    %v2392 = vpack.c.b16 %v1488, %v1484
    %v2393 = vpack.c.b16 %v1493, %v1489
    %v2394 = vpack.c.b16 %v1494, %v1490
    %v2395 = vpack.c.b16 %v1495, %v1491
    %v2396 = vpack.c.b16 %v1496, %v1492
    %v2397 = vpack.c.b16 %v1501, %v1497
    %v2398 = vpack.c.b16 %v1502, %v1498
    %v2399 = vpack.c.b16 %v1503, %v1499
    %v2400 = vpack.c.b16 %v1504, %v1500
    %v2401 = vpack.c.b16 %v1509, %v1505
    %v2402 = vpack.c.b16 %v1510, %v1506
    %v2403 = vpack.c.b16 %v1511, %v1507
    %v2404 = vpack.c.b16 %v1512, %v1508
    %v2405 = vpack.c.b16 %v1517, %v1513
    %v2406 = vpack.c.b16 %v1518, %v1514
    %v2407 = vpack.c.b16 %v1519, %v1515
    %v2408 = vpack.c.b16 %v1520, %v1516
    %v2409 = vpack.c.b16 %v1525, %v1521
    %v2410 = vpack.c.b16 %v1526, %v1522
    %v2411 = vpack.c.b16 %v1527, %v1523
    %v2412 = vpack.c.b16 %v1528, %v1524
    %v2413 = vpack.c.b16 %v1533, %v1529
    %v2414 = vpack.c.b16 %v1534, %v1530
    %v2415 = vpack.c.b16 %v1535, %v1531
    %v2416 = vpack.c.b16 %v1536, %v1532
    %v2417 = vpack.c.b16 %v1541, %v1537
    %v2418 = vpack.c.b16 %v1542, %v1538
    %v2419 = vpack.c.b16 %v1543, %v1539
    %v2420 = vpack.c.b16 %v1544, %v1540
    %v2421 = vpack.c.b16 %v1549, %v1545
    %v2422 = vpack.c.b16 %v1550, %v1546
    %v2423 = vpack.c.b16 %v1551, %v1547
    %v2424 = vpack.c.b16 %v1552, %v1548
    %v2425 = vpack.c.b16 %v1557, %v1553
    %v2426 = vpack.c.b16 %v1558, %v1554
    %v2427 = vpack.c.b16 %v1559, %v1555
    %v2428 = vpack.c.b16 %v1560, %v1556
    %v2429 = vpack.c.b16 %v1565, %v1561
    %v2430 = vpack.c.b16 %v1566, %v1562
    %v2431 = vpack.c.b16 %v1567, %v1563
    %v2432 = vpack.c.b16 %v1568, %v1564
    %v2433 = vpack.c.b16 %v1573, %v1569
    %v2434 = vpack.c.b16 %v1574, %v1570
    %v2435 = vpack.c.b16 %v1575, %v1571
    %v2436 = vpack.c.b16 %v1576, %v1572
    %v2437 = vpack.c.b16 %v1581, %v1577
    %v2438 = vpack.c.b16 %v1582, %v1578
    %v2439 = vpack.c.b16 %v1583, %v1579
    %v2440 = vpack.c.b16 %v1584, %v1580
    %v2441 = vpack.c.b16 %v1589, %v1585
    %v2442 = vpack.c.b16 %v1590, %v1586
    %v2443 = vpack.c.b16 %v1591, %v1587
    %v2444 = vpack.c.b16 %v1592, %v1588
    %v2445 = vpack.c.b16 %v1597, %v1593
    %v2446 = vpack.c.b16 %v1598, %v1594
    %v2447 = vpack.c.b16 %v1599, %v1595
    %v2448 = vpack.c.b16 %v1600, %v1596
    %v2449 = vpack.c.b16 %v1605, %v1601
    %v2450 = vpack.c.b16 %v1606, %v1602
    %v2451 = vpack.c.b16 %v1607, %v1603
    %v2452 = vpack.c.b16 %v1608, %v1604
    %v2453 = vpack.c.b16 %v1613, %v1609
    %v2454 = vpack.c.b16 %v1614, %v1610
    %v2455 = vpack.c.b16 %v1615, %v1611
    %v2456 = vpack.c.b16 %v1616, %v1612
    %v2457 = vpack.c.b16 %v1621, %v1617
    %v2458 = vpack.c.b16 %v1622, %v1618
    %v2459 = vpack.c.b16 %v1623, %v1619
    %v2460 = vpack.c.b16 %v1624, %v1620
    %v2461 = vpack.c.b16 %v1629, %v1625
    %v2462 = vpack.c.b16 %v1630, %v1626
    %v2463 = vpack.c.b16 %v1631, %v1627
    %v2464 = vpack.c.b16 %v1632, %v1628
    %v2465 = vpack.c.b16 %v1637, %v1633
    %v2466 = vpack.c.b16 %v1638, %v1634
    %v2467 = vpack.c.b16 %v1639, %v1635
    %v2468 = vpack.c.b16 %v1640, %v1636
    %v2469 = vpack.c.b16 %v1645, %v1641
    %v2470 = vpack.c.b16 %v1646, %v1642
    %v2471 = vpack.c.b16 %v1647, %v1643
    %v2472 = vpack.c.b16 %v1648, %v1644
    %v2473 = vpack.c.b16 %v1653, %v1649
    %v2474 = vpack.c.b16 %v1654, %v1650
    %v2475 = vpack.c.b16 %v1655, %v1651
    %v2476 = vpack.c.b16 %v1656, %v1652
    %v2477 = vpack.c.b16 %v1661, %v1657
    %v2478 = vpack.c.b16 %v1662, %v1658
    %v2479 = vpack.c.b16 %v1663, %v1659
    %v2480 = vpack.c.b16 %v1664, %v1660
    %v2481 = vpack.c.b16 %v1669, %v1665
    %v2482 = vpack.c.b16 %v1670, %v1666
    %v2483 = vpack.c.b16 %v1671, %v1667
    %v2484 = vpack.c.b16 %v1672, %v1668
    %v2485 = vpack.c.b16 %v1677, %v1673
    %v2486 = vpack.c.b16 %v1678, %v1674
    %v2487 = vpack.c.b16 %v1679, %v1675
    %v2488 = vpack.c.b16 %v1680, %v1676
    %v2489 = vpack.c.b16 %v1685, %v1681
    %v2490 = vpack.c.b16 %v1686, %v1682
    %v2491 = vpack.c.b16 %v1687, %v1683
    %v2492 = vpack.c.b16 %v1688, %v1684
    %v2493 = vpack.c.b16 %v1693, %v1689
    %v2494 = vpack.c.b16 %v1694, %v1690
    %v2495 = vpack.c.b16 %v1695, %v1691
    %v2496 = vpack.c.b16 %v1696, %v1692
    %v2497 = vpack.c.b16 %v1701, %v1697
    %v2498 = vpack.c.b16 %v1702, %v1698
    %v2499 = vpack.c.b16 %v1703, %v1699
    %v2500 = vpack.c.b16 %v1704, %v1700
    %v2501 = vpack.c.b16 %v1709, %v1705
    %v2502 = vpack.c.b16 %v1710, %v1706
    %v2503 = vpack.c.b16 %v1711, %v1707
    %v2504 = vpack.c.b16 %v1712, %v1708
    %v2505 = vpack.c.b16 %v1717, %v1713
    %v2506 = vpack.c.b16 %v1718, %v1714
    %v2507 = vpack.c.b16 %v1719, %v1715
    %v2508 = vpack.c.b16 %v1720, %v1716
    %v2509 = vpack.c.b16 %v1725, %v1721
    %v2510 = vpack.c.b16 %v1726, %v1722
    %v2511 = vpack.c.b16 %v1727, %v1723
    %v2512 = vpack.c.b16 %v1728, %v1724
    %v2513 = vpack.c.b16 %v1733, %v1729
    %v2514 = vpack.c.b16 %v1734, %v1730
    %v2515 = vpack.c.b16 %v1735, %v1731
    %v2516 = vpack.c.b16 %v1736, %v1732
    %v2517 = vpack.c.b16 %v1741, %v1737
    %v2518 = vpack.c.b16 %v1742, %v1738
    %v2519 = vpack.c.b16 %v1743, %v1739
    %v2520 = vpack.c.b16 %v1744, %v1740
    %v2521 = vpack.c.b16 %v1749, %v1745
    %v2522 = vpack.c.b16 %v1750, %v1746
    %v2523 = vpack.c.b16 %v1751, %v1747
    %v2524 = vpack.c.b16 %v1752, %v1748
    %v2525 = vpack.c.b16 %v1757, %v1753
    %v2526 = vpack.c.b16 %v1758, %v1754
    %v2527 = vpack.c.b16 %v1759, %v1755
    %v2528 = vpack.c.b16 %v1760, %v1756
    %v2529 = vpack.c.b16 %v1765, %v1761
    %v2530 = vpack.c.b16 %v1766, %v1762
    %v2531 = vpack.c.b16 %v1767, %v1763
    %v2532 = vpack.c.b16 %v1768, %v1764
    %v2533 = vpack.c.b16 %v1773, %v1769
    %v2534 = vpack.c.b16 %v1774, %v1770
    %v2535 = vpack.c.b16 %v1775, %v1771
    %v2536 = vpack.c.b16 %v1776, %v1772
    %v2537 = vpack.c.b16 %v1781, %v1777
    %v2538 = vpack.c.b16 %v1782, %v1778
    %v2539 = vpack.c.b16 %v1783, %v1779
    %v2540 = vpack.c.b16 %v1784, %v1780
    %v2541 = vpack.c.b16 %v1789, %v1785
    %v2542 = vpack.c.b16 %v1790, %v1786
    %v2543 = vpack.c.b16 %v1791, %v1787
    %v2544 = vpack.c.b16 %v1792, %v1788
    %v2545 = vpack.c.b16 %v1797, %v1793
    %v2546 = vpack.c.b16 %v1798, %v1794
    %v2547 = vpack.c.b16 %v1799, %v1795
    %v2548 = vpack.c.b16 %v1800, %v1796
    %v2549 = vpack.c.b16 %v1805, %v1801
    %v2550 = vpack.c.b16 %v1806, %v1802
    %v2551 = vpack.c.b16 %v1807, %v1803
    %v2552 = vpack.c.b16 %v1808, %v1804
    %v2553 = vpack.c.b16 %v1813, %v1809
    %v2554 = vpack.c.b16 %v1814, %v1810
    %v2555 = vpack.c.b16 %v1815, %v1811
    %v2556 = vpack.c.b16 %v1816, %v1812
    %v2557 = vpack.c.b16 %v1821, %v1817
    %v2558 = vpack.c.b16 %v1822, %v1818
    %v2559 = vpack.c.b16 %v1823, %v1819
    %v2560 = vpack.c.b16 %v1824, %v1820
    %v2561 = vpack.c.b16 %v1829, %v1825
    %v2562 = vpack.c.b16 %v1830, %v1826
    %v2563 = vpack.c.b16 %v1831, %v1827
    %v2564 = vpack.c.b16 %v1832, %v1828
    %v2565 = vpack.c.b16 %v1837, %v1833
    %v2566 = vpack.c.b16 %v1838, %v1834
    %v2567 = vpack.c.b16 %v1839, %v1835
    %v2568 = vpack.c.b16 %v1840, %v1836
    %v2569 = vpack.c.b16 %v1845, %v1841
    %v2570 = vpack.c.b16 %v1846, %v1842
    %v2571 = vpack.c.b16 %v1847, %v1843
    %v2572 = vpack.c.b16 %v1848, %v1844
    %v2573 = vpack.c.b16 %v1853, %v1849
    %v2574 = vpack.c.b16 %v1854, %v1850
    %v2575 = vpack.c.b16 %v1855, %v1851
    %v2576 = vpack.c.b16 %v1856, %v1852
    %v2577 = vpack.c.b16 %v1861, %v1857
    %v2578 = vpack.c.b16 %v1862, %v1858
    %v2579 = vpack.c.b16 %v1863, %v1859
    %v2580 = vpack.c.b16 %v1864, %v1860
    %v2581 = vpack.c.b16 %v1869, %v1865
    %v2582 = vpack.c.b16 %v1870, %v1866
    %v2583 = vpack.c.b16 %v1871, %v1867
    %v2584 = vpack.c.b16 %v1872, %v1868
    %v2585 = vpack.c.b16 %v1877, %v1873
    %v2586 = vpack.c.b16 %v1878, %v1874
    %v2587 = vpack.c.b16 %v1879, %v1875
    %v2588 = vpack.c.b16 %v1880, %v1876
    %v2589 = vpack.c.b16 %v1885, %v1881
    %v2590 = vpack.c.b16 %v1886, %v1882
    %v2591 = vpack.c.b16 %v1887, %v1883
    %v2592 = vpack.c.b16 %v1888, %v1884
    %v2593 = vpack.c.b16 %v1893, %v1889
    %v2594 = vpack.c.b16 %v1894, %v1890
    %v2595 = vpack.c.b16 %v1895, %v1891
    %v2596 = vpack.c.b16 %v1896, %v1892
    %v2597 = vpack.c.b16 %v1901, %v1897
    %v2598 = vpack.c.b16 %v1902, %v1898
    %v2599 = vpack.c.b16 %v1903, %v1899
    %v2600 = vpack.c.b16 %v1904, %v1900
    %v2601 = vpack.c.b16 %v1909, %v1905
    %v2602 = vpack.c.b16 %v1910, %v1906
    %v2603 = vpack.c.b16 %v1911, %v1907
    %v2604 = vpack.c.b16 %v1912, %v1908
    %v2605 = vpack.c.b16 %v1917, %v1913
    %v2606 = vpack.c.b16 %v1918, %v1914
    %v2607 = vpack.c.b16 %v1919, %v1915
    %v2608 = vpack.c.b16 %v1920, %v1916
    %v2609 = vpack.c.b16 %v1925, %v1921
    %v2610 = vpack.c.b16 %v1926, %v1922
    %v2611 = vpack.c.b16 %v1927, %v1923
    %v2612 = vpack.c.b16 %v1928, %v1924
    %v2613 = vpack.c.b16 %v1933, %v1929
    %v2614 = vpack.c.b16 %v1934, %v1930
    %v2615 = vpack.c.b16 %v1935, %v1931
    %v2616 = vpack.c.b16 %v1936, %v1932
    %v2617 = vpack.c.b16 %v1941, %v1937
    %v2618 = vpack.c.b16 %v1942, %v1938
    %v2619 = vpack.c.b16 %v1943, %v1939
    %v2620 = vpack.c.b16 %v1944, %v1940
    %v2621 = vpack.c.b16 %v1949, %v1945
    %v2622 = vpack.c.b16 %v1950, %v1946
    %v2623 = vpack.c.b16 %v1951, %v1947
    %v2624 = vpack.c.b16 %v1952, %v1948
    %v2625 = vpack.c.b16 %v1957, %v1953
    %v2626 = vpack.c.b16 %v1958, %v1954
    %v2627 = vpack.c.b16 %v1959, %v1955
    %v2628 = vpack.c.b16 %v1960, %v1956
    %v2629 = vpack.c.b16 %v1965, %v1961
    %v2630 = vpack.c.b16 %v1966, %v1962
    %v2631 = vpack.c.b16 %v1967, %v1963
    %v2632 = vpack.c.b16 %v1968, %v1964
    %v2633 = vpack.c.b16 %v1973, %v1969
    %v2634 = vpack.c.b16 %v1974, %v1970
    %v2635 = vpack.c.b16 %v1975, %v1971
    %v2636 = vpack.c.b16 %v1976, %v1972
    %v2637 = vpack.c.b16 %v1981, %v1977
    %v2638 = vpack.c.b16 %v1982, %v1978
    %v2639 = vpack.c.b16 %v1983, %v1979
    %v2640 = vpack.c.b16 %v1984, %v1980
    %v2641 = vpack.c.b16 %v1989, %v1985
    %v2642 = vpack.c.b16 %v1990, %v1986
    %v2643 = vpack.c.b16 %v1991, %v1987
    %v2644 = vpack.c.b16 %v1992, %v1988
    %v2645 = vpack.c.b16 %v1997, %v1993
    %v2646 = vpack.c.b16 %v1998, %v1994
    %v2647 = vpack.c.b16 %v1999, %v1995
    %v2648 = vpack.c.b16 %v2000, %v1996
    %v2649 = vpack.c.b16 %v2005, %v2001
    %v2650 = vpack.c.b16 %v2006, %v2002
    %v2651 = vpack.c.b16 %v2007, %v2003
    %v2652 = vpack.c.b16 %v2008, %v2004
    %v2653 = vpack.c.b16 %v2013, %v2009
    %v2654 = vpack.c.b16 %v2014, %v2010
    %v2655 = vpack.c.b16 %v2015, %v2011
    %v2656 = vpack.c.b16 %v2016, %v2012
    %v2657 = vpack.c.b16 %v2021, %v2017
    %v2658 = vpack.c.b16 %v2022, %v2018
    %v2659 = vpack.c.b16 %v2023, %v2019
    %v2660 = vpack.c.b16 %v2024, %v2020
    %v2661 = vpack.c.b16 %v2029, %v2025
    %v2662 = vpack.c.b16 %v2030, %v2026
    %v2663 = vpack.c.b16 %v2031, %v2027
    %v2664 = vpack.c.b16 %v2032, %v2028
    %v2665 = vpack.c.b16 %v2037, %v2033
    %v2666 = vpack.c.b16 %v2038, %v2034
    %v2667 = vpack.c.b16 %v2039, %v2035
    %v2668 = vpack.c.b16 %v2040, %v2036
    %v2669 = vpack.c.b16 %v2045, %v2041
    %v2670 = vpack.c.b16 %v2046, %v2042
    %v2671 = vpack.c.b16 %v2047, %v2043
    %v2672 = vpack.c.b16 %v2048, %v2044
    %v2673 = vpack.c.b16 %v2053, %v2049
    %v2674 = vpack.c.b16 %v2054, %v2050
    %v2675 = vpack.c.b16 %v2055, %v2051
    %v2676 = vpack.c.b16 %v2056, %v2052
    %v2677 = vpack.c.b16 %v2061, %v2057
    %v2678 = vpack.c.b16 %v2062, %v2058
    %v2679 = vpack.c.b16 %v2063, %v2059
    %v2680 = vpack.c.b16 %v2064, %v2060
    %v2681 = vpack.c.b16 %v2069, %v2065
    %v2682 = vpack.c.b16 %v2070, %v2066
    %v2683 = vpack.c.b16 %v2071, %v2067
    %v2684 = vpack.c.b16 %v2072, %v2068
    %v2685 = vpack.c.b16 %v2077, %v2073
    %v2686 = vpack.c.b16 %v2078, %v2074
    %v2687 = vpack.c.b16 %v2079, %v2075
    %v2688 = vpack.c.b16 %v2080, %v2076
    %v2689 = vpack.c.b16 %v2085, %v2081
    %v2690 = vpack.c.b16 %v2086, %v2082
    %v2691 = vpack.c.b16 %v2087, %v2083
    %v2692 = vpack.c.b16 %v2088, %v2084
    %v2693 = vpack.c.b16 %v2093, %v2089
    %v2694 = vpack.c.b16 %v2094, %v2090
    %v2695 = vpack.c.b16 %v2095, %v2091
    %v2696 = vpack.c.b16 %v2096, %v2092
    %v2697 = vpack.c.b16 %v2101, %v2097
    %v2698 = vpack.c.b16 %v2102, %v2098
    %v2699 = vpack.c.b16 %v2103, %v2099
    %v2700 = vpack.c.b16 %v2104, %v2100
    %v2701 = vpack.c.b16 %v2109, %v2105
    %v2702 = vpack.c.b16 %v2110, %v2106
    %v2703 = vpack.c.b16 %v2111, %v2107
    %v2704 = vpack.c.b16 %v2112, %v2108
    %v2705 = vpack.c.b16 %v2117, %v2113
    %v2706 = vpack.c.b16 %v2118, %v2114
    %v2707 = vpack.c.b16 %v2119, %v2115
    %v2708 = vpack.c.b16 %v2120, %v2116
    %v2709 = vpack.c.b16 %v2125, %v2121
    %v2710 = vpack.c.b16 %v2126, %v2122
    %v2711 = vpack.c.b16 %v2127, %v2123
    %v2712 = vpack.c.b16 %v2128, %v2124
    %v2713 = vpack.c.b16 %v2133, %v2129
    %v2714 = vpack.c.b16 %v2134, %v2130
    %v2715 = vpack.c.b16 %v2135, %v2131
    %v2716 = vpack.c.b16 %v2136, %v2132
    %v2717 = vpack.c.b16 %v2141, %v2137
    %v2718 = vpack.c.b16 %v2142, %v2138
    %v2719 = vpack.c.b16 %v2143, %v2139
    %v2720 = vpack.c.b16 %v2144, %v2140
    %v2721 = vpack.c.b16 %v2149, %v2145
    %v2722 = vpack.c.b16 %v2150, %v2146
    %v2723 = vpack.c.b16 %v2151, %v2147
    %v2724 = vpack.c.b16 %v2152, %v2148
    %v2725 = vpack.c.b16 %v2157, %v2153
    %v2726 = vpack.c.b16 %v2158, %v2154
    %v2727 = vpack.c.b16 %v2159, %v2155
    %v2728 = vpack.c.b16 %v2160, %v2156
    %v2729 = vpack.c.b16 %v2165, %v2161
    %v2730 = vpack.c.b16 %v2166, %v2162
    %v2731 = vpack.c.b16 %v2167, %v2163
    %v2732 = vpack.c.b16 %v2168, %v2164
    %v2733 = vpack.c.b16 %v2173, %v2169
    %v2734 = vpack.c.b16 %v2174, %v2170
    %v2735 = vpack.c.b16 %v2175, %v2171
    %v2736 = vpack.c.b16 %v2176, %v2172
    %v2737 = vpack.c.b16 %v2181, %v2177
    %v2738 = vpack.c.b16 %v2182, %v2178
    %v2739 = vpack.c.b16 %v2183, %v2179
    %v2740 = vpack.c.b16 %v2184, %v2180
    %v2741 = vpack.c.b16 %v2189, %v2185
    %v2742 = vpack.c.b16 %v2190, %v2186
    %v2743 = vpack.c.b16 %v2191, %v2187
    %v2744 = vpack.c.b16 %v2192, %v2188
    %v2745 = vpack.c.b16 %v2197, %v2193
    %v2746 = vpack.c.b16 %v2198, %v2194
    %v2747 = vpack.c.b16 %v2199, %v2195
    %v2748 = vpack.c.b16 %v2200, %v2196
    %v2749 = vpack.c.b16 %v2205, %v2201
    %v2750 = vpack.c.b16 %v2206, %v2202
    %v2751 = vpack.c.b16 %v2207, %v2203
    %v2752 = vpack.c.b16 %v2208, %v2204
    %v2753 = vpack.c.b16 %v2213, %v2209
    %v2754 = vpack.c.b16 %v2214, %v2210
    %v2755 = vpack.c.b16 %v2215, %v2211
    %v2756 = vpack.c.b16 %v2216, %v2212
    %v2757 = vpack.c.b16 %v2221, %v2217
    %v2758 = vpack.c.b16 %v2222, %v2218
    %v2759 = vpack.c.b16 %v2223, %v2219
    %v2760 = vpack.c.b16 %v2224, %v2220
    %v2761 = vpack.c.b16 %v2229, %v2225
    %v2762 = vpack.c.b16 %v2230, %v2226
    %v2763 = vpack.c.b16 %v2231, %v2227
    %v2764 = vpack.c.b16 %v2232, %v2228
    %v2765 = vpack.c.b16 %v2237, %v2233
    %v2766 = vpack.c.b16 %v2238, %v2234
    %v2767 = vpack.c.b16 %v2239, %v2235
    %v2768 = vpack.c.b16 %v2240, %v2236
    %v2769 = vpack.c.b16 %v2245, %v2241
    %v2770 = vpack.c.b16 %v2246, %v2242
    %v2771 = vpack.c.b16 %v2247, %v2243
    %v2772 = vpack.c.b16 %v2248, %v2244
    %v2773 = vpack.c.b16 %v2253, %v2249
    %v2774 = vpack.c.b16 %v2254, %v2250
    %v2775 = vpack.c.b16 %v2255, %v2251
    %v2776 = vpack.c.b16 %v2256, %v2252
    %v2777 = vpack.c.b16 %v2261, %v2257
    %v2778 = vpack.c.b16 %v2262, %v2258
    %v2779 = vpack.c.b16 %v2263, %v2259
    %v2780 = vpack.c.b16 %v2264, %v2260
    %v2781 = vpack.c.b16 %v2269, %v2265
    %v2782 = vpack.c.b16 %v2270, %v2266
    %v2783 = vpack.c.b16 %v2271, %v2267
    %v2784 = vpack.c.b16 %v2272, %v2268
    %3297 = vmatprep.subr.bf16.mxu0 %v2274
    %3298 = vmatpush1.bf16.msra.mxu0 %v2273
    %3299 = vmatprep.subr.bf16.mxu0 %v2278
    %3300 = vmatpush1.bf16.msra.mxu0 %v2277
    %3301 = vmatprep.subr.bf16.mxu0 %v2282
    %3302 = vmatpush1.bf16.msra.mxu0 %v2281
    %3303 = vmatprep.subr.bf16.mxu0 %v2286
    %3304 = vmatpush1.bf16.msra.mxu0 %v2285
    %3305 = vmatprep.subr.bf16.mxu0 %v2290
    %3306 = vmatpush1.bf16.msra.mxu0 %v2289
    %3307 = vmatprep.subr.bf16.mxu0 %v2294
    %3308 = vmatpush1.bf16.msra.mxu0 %v2293
    %3309 = vmatprep.subr.bf16.mxu0 %v2298
    %3310 = vmatpush1.bf16.msra.mxu0 %v2297
    %3311 = vmatprep.subr.bf16.mxu0 %v2302
    %3312 = vmatpush1.bf16.msra.mxu0 %v2301
    %3313 = vmatprep.subr.bf16.mxu0 %v2306
    %3314 = vmatpush1.bf16.msra.mxu0 %v2305
    %3315 = vmatprep.subr.bf16.mxu0 %v2310
    %3316 = vmatpush1.bf16.msra.mxu0 %v2309
    %3317 = vmatprep.subr.bf16.mxu0 %v2314
    %3318 = vmatpush1.bf16.msra.mxu0 %v2313
    %3319 = vmatprep.subr.bf16.mxu0 %v2318
    %3320 = vmatpush1.bf16.msra.mxu0 %v2317
    %3321 = vmatprep.subr.bf16.mxu0 %v2322
    %3322 = vmatpush1.bf16.msra.mxu0 %v2321
    %3323 = vmatprep.subr.bf16.mxu0 %v2326
    %3324 = vmatpush1.bf16.msra.mxu0 %v2325
    %3325 = vmatprep.subr.bf16.mxu0 %v2330
    %3326 = vmatpush1.bf16.msra.mxu0 %v2329
    %3327 = vmatprep.subr.bf16.mxu0 %v2334
    %3328 = vmatpush1.bf16.msra.mxu0 %v2333
    %3329 = vmatprep.mubr.bf16.mxu0 %v706
    %3330 = vmatmul.mubr.bf16.gmra.mrb[0].mxu0 %v705
    %v3331 = vpop.f32.mrb[0].mxu0
    %v3332 = vadd.f32 %v668, %v3331
    %v3333 = vpop.f32.mrb[0].mxu0
    %v3334 = vadd.f32 %v672, %v3333
    %v3335 = vpop.f32.mrb[0].mxu0
    %v3336 = vpop.f32.mrb[0].mxu0
    %3337 = vdwg.mxu0
    %3338 = vmatprep.subr.bf16.mxu0 %v2338
    %3339 = vmatpush1.bf16.msra.mxu0 %v2337
    %3340 = vmatprep.subr.bf16.mxu0 %v2342
    %3341 = vmatpush1.bf16.msra.mxu0 %v2341
    %3342 = vmatprep.subr.bf16.mxu0 %v2346
    %3343 = vmatpush1.bf16.msra.mxu0 %v2345
    %3344 = vmatprep.subr.bf16.mxu0 %v2350
    %3345 = vmatpush1.bf16.msra.mxu0 %v2349
    %3346 = vmatprep.subr.bf16.mxu0 %v2354
    %3347 = vmatpush1.bf16.msra.mxu0 %v2353
    %3348 = vmatprep.subr.bf16.mxu0 %v2358
    %3349 = vmatpush1.bf16.msra.mxu0 %v2357
    %3350 = vmatprep.subr.bf16.mxu0 %v2362
    %3351 = vmatpush1.bf16.msra.mxu0 %v2361
    %3352 = vmatprep.subr.bf16.mxu0 %v2366
    %3353 = vmatpush1.bf16.msra.mxu0 %v2365
    %3354 = vmatprep.subr.bf16.mxu0 %v2370
    %3355 = vmatpush1.bf16.msra.mxu0 %v2369
    %3356 = vmatprep.subr.bf16.mxu0 %v2374
    %3357 = vmatpush1.bf16.msra.mxu0 %v2373
    %3358 = vmatprep.subr.bf16.mxu0 %v2378
    %3359 = vmatpush1.bf16.msra.mxu0 %v2377
    %3360 = vmatprep.subr.bf16.mxu0 %v2382
    %3361 = vmatpush1.bf16.msra.mxu0 %v2381
    %3362 = vmatprep.subr.bf16.mxu0 %v2386
    %3363 = vmatpush1.bf16.msra.mxu0 %v2385
    %3364 = vmatprep.subr.bf16.mxu0 %v2390
    %3365 = vmatpush1.bf16.msra.mxu0 %v2389
    %3366 = vmatprep.subr.bf16.mxu0 %v2394
    %3367 = vmatpush1.bf16.msra.mxu0 %v2393
    %3368 = vmatprep.subr.bf16.mxu0 %v2398
    %3369 = vmatpush1.bf16.msra.mxu0 %v2397
    %3370 = vmatprep.mubr.bf16.mxu0 %v708
    %3371 = vmatmul.mubr.bf16.gmra.mrb[0].mxu0 %v707
    %v3372 = vpop.f32.mrb[0].mxu0
    %v3373 = vadd.f32 %v3332, %v3372
    %v3374 = vpop.f32.mrb[0].mxu0
    %v3375 = vadd.f32 %v3334, %v3374
    %v3376 = vpop.f32.mrb[0].mxu0
    %v3377 = vpop.f32.mrb[0].mxu0
    %3378 = vdwg.mxu0
    %3379 = vmatprep.subr.bf16.mxu0 %v2402
    %3380 = vmatpush1.bf16.msra.mxu0 %v2401
    %3381 = vmatprep.subr.bf16.mxu0 %v2406
    %3382 = vmatpush1.bf16.msra.mxu0 %v2405
    %3383 = vmatprep.subr.bf16.mxu0 %v2410
    %3384 = vmatpush1.bf16.msra.mxu0 %v2409
    %3385 = vmatprep.subr.bf16.mxu0 %v2414
    %3386 = vmatpush1.bf16.msra.mxu0 %v2413
    %3387 = vmatprep.subr.bf16.mxu0 %v2418
    %3388 = vmatpush1.bf16.msra.mxu0 %v2417
    %3389 = vmatprep.subr.bf16.mxu0 %v2422
    %3390 = vmatpush1.bf16.msra.mxu0 %v2421
    %3391 = vmatprep.subr.bf16.mxu0 %v2426
    %3392 = vmatpush1.bf16.msra.mxu0 %v2425
    %3393 = vmatprep.subr.bf16.mxu0 %v2430
    %3394 = vmatpush1.bf16.msra.mxu0 %v2429
    %3395 = vmatprep.subr.bf16.mxu0 %v2434
    %3396 = vmatpush1.bf16.msra.mxu0 %v2433
    %3397 = vmatprep.subr.bf16.mxu0 %v2438
    %3398 = vmatpush1.bf16.msra.mxu0 %v2437
    %3399 = vmatprep.subr.bf16.mxu0 %v2442
    %3400 = vmatpush1.bf16.msra.mxu0 %v2441
    %3401 = vmatprep.subr.bf16.mxu0 %v2446
    %3402 = vmatpush1.bf16.msra.mxu0 %v2445
    %3403 = vmatprep.subr.bf16.mxu0 %v2450
    %3404 = vmatpush1.bf16.msra.mxu0 %v2449
    %3405 = vmatprep.subr.bf16.mxu0 %v2454
    %3406 = vmatpush1.bf16.msra.mxu0 %v2453
    %3407 = vmatprep.subr.bf16.mxu0 %v2458
    %3408 = vmatpush1.bf16.msra.mxu0 %v2457
    %3409 = vmatprep.subr.bf16.mxu0 %v2462
    %3410 = vmatpush1.bf16.msra.mxu0 %v2461
    %3411 = vmatprep.mubr.bf16.mxu0 %v710
    %3412 = vmatmul.mubr.bf16.gmra.mrb[0].mxu0 %v709
    %v3413 = vpop.f32.mrb[0].mxu0
    %v3414 = vadd.f32 %v3373, %v3413
    %v3415 = vpop.f32.mrb[0].mxu0
    %v3416 = vadd.f32 %v3375, %v3415
    %v3417 = vpop.f32.mrb[0].mxu0
    %v3418 = vpop.f32.mrb[0].mxu0
    %3419 = vdwg.mxu0
    %3420 = vmatprep.subr.bf16.mxu0 %v2466
    %3421 = vmatpush1.bf16.msra.mxu0 %v2465
    %3422 = vmatprep.subr.bf16.mxu0 %v2470
    %3423 = vmatpush1.bf16.msra.mxu0 %v2469
    %3424 = vmatprep.subr.bf16.mxu0 %v2474
    %3425 = vmatpush1.bf16.msra.mxu0 %v2473
    %3426 = vmatprep.subr.bf16.mxu0 %v2478
    %3427 = vmatpush1.bf16.msra.mxu0 %v2477
    %3428 = vmatprep.subr.bf16.mxu0 %v2482
    %3429 = vmatpush1.bf16.msra.mxu0 %v2481
    %3430 = vmatprep.subr.bf16.mxu0 %v2486
    %3431 = vmatpush1.bf16.msra.mxu0 %v2485
    %3432 = vmatprep.subr.bf16.mxu0 %v2490
    %3433 = vmatpush1.bf16.msra.mxu0 %v2489
    %3434 = vmatprep.subr.bf16.mxu0 %v2494
    %3435 = vmatpush1.bf16.msra.mxu0 %v2493
    %3436 = vmatprep.subr.bf16.mxu0 %v2498
    %3437 = vmatpush1.bf16.msra.mxu0 %v2497
    %3438 = vmatprep.subr.bf16.mxu0 %v2502
    %3439 = vmatpush1.bf16.msra.mxu0 %v2501
    %3440 = vmatprep.subr.bf16.mxu0 %v2506
    %3441 = vmatpush1.bf16.msra.mxu0 %v2505
    %3442 = vmatprep.subr.bf16.mxu0 %v2510
    %3443 = vmatpush1.bf16.msra.mxu0 %v2509
    %3444 = vmatprep.subr.bf16.mxu0 %v2514
    %3445 = vmatpush1.bf16.msra.mxu0 %v2513
    %3446 = vmatprep.subr.bf16.mxu0 %v2518
    %3447 = vmatpush1.bf16.msra.mxu0 %v2517
    %3448 = vmatprep.subr.bf16.mxu0 %v2522
    %3449 = vmatpush1.bf16.msra.mxu0 %v2521
    %3450 = vmatprep.subr.bf16.mxu0 %v2526
    %3451 = vmatpush1.bf16.msra.mxu0 %v2525
    %3452 = vmatprep.mubr.bf16.mxu0 %v712
    %3453 = vmatmul.mubr.bf16.gmra.mrb[0].mxu0 %v711
    %v3454 = vpop.f32.mrb[0].mxu0
    %v3455 = vadd.f32 %v3414, %v3454
    %v3456 = vpop.f32.mrb[0].mxu0
    %v3457 = vadd.f32 %v3416, %v3456
    %v3458 = vpop.f32.mrb[0].mxu0
    %v3459 = vpop.f32.mrb[0].mxu0
    %3460 = vdwg.mxu0
    %3461 = vmatprep.subr.bf16.mxu0 %v2530
    %3462 = vmatpush1.bf16.msra.mxu0 %v2529
    %3463 = vmatprep.subr.bf16.mxu0 %v2534
    %3464 = vmatpush1.bf16.msra.mxu0 %v2533
    %3465 = vmatprep.subr.bf16.mxu0 %v2538
    %3466 = vmatpush1.bf16.msra.mxu0 %v2537
    %3467 = vmatprep.subr.bf16.mxu0 %v2542
    %3468 = vmatpush1.bf16.msra.mxu0 %v2541
    %3469 = vmatprep.subr.bf16.mxu0 %v2546
    %3470 = vmatpush1.bf16.msra.mxu0 %v2545
    %3471 = vmatprep.subr.bf16.mxu0 %v2550
    %3472 = vmatpush1.bf16.msra.mxu0 %v2549
    %3473 = vmatprep.subr.bf16.mxu0 %v2554
    %3474 = vmatpush1.bf16.msra.mxu0 %v2553
    %3475 = vmatprep.subr.bf16.mxu0 %v2558
    %3476 = vmatpush1.bf16.msra.mxu0 %v2557
    %3477 = vmatprep.subr.bf16.mxu0 %v2562
    %3478 = vmatpush1.bf16.msra.mxu0 %v2561
    %3479 = vmatprep.subr.bf16.mxu0 %v2566
    %3480 = vmatpush1.bf16.msra.mxu0 %v2565
    %3481 = vmatprep.subr.bf16.mxu0 %v2570
    %3482 = vmatpush1.bf16.msra.mxu0 %v2569
    %3483 = vmatprep.subr.bf16.mxu0 %v2574
    %3484 = vmatpush1.bf16.msra.mxu0 %v2573
    %3485 = vmatprep.subr.bf16.mxu0 %v2578
    %3486 = vmatpush1.bf16.msra.mxu0 %v2577
    %3487 = vmatprep.subr.bf16.mxu0 %v2582
    %3488 = vmatpush1.bf16.msra.mxu0 %v2581
    %3489 = vmatprep.subr.bf16.mxu0 %v2586
    %3490 = vmatpush1.bf16.msra.mxu0 %v2585
    %3491 = vmatprep.subr.bf16.mxu0 %v2590
    %3492 = vmatpush1.bf16.msra.mxu0 %v2589
    %3493 = vmatprep.mubr.bf16.mxu0 %v714
    %3494 = vmatmul.mubr.bf16.gmra.mrb[0].mxu0 %v713
    %v3495 = vpop.f32.mrb[0].mxu0
    %v3496 = vadd.f32 %v3455, %v3495
    %v3497 = vpop.f32.mrb[0].mxu0
    %v3498 = vadd.f32 %v3457, %v3497
    %v3499 = vpop.f32.mrb[0].mxu0
    %v3500 = vpop.f32.mrb[0].mxu0
    %3501 = vdwg.mxu0
    %3502 = vmatprep.subr.bf16.mxu0 %v2594
    %3503 = vmatpush1.bf16.msra.mxu0 %v2593
    %3504 = vmatprep.subr.bf16.mxu0 %v2598
    %3505 = vmatpush1.bf16.msra.mxu0 %v2597
    %3506 = vmatprep.subr.bf16.mxu0 %v2602
    %3507 = vmatpush1.bf16.msra.mxu0 %v2601
    %3508 = vmatprep.subr.bf16.mxu0 %v2606
    %3509 = vmatpush1.bf16.msra.mxu0 %v2605
    %3510 = vmatprep.subr.bf16.mxu0 %v2610
    %3511 = vmatpush1.bf16.msra.mxu0 %v2609
    %3512 = vmatprep.subr.bf16.mxu0 %v2614
    %3513 = vmatpush1.bf16.msra.mxu0 %v2613
    %3514 = vmatprep.subr.bf16.mxu0 %v2618
    %3515 = vmatpush1.bf16.msra.mxu0 %v2617
    %3516 = vmatprep.subr.bf16.mxu0 %v2622
    %3517 = vmatpush1.bf16.msra.mxu0 %v2621
    %3518 = vmatprep.subr.bf16.mxu0 %v2626
    %3519 = vmatpush1.bf16.msra.mxu0 %v2625
    %3520 = vmatprep.subr.bf16.mxu0 %v2630
    %3521 = vmatpush1.bf16.msra.mxu0 %v2629
    %3522 = vmatprep.subr.bf16.mxu0 %v2634
    %3523 = vmatpush1.bf16.msra.mxu0 %v2633
    %3524 = vmatprep.subr.bf16.mxu0 %v2638
    %3525 = vmatpush1.bf16.msra.mxu0 %v2637
    %3526 = vmatprep.subr.bf16.mxu0 %v2642
    %3527 = vmatpush1.bf16.msra.mxu0 %v2641
    %3528 = vmatprep.subr.bf16.mxu0 %v2646
    %3529 = vmatpush1.bf16.msra.mxu0 %v2645
    %3530 = vmatprep.subr.bf16.mxu0 %v2650
    %3531 = vmatpush1.bf16.msra.mxu0 %v2649
    %3532 = vmatprep.subr.bf16.mxu0 %v2654
    %3533 = vmatpush1.bf16.msra.mxu0 %v2653
    %3534 = vmatprep.mubr.bf16.mxu0 %v716
    %3535 = vmatmul.mubr.bf16.gmra.mrb[0].mxu0 %v715
    %v3536 = vpop.f32.mrb[0].mxu0
    %v3537 = vadd.f32 %v3496, %v3536
    %v3538 = vpop.f32.mrb[0].mxu0
    %v3539 = vadd.f32 %v3498, %v3538
    %v3540 = vpop.f32.mrb[0].mxu0
    %v3541 = vpop.f32.mrb[0].mxu0
    %3542 = vdwg.mxu0
    %3543 = vmatprep.subr.bf16.mxu0 %v2658
    %3544 = vmatpush1.bf16.msra.mxu0 %v2657
    %3545 = vmatprep.subr.bf16.mxu0 %v2662
    %3546 = vmatpush1.bf16.msra.mxu0 %v2661
    %3547 = vmatprep.subr.bf16.mxu0 %v2666
    %3548 = vmatpush1.bf16.msra.mxu0 %v2665
    %3549 = vmatprep.subr.bf16.mxu0 %v2670
    %3550 = vmatpush1.bf16.msra.mxu0 %v2669
    %3551 = vmatprep.subr.bf16.mxu0 %v2674
    %3552 = vmatpush1.bf16.msra.mxu0 %v2673
    %3553 = vmatprep.subr.bf16.mxu0 %v2678
    %3554 = vmatpush1.bf16.msra.mxu0 %v2677
    %3555 = vmatprep.subr.bf16.mxu0 %v2682
    %3556 = vmatpush1.bf16.msra.mxu0 %v2681
    %3557 = vmatprep.subr.bf16.mxu0 %v2686
    %3558 = vmatpush1.bf16.msra.mxu0 %v2685
    %3559 = vmatprep.subr.bf16.mxu0 %v2690
    %3560 = vmatpush1.bf16.msra.mxu0 %v2689
    %3561 = vmatprep.subr.bf16.mxu0 %v2694
    %3562 = vmatpush1.bf16.msra.mxu0 %v2693
    %3563 = vmatprep.subr.bf16.mxu0 %v2698
    %3564 = vmatpush1.bf16.msra.mxu0 %v2697
    %3565 = vmatprep.subr.bf16.mxu0 %v2702
    %3566 = vmatpush1.bf16.msra.mxu0 %v2701
    %3567 = vmatprep.subr.bf16.mxu0 %v2706
    %3568 = vmatpush1.bf16.msra.mxu0 %v2705
    %3569 = vmatprep.subr.bf16.mxu0 %v2710
    %3570 = vmatpush1.bf16.msra.mxu0 %v2709
    %3571 = vmatprep.subr.bf16.mxu0 %v2714
    %3572 = vmatpush1.bf16.msra.mxu0 %v2713
    %3573 = vmatprep.subr.bf16.mxu0 %v2718
    %3574 = vmatpush1.bf16.msra.mxu0 %v2717
    %3575 = vmatprep.mubr.bf16.mxu0 %v718
    %3576 = vmatmul.mubr.bf16.gmra.mrb[0].mxu0 %v717
    %v3577 = vpop.f32.mrb[0].mxu0
    %v3578 = vadd.f32 %v3537, %v3577
    %v3579 = vpop.f32.mrb[0].mxu0
    %v3580 = vadd.f32 %v3539, %v3579
    %v3581 = vpop.f32.mrb[0].mxu0
    %v3582 = vpop.f32.mrb[0].mxu0
    %3583 = vdwg.mxu0
    %3584 = vmatprep.subr.bf16.mxu0 %v2722
    %3585 = vmatpush1.bf16.msra.mxu0 %v2721
    %3586 = vmatprep.subr.bf16.mxu0 %v2726
    %3587 = vmatpush1.bf16.msra.mxu0 %v2725
    %3588 = vmatprep.subr.bf16.mxu0 %v2730
    %3589 = vmatpush1.bf16.msra.mxu0 %v2729
    %3590 = vmatprep.subr.bf16.mxu0 %v2734
    %3591 = vmatpush1.bf16.msra.mxu0 %v2733
    %3592 = vmatprep.subr.bf16.mxu0 %v2738
    %3593 = vmatpush1.bf16.msra.mxu0 %v2737
    %3594 = vmatprep.subr.bf16.mxu0 %v2742
    %3595 = vmatpush1.bf16.msra.mxu0 %v2741
    %3596 = vmatprep.subr.bf16.mxu0 %v2746
    %3597 = vmatpush1.bf16.msra.mxu0 %v2745
    %3598 = vmatprep.subr.bf16.mxu0 %v2750
    %3599 = vmatpush1.bf16.msra.mxu0 %v2749
    %3600 = vmatprep.subr.bf16.mxu0 %v2754
    %3601 = vmatpush1.bf16.msra.mxu0 %v2753
    %3602 = vmatprep.subr.bf16.mxu0 %v2758
    %3603 = vmatpush1.bf16.msra.mxu0 %v2757
    %3604 = vmatprep.subr.bf16.mxu0 %v2762
    %3605 = vmatpush1.bf16.msra.mxu0 %v2761
    %3606 = vmatprep.subr.bf16.mxu0 %v2766
    %3607 = vmatpush1.bf16.msra.mxu0 %v2765
    %3608 = vmatprep.subr.bf16.mxu0 %v2770
    %3609 = vmatpush1.bf16.msra.mxu0 %v2769
    %3610 = vmatprep.subr.bf16.mxu0 %v2774
    %3611 = vmatpush1.bf16.msra.mxu0 %v2773
    %3612 = vmatprep.subr.bf16.mxu0 %v2778
    %3613 = vmatpush1.bf16.msra.mxu0 %v2777
    %3614 = vmatprep.subr.bf16.mxu0 %v2782
    %3615 = vmatpush1.bf16.msra.mxu0 %v2781
    %3616 = vmatprep.mubr.bf16.mxu0 %v720
    %3617 = vmatmul.mubr.bf16.gmra.mrb[0].mxu0 %v719
    %v3618 = vpop.f32.mrb[0].mxu0
    %v3619 = vadd.f32 %v3578, %v3618
    %v3620 = vpop.f32.mrb[0].mxu0
    %v3621 = vadd.f32 %v3580, %v3620
    %v3622 = vpop.f32.mrb[0].mxu0
    %v3623 = vpop.f32.mrb[0].mxu0
    %3624 = vdwg.mxu0
    %3625 = vmatprep.subr.bf16.mxu0 %v2276
    %3626 = vmatpush1.bf16.msra.mxu0 %v2275
    %3627 = vmatprep.subr.bf16.mxu0 %v2280
    %3628 = vmatpush1.bf16.msra.mxu0 %v2279
    %3629 = vmatprep.subr.bf16.mxu0 %v2284
    %3630 = vmatpush1.bf16.msra.mxu0 %v2283
    %3631 = vmatprep.subr.bf16.mxu0 %v2288
    %3632 = vmatpush1.bf16.msra.mxu0 %v2287
    %3633 = vmatprep.subr.bf16.mxu0 %v2292
    %3634 = vmatpush1.bf16.msra.mxu0 %v2291
    %3635 = vmatprep.subr.bf16.mxu0 %v2296
    %3636 = vmatpush1.bf16.msra.mxu0 %v2295
    %3637 = vmatprep.subr.bf16.mxu0 %v2300
    %3638 = vmatpush1.bf16.msra.mxu0 %v2299
    %3639 = vmatprep.subr.bf16.mxu0 %v2304
    %3640 = vmatpush1.bf16.msra.mxu0 %v2303
    %3641 = vmatprep.subr.bf16.mxu0 %v2308
    %3642 = vmatpush1.bf16.msra.mxu0 %v2307
    %3643 = vmatprep.subr.bf16.mxu0 %v2312
    %3644 = vmatpush1.bf16.msra.mxu0 %v2311
    %3645 = vmatprep.subr.bf16.mxu0 %v2316
    %3646 = vmatpush1.bf16.msra.mxu0 %v2315
    %3647 = vmatprep.subr.bf16.mxu0 %v2320
    %3648 = vmatpush1.bf16.msra.mxu0 %v2319
    %3649 = vmatprep.subr.bf16.mxu0 %v2324
    %3650 = vmatpush1.bf16.msra.mxu0 %v2323
    %3651 = vmatprep.subr.bf16.mxu0 %v2328
    %3652 = vmatpush1.bf16.msra.mxu0 %v2327
    %3653 = vmatprep.subr.bf16.mxu0 %v2332
    %3654 = vmatpush1.bf16.msra.mxu0 %v2331
    %3655 = vmatprep.subr.bf16.mxu0 %v2336
    %3656 = vmatpush1.bf16.msra.mxu0 %v2335
    %3657 = vmatprep.mubr.bf16.mxu0 %v706
    %3658 = vmatmul.mubr.bf16.gmra.mrb[0].mxu0 %v705
    %v3659 = vpop.f32.mrb[0].mxu0
    %v3660 = vadd.f32 %v676, %v3659
    %v3661 = vpop.f32.mrb[0].mxu0
    %v3662 = vadd.f32 %v680, %v3661
    %v3663 = vpop.f32.mrb[0].mxu0
    %v3664 = vpop.f32.mrb[0].mxu0
    %3665 = vdwg.mxu0
    %3666 = vmatprep.subr.bf16.mxu0 %v2340
    %3667 = vmatpush1.bf16.msra.mxu0 %v2339
    %3668 = vmatprep.subr.bf16.mxu0 %v2344
    %3669 = vmatpush1.bf16.msra.mxu0 %v2343
    %3670 = vmatprep.subr.bf16.mxu0 %v2348
    %3671 = vmatpush1.bf16.msra.mxu0 %v2347
    %3672 = vmatprep.subr.bf16.mxu0 %v2352
    %3673 = vmatpush1.bf16.msra.mxu0 %v2351
    %3674 = vmatprep.subr.bf16.mxu0 %v2356
    %3675 = vmatpush1.bf16.msra.mxu0 %v2355
    %3676 = vmatprep.subr.bf16.mxu0 %v2360
    %3677 = vmatpush1.bf16.msra.mxu0 %v2359
    %3678 = vmatprep.subr.bf16.mxu0 %v2364
    %3679 = vmatpush1.bf16.msra.mxu0 %v2363
    %3680 = vmatprep.subr.bf16.mxu0 %v2368
    %3681 = vmatpush1.bf16.msra.mxu0 %v2367
    %3682 = vmatprep.subr.bf16.mxu0 %v2372
    %3683 = vmatpush1.bf16.msra.mxu0 %v2371
    %3684 = vmatprep.subr.bf16.mxu0 %v2376
    %3685 = vmatpush1.bf16.msra.mxu0 %v2375
    %3686 = vmatprep.subr.bf16.mxu0 %v2380
    %3687 = vmatpush1.bf16.msra.mxu0 %v2379
    %3688 = vmatprep.subr.bf16.mxu0 %v2384
    %3689 = vmatpush1.bf16.msra.mxu0 %v2383
    %3690 = vmatprep.subr.bf16.mxu0 %v2388
    %3691 = vmatpush1.bf16.msra.mxu0 %v2387
    %3692 = vmatprep.subr.bf16.mxu0 %v2392
    %3693 = vmatpush1.bf16.msra.mxu0 %v2391
    %3694 = vmatprep.subr.bf16.mxu0 %v2396
    %3695 = vmatpush1.bf16.msra.mxu0 %v2395
    %3696 = vmatprep.subr.bf16.mxu0 %v2400
    %3697 = vmatpush1.bf16.msra.mxu0 %v2399
    %3698 = vmatprep.mubr.bf16.mxu0 %v708
    %3699 = vmatmul.mubr.bf16.gmra.mrb[0].mxu0 %v707
    %v3700 = vpop.f32.mrb[0].mxu0
    %v3701 = vadd.f32 %v3660, %v3700
    %v3702 = vpop.f32.mrb[0].mxu0
    %v3703 = vadd.f32 %v3662, %v3702
    %v3704 = vpop.f32.mrb[0].mxu0
    %v3705 = vpop.f32.mrb[0].mxu0
    %3706 = vdwg.mxu0
    %3707 = vmatprep.subr.bf16.mxu0 %v2404
    %3708 = vmatpush1.bf16.msra.mxu0 %v2403
    %3709 = vmatprep.subr.bf16.mxu0 %v2408
    %3710 = vmatpush1.bf16.msra.mxu0 %v2407
    %3711 = vmatprep.subr.bf16.mxu0 %v2412
    %3712 = vmatpush1.bf16.msra.mxu0 %v2411
    %3713 = vmatprep.subr.bf16.mxu0 %v2416
    %3714 = vmatpush1.bf16.msra.mxu0 %v2415
    %3715 = vmatprep.subr.bf16.mxu0 %v2420
    %3716 = vmatpush1.bf16.msra.mxu0 %v2419
    %3717 = vmatprep.subr.bf16.mxu0 %v2424
    %3718 = vmatpush1.bf16.msra.mxu0 %v2423
    %3719 = vmatprep.subr.bf16.mxu0 %v2428
    %3720 = vmatpush1.bf16.msra.mxu0 %v2427
    %3721 = vmatprep.subr.bf16.mxu0 %v2432
    %3722 = vmatpush1.bf16.msra.mxu0 %v2431
    %3723 = vmatprep.subr.bf16.mxu0 %v2436
    %3724 = vmatpush1.bf16.msra.mxu0 %v2435
    %3725 = vmatprep.subr.bf16.mxu0 %v2440
    %3726 = vmatpush1.bf16.msra.mxu0 %v2439
    %3727 = vmatprep.subr.bf16.mxu0 %v2444
    %3728 = vmatpush1.bf16.msra.mxu0 %v2443
    %3729 = vmatprep.subr.bf16.mxu0 %v2448
    %3730 = vmatpush1.bf16.msra.mxu0 %v2447
    %3731 = vmatprep.subr.bf16.mxu0 %v2452
    %3732 = vmatpush1.bf16.msra.mxu0 %v2451
    %3733 = vmatprep.subr.bf16.mxu0 %v2456
    %3734 = vmatpush1.bf16.msra.mxu0 %v2455
    %3735 = vmatprep.subr.bf16.mxu0 %v2460
    %3736 = vmatpush1.bf16.msra.mxu0 %v2459
    %3737 = vmatprep.subr.bf16.mxu0 %v2464
    %3738 = vmatpush1.bf16.msra.mxu0 %v2463
    %3739 = vmatprep.mubr.bf16.mxu0 %v710
    %3740 = vmatmul.mubr.bf16.gmra.mrb[0].mxu0 %v709
    %v3741 = vpop.f32.mrb[0].mxu0
    %v3742 = vadd.f32 %v3701, %v3741
    %v3743 = vpop.f32.mrb[0].mxu0
    %v3744 = vadd.f32 %v3703, %v3743
    %v3745 = vpop.f32.mrb[0].mxu0
    %v3746 = vpop.f32.mrb[0].mxu0
    %3747 = vdwg.mxu0
    %3748 = vmatprep.subr.bf16.mxu0 %v2468
    %3749 = vmatpush1.bf16.msra.mxu0 %v2467
    %3750 = vmatprep.subr.bf16.mxu0 %v2472
    %3751 = vmatpush1.bf16.msra.mxu0 %v2471
    %3752 = vmatprep.subr.bf16.mxu0 %v2476
    %3753 = vmatpush1.bf16.msra.mxu0 %v2475
    %3754 = vmatprep.subr.bf16.mxu0 %v2480
    %3755 = vmatpush1.bf16.msra.mxu0 %v2479
    %3756 = vmatprep.subr.bf16.mxu0 %v2484
    %3757 = vmatpush1.bf16.msra.mxu0 %v2483
    %3758 = vmatprep.subr.bf16.mxu0 %v2488
    %3759 = vmatpush1.bf16.msra.mxu0 %v2487
    %3760 = vmatprep.subr.bf16.mxu0 %v2492
    %3761 = vmatpush1.bf16.msra.mxu0 %v2491
    %3762 = vmatprep.subr.bf16.mxu0 %v2496
    %3763 = vmatpush1.bf16.msra.mxu0 %v2495
    %3764 = vmatprep.subr.bf16.mxu0 %v2500
    %3765 = vmatpush1.bf16.msra.mxu0 %v2499
    %3766 = vmatprep.subr.bf16.mxu0 %v2504
    %3767 = vmatpush1.bf16.msra.mxu0 %v2503
    %3768 = vmatprep.subr.bf16.mxu0 %v2508
    %3769 = vmatpush1.bf16.msra.mxu0 %v2507
    %3770 = vmatprep.subr.bf16.mxu0 %v2512
    %3771 = vmatpush1.bf16.msra.mxu0 %v2511
    %3772 = vmatprep.subr.bf16.mxu0 %v2516
    %3773 = vmatpush1.bf16.msra.mxu0 %v2515
    %3774 = vmatprep.subr.bf16.mxu0 %v2520
    %3775 = vmatpush1.bf16.msra.mxu0 %v2519
    %3776 = vmatprep.subr.bf16.mxu0 %v2524
    %3777 = vmatpush1.bf16.msra.mxu0 %v2523
    %3778 = vmatprep.subr.bf16.mxu0 %v2528
    %3779 = vmatpush1.bf16.msra.mxu0 %v2527
    %3780 = vmatprep.mubr.bf16.mxu0 %v712
    %3781 = vmatmul.mubr.bf16.gmra.mrb[0].mxu0 %v711
    %v3782 = vpop.f32.mrb[0].mxu0
    %v3783 = vadd.f32 %v3742, %v3782
    %v3784 = vpop.f32.mrb[0].mxu0
    %v3785 = vadd.f32 %v3744, %v3784
    %v3786 = vpop.f32.mrb[0].mxu0
    %v3787 = vpop.f32.mrb[0].mxu0
    %3788 = vdwg.mxu0
    %3789 = vmatprep.subr.bf16.mxu0 %v2532
    %3790 = vmatpush1.bf16.msra.mxu0 %v2531
    %3791 = vmatprep.subr.bf16.mxu0 %v2536
    %3792 = vmatpush1.bf16.msra.mxu0 %v2535
    %3793 = vmatprep.subr.bf16.mxu0 %v2540
    %3794 = vmatpush1.bf16.msra.mxu0 %v2539
    %3795 = vmatprep.subr.bf16.mxu0 %v2544
    %3796 = vmatpush1.bf16.msra.mxu0 %v2543
    %3797 = vmatprep.subr.bf16.mxu0 %v2548
    %3798 = vmatpush1.bf16.msra.mxu0 %v2547
    %3799 = vmatprep.subr.bf16.mxu0 %v2552
    %3800 = vmatpush1.bf16.msra.mxu0 %v2551
    %3801 = vmatprep.subr.bf16.mxu0 %v2556
    %3802 = vmatpush1.bf16.msra.mxu0 %v2555
    %3803 = vmatprep.subr.bf16.mxu0 %v2560
    %3804 = vmatpush1.bf16.msra.mxu0 %v2559
    %3805 = vmatprep.subr.bf16.mxu0 %v2564
    %3806 = vmatpush1.bf16.msra.mxu0 %v2563
    %3807 = vmatprep.subr.bf16.mxu0 %v2568
    %3808 = vmatpush1.bf16.msra.mxu0 %v2567
    %3809 = vmatprep.subr.bf16.mxu0 %v2572
    %3810 = vmatpush1.bf16.msra.mxu0 %v2571
    %3811 = vmatprep.subr.bf16.mxu0 %v2576
    %3812 = vmatpush1.bf16.msra.mxu0 %v2575
    %3813 = vmatprep.subr.bf16.mxu0 %v2580
    %3814 = vmatpush1.bf16.msra.mxu0 %v2579
    %3815 = vmatprep.subr.bf16.mxu0 %v2584
    %3816 = vmatpush1.bf16.msra.mxu0 %v2583
    %3817 = vmatprep.subr.bf16.mxu0 %v2588
    %3818 = vmatpush1.bf16.msra.mxu0 %v2587
    %3819 = vmatprep.subr.bf16.mxu0 %v2592
    %3820 = vmatpush1.bf16.msra.mxu0 %v2591
    %3821 = vmatprep.mubr.bf16.mxu0 %v714
    %3822 = vmatmul.mubr.bf16.gmra.mrb[0].mxu0 %v713
    %v3823 = vpop.f32.mrb[0].mxu0
    %v3824 = vadd.f32 %v3783, %v3823
    %v3825 = vpop.f32.mrb[0].mxu0
    %v3826 = vadd.f32 %v3785, %v3825
    %v3827 = vpop.f32.mrb[0].mxu0
    %v3828 = vpop.f32.mrb[0].mxu0
    %3829 = vdwg.mxu0
    %3830 = vmatprep.subr.bf16.mxu0 %v2596
    %3831 = vmatpush1.bf16.msra.mxu0 %v2595
    %3832 = vmatprep.subr.bf16.mxu0 %v2600
    %3833 = vmatpush1.bf16.msra.mxu0 %v2599
    %3834 = vmatprep.subr.bf16.mxu0 %v2604
    %3835 = vmatpush1.bf16.msra.mxu0 %v2603
    %3836 = vmatprep.subr.bf16.mxu0 %v2608
    %3837 = vmatpush1.bf16.msra.mxu0 %v2607
    %3838 = vmatprep.subr.bf16.mxu0 %v2612
    %3839 = vmatpush1.bf16.msra.mxu0 %v2611
    %3840 = vmatprep.subr.bf16.mxu0 %v2616
    %3841 = vmatpush1.bf16.msra.mxu0 %v2615
    %3842 = vmatprep.subr.bf16.mxu0 %v2620
    %3843 = vmatpush1.bf16.msra.mxu0 %v2619
    %3844 = vmatprep.subr.bf16.mxu0 %v2624
    %3845 = vmatpush1.bf16.msra.mxu0 %v2623
    %3846 = vmatprep.subr.bf16.mxu0 %v2628
    %3847 = vmatpush1.bf16.msra.mxu0 %v2627
    %3848 = vmatprep.subr.bf16.mxu0 %v2632
    %3849 = vmatpush1.bf16.msra.mxu0 %v2631
    %3850 = vmatprep.subr.bf16.mxu0 %v2636
    %3851 = vmatpush1.bf16.msra.mxu0 %v2635
    %3852 = vmatprep.subr.bf16.mxu0 %v2640
    %3853 = vmatpush1.bf16.msra.mxu0 %v2639
    %3854 = vmatprep.subr.bf16.mxu0 %v2644
    %3855 = vmatpush1.bf16.msra.mxu0 %v2643
    %3856 = vmatprep.subr.bf16.mxu0 %v2648
    %3857 = vmatpush1.bf16.msra.mxu0 %v2647
    %3858 = vmatprep.subr.bf16.mxu0 %v2652
    %3859 = vmatpush1.bf16.msra.mxu0 %v2651
    %3860 = vmatprep.subr.bf16.mxu0 %v2656
    %3861 = vmatpush1.bf16.msra.mxu0 %v2655
    %3862 = vmatprep.mubr.bf16.mxu0 %v716
    %3863 = vmatmul.mubr.bf16.gmra.mrb[0].mxu0 %v715
    %v3864 = vpop.f32.mrb[0].mxu0
    %v3865 = vadd.f32 %v3824, %v3864
    %v3866 = vpop.f32.mrb[0].mxu0
    %v3867 = vadd.f32 %v3826, %v3866
    %v3868 = vpop.f32.mrb[0].mxu0
    %v3869 = vpop.f32.mrb[0].mxu0
    %3870 = vdwg.mxu0
    %3871 = vmatprep.subr.bf16.mxu0 %v2660
    %3872 = vmatpush1.bf16.msra.mxu0 %v2659
    %3873 = vmatprep.subr.bf16.mxu0 %v2664
    %3874 = vmatpush1.bf16.msra.mxu0 %v2663
    %3875 = vmatprep.subr.bf16.mxu0 %v2668
    %3876 = vmatpush1.bf16.msra.mxu0 %v2667
    %3877 = vmatprep.subr.bf16.mxu0 %v2672
    %3878 = vmatpush1.bf16.msra.mxu0 %v2671
    %3879 = vmatprep.subr.bf16.mxu0 %v2676
    %3880 = vmatpush1.bf16.msra.mxu0 %v2675
    %3881 = vmatprep.subr.bf16.mxu0 %v2680
    %3882 = vmatpush1.bf16.msra.mxu0 %v2679
    %3883 = vmatprep.subr.bf16.mxu0 %v2684
    %3884 = vmatpush1.bf16.msra.mxu0 %v2683
    %3885 = vmatprep.subr.bf16.mxu0 %v2688
    %3886 = vmatpush1.bf16.msra.mxu0 %v2687
    %3887 = vmatprep.subr.bf16.mxu0 %v2692
    %3888 = vmatpush1.bf16.msra.mxu0 %v2691
    %3889 = vmatprep.subr.bf16.mxu0 %v2696
    %3890 = vmatpush1.bf16.msra.mxu0 %v2695
    %3891 = vmatprep.subr.bf16.mxu0 %v2700
    %3892 = vmatpush1.bf16.msra.mxu0 %v2699
    %3893 = vmatprep.subr.bf16.mxu0 %v2704
    %3894 = vmatpush1.bf16.msra.mxu0 %v2703
    %3895 = vmatprep.subr.bf16.mxu0 %v2708
    %3896 = vmatpush1.bf16.msra.mxu0 %v2707
    %3897 = vmatprep.subr.bf16.mxu0 %v2712
    %3898 = vmatpush1.bf16.msra.mxu0 %v2711
    %3899 = vmatprep.subr.bf16.mxu0 %v2716
    %3900 = vmatpush1.bf16.msra.mxu0 %v2715
    %3901 = vmatprep.subr.bf16.mxu0 %v2720
    %3902 = vmatpush1.bf16.msra.mxu0 %v2719
    %3903 = vmatprep.mubr.bf16.mxu0 %v718
    %3904 = vmatmul.mubr.bf16.gmra.mrb[0].mxu0 %v717
    %v3905 = vpop.f32.mrb[0].mxu0
    %v3906 = vadd.f32 %v3865, %v3905
    %v3907 = vpop.f32.mrb[0].mxu0
    %v3908 = vadd.f32 %v3867, %v3907
    %v3909 = vpop.f32.mrb[0].mxu0
    %v3910 = vpop.f32.mrb[0].mxu0
    %3911 = vdwg.mxu0
    %3912 = vmatprep.subr.bf16.mxu0 %v2724
    %3913 = vmatpush1.bf16.msra.mxu0 %v2723
    %3914 = vmatprep.subr.bf16.mxu0 %v2728
    %3915 = vmatpush1.bf16.msra.mxu0 %v2727
    %3916 = vmatprep.subr.bf16.mxu0 %v2732
    %3917 = vmatpush1.bf16.msra.mxu0 %v2731
    %3918 = vmatprep.subr.bf16.mxu0 %v2736
    %3919 = vmatpush1.bf16.msra.mxu0 %v2735
    %3920 = vmatprep.subr.bf16.mxu0 %v2740
    %3921 = vmatpush1.bf16.msra.mxu0 %v2739
    %3922 = vmatprep.subr.bf16.mxu0 %v2744
    %3923 = vmatpush1.bf16.msra.mxu0 %v2743
    %3924 = vmatprep.subr.bf16.mxu0 %v2748
    %3925 = vmatpush1.bf16.msra.mxu0 %v2747
    %3926 = vmatprep.subr.bf16.mxu0 %v2752
    %3927 = vmatpush1.bf16.msra.mxu0 %v2751
    %3928 = vmatprep.subr.bf16.mxu0 %v2756
    %3929 = vmatpush1.bf16.msra.mxu0 %v2755
    %3930 = vmatprep.subr.bf16.mxu0 %v2760
    %3931 = vmatpush1.bf16.msra.mxu0 %v2759
    %3932 = vmatprep.subr.bf16.mxu0 %v2764
    %3933 = vmatpush1.bf16.msra.mxu0 %v2763
    %3934 = vmatprep.subr.bf16.mxu0 %v2768
    %3935 = vmatpush1.bf16.msra.mxu0 %v2767
    %3936 = vmatprep.subr.bf16.mxu0 %v2772
    %3937 = vmatpush1.bf16.msra.mxu0 %v2771
    %3938 = vmatprep.subr.bf16.mxu0 %v2776
    %3939 = vmatpush1.bf16.msra.mxu0 %v2775
    %3940 = vmatprep.subr.bf16.mxu0 %v2780
    %3941 = vmatpush1.bf16.msra.mxu0 %v2779
    %3942 = vmatprep.subr.bf16.mxu0 %v2784
    %3943 = vmatpush1.bf16.msra.mxu0 %v2783
    %3944 = vmatprep.mubr.bf16.mxu0 %v720
    %3945 = vmatmul.mubr.bf16.gmra.mrb[0].mxu0 %v719
    %v3946 = vpop.f32.mrb[0].mxu0
    %v3947 = vadd.f32 %v3906, %v3946
    %v3948 = vpop.f32.mrb[0].mxu0
    %v3949 = vadd.f32 %v3908, %v3948
    %v3950 = vpop.f32.mrb[0].mxu0
    %v3951 = vpop.f32.mrb[0].mxu0
    %3952 = vdwg.mxu0
    %vm3953 = vcmp.gt.f32.partialorder %v3619, 0.0
    %vm3954 = vcmp.gt.f32.partialorder %v3621, 0.0
    %vm3955 = vcmp.gt.f32.partialorder %v3947, 0.0
    %vm3956 = vcmp.gt.f32.partialorder %v3949, 0.0
    %v3957 = vmul.f32 %v3619, 0.01
    %v3958 = vmul.f32 %v3621, 0.01
    %v3959 = vmul.f32 %v3947, 0.01
    %v3960 = vmul.f32 %v3949, 0.01
    %v3961 = vsel %vm3953, %v3619, %v3957
    %v3962 = vsel %vm3954, %v3621, %v3958
    %v3963 = vsel %vm3955, %v3947, %v3959
    %v3964 = vsel %vm3956, %v3949, %v3960
    %v3965 = vpack.c.bf16 %v3961, %v3961
    %v3966 = vpack.c.bf16 %v3962, %v3962
    %v3967 = vpack.c.bf16 %v3963, %v3963
    %v3968 = vpack.c.bf16 %v3964, %v3964
    %v3969 = vld [vmem:[#allocation7] sm:$0xf]
    %v3970 = vld [vmem:[#allocation7 + $0x4] sm:$0xf]
    %v3971 = vld [vmem:[#allocation7 + $0x8] sm:$0xf]
    %v3972 = vld [vmem:[#allocation7 + $0xc] sm:$0xf]
    %v3973 = vld [vmem:[#allocation7 + $0x10] sm:$0xf]
    %v3974 = vld [vmem:[#allocation7 + $0x14] sm:$0xf]
    %v3975 = vld [vmem:[#allocation7 + $0x18] sm:$0xf]
    %v3976 = vld [vmem:[#allocation7 + $0x1c] sm:$0xf]
    %v3977 = vld [vmem:[#allocation7 + $0x20] sm:$0xf]
    %v3978 = vld [vmem:[#allocation7 + $0x24] sm:$0xf]
    %v3979 = vld [vmem:[#allocation7 + $0x28] sm:$0xf]
    %v3980 = vld [vmem:[#allocation7 + $0x2c] sm:$0xf]
    %v3981 = vld [vmem:[#allocation7 + $0x30] sm:$0xf]
    %v3982 = vld [vmem:[#allocation7 + $0x34] sm:$0xf]
    %v3983 = vld [vmem:[#allocation7 + $0x38] sm:$0xf]
    %v3984 = vld [vmem:[#allocation7 + $0x3c] sm:$0xf]
    %v3985 = vld [vmem:[#allocation7 + $0x40] sm:$0xf]
    %v3986 = vld [vmem:[#allocation7 + $0x44] sm:$0xf]
    %v3987 = vld [vmem:[#allocation7 + $0x48] sm:$0xf]
    %v3988 = vld [vmem:[#allocation7 + $0x4c] sm:$0xf]
    %v3989 = vld [vmem:[#allocation7 + $0x50] sm:$0xf]
    %v3990 = vld [vmem:[#allocation7 + $0x54] sm:$0xf]
    %v3991 = vld [vmem:[#allocation7 + $0x58] sm:$0xf]
    %v3992 = vld [vmem:[#allocation7 + $0x5c] sm:$0xf]
    %v3993 = vld [vmem:[#allocation7 + $0x60] sm:$0xf]
    %v3994 = vld [vmem:[#allocation7 + $0x64] sm:$0xf]
    %v3995 = vld [vmem:[#allocation7 + $0x68] sm:$0xf]
    %v3996 = vld [vmem:[#allocation7 + $0x6c] sm:$0xf]
    %v3997 = vld [vmem:[#allocation7 + $0x70] sm:$0xf]
    %v3998 = vld [vmem:[#allocation7 + $0x74] sm:$0xf]
    %v3999 = vld [vmem:[#allocation7 + $0x78] sm:$0xf]
    %v4000 = vld [vmem:[#allocation7 + $0x7c] sm:$0xf]
    %v4001 = vld [vmem:[#allocation7 + $0x80] sm:$0xf]
    %v4002 = vld [vmem:[#allocation7 + $0x84] sm:$0xf]
    %v4003 = vld [vmem:[#allocation7 + $0x88] sm:$0xf]
    %v4004 = vld [vmem:[#allocation7 + $0x8c] sm:$0xf]
    %v4005 = vld [vmem:[#allocation7 + $0x90] sm:$0xf]
    %v4006 = vld [vmem:[#allocation7 + $0x94] sm:$0xf]
    %v4007 = vld [vmem:[#allocation7 + $0x98] sm:$0xf]
    %v4008 = vld [vmem:[#allocation7 + $0x9c] sm:$0xf]
    %v4009 = vld [vmem:[#allocation7 + $0xa0] sm:$0xf]
    %v4010 = vld [vmem:[#allocation7 + $0xa4] sm:$0xf]
    %v4011 = vld [vmem:[#allocation7 + $0xa8] sm:$0xf]
    %v4012 = vld [vmem:[#allocation7 + $0xac] sm:$0xf]
    %v4013 = vld [vmem:[#allocation7 + $0xb0] sm:$0xf]
    %v4014 = vld [vmem:[#allocation7 + $0xb4] sm:$0xf]
    %v4015 = vld [vmem:[#allocation7 + $0xb8] sm:$0xf]
    %v4016 = vld [vmem:[#allocation7 + $0xbc] sm:$0xf]
    %v4017 = vld [vmem:[#allocation7 + $0xc0] sm:$0xf]
    %v4018 = vld [vmem:[#allocation7 + $0xc4] sm:$0xf]
    %v4019 = vld [vmem:[#allocation7 + $0xc8] sm:$0xf]
    %v4020 = vld [vmem:[#allocation7 + $0xcc] sm:$0xf]
    %v4021 = vld [vmem:[#allocation7 + $0xd0] sm:$0xf]
    %v4022 = vld [vmem:[#allocation7 + $0xd4] sm:$0xf]
    %v4023 = vld [vmem:[#allocation7 + $0xd8] sm:$0xf]
    %v4024 = vld [vmem:[#allocation7 + $0xdc] sm:$0xf]
    %v4025 = vld [vmem:[#allocation7 + $0xe0] sm:$0xf]
    %v4026 = vld [vmem:[#allocation7 + $0xe4] sm:$0xf]
    %v4027 = vld [vmem:[#allocation7 + $0xe8] sm:$0xf]
    %v4028 = vld [vmem:[#allocation7 + $0xec] sm:$0xf]
    %v4029 = vld [vmem:[#allocation7 + $0xf0] sm:$0xf]
    %v4030 = vld [vmem:[#allocation7 + $0xf4] sm:$0xf]
    %v4031 = vld [vmem:[#allocation7 + $0xf8] sm:$0xf]
    %v4032 = vld [vmem:[#allocation7 + $0xfc] sm:$0xf]
    %v4033 = vlaneseq
    %v4034 = vshrl.u32 %v4033, 7
    %v4035 = vsub.s32 1, %v4034
    %v4036 = vrot.slane %v140, %v4035
    %v4101 = vunpack.c.l.b16 %v3969
    %v4102 = vunpack.c.l.b16 %v3970
    %v4103 = vunpack.c.l.b16 %v3971
    %v4104 = vunpack.c.l.b16 %v3972
    %v4105 = vunpack.c.l.b16 %v3973
    %v4106 = vunpack.c.l.b16 %v3974
    %v4107 = vunpack.c.l.b16 %v3975
    %v4108 = vunpack.c.l.b16 %v3976
    %v4109 = vunpack.c.l.b16 %v3977
    %v4110 = vunpack.c.l.b16 %v3978
    %v4111 = vunpack.c.l.b16 %v3979
    %v4112 = vunpack.c.l.b16 %v3980
    %v4113 = vunpack.c.l.b16 %v3981
    %v4114 = vunpack.c.l.b16 %v3982
    %v4115 = vunpack.c.l.b16 %v3983
    %v4116 = vunpack.c.l.b16 %v3984
    %v4117 = vunpack.c.l.b16 %v3985
    %v4118 = vunpack.c.l.b16 %v3986
    %v4119 = vunpack.c.l.b16 %v3987
    %v4120 = vunpack.c.l.b16 %v3988
    %v4121 = vunpack.c.l.b16 %v3989
    %v4122 = vunpack.c.l.b16 %v3990
    %v4123 = vunpack.c.l.b16 %v3991
    %v4124 = vunpack.c.l.b16 %v3992
    %v4125 = vunpack.c.l.b16 %v3993
    %v4126 = vunpack.c.l.b16 %v3994
    %v4127 = vunpack.c.l.b16 %v3995
    %v4128 = vunpack.c.l.b16 %v3996
    %v4129 = vunpack.c.l.b16 %v3997
    %v4130 = vunpack.c.l.b16 %v3998
    %v4131 = vunpack.c.l.b16 %v3999
    %v4132 = vunpack.c.l.b16 %v4000
    %v4133 = vunpack.c.l.b16 %v4001
    %v4134 = vunpack.c.l.b16 %v4002
    %v4135 = vunpack.c.l.b16 %v4003
    %v4136 = vunpack.c.l.b16 %v4004
    %v4137 = vunpack.c.l.b16 %v4005
    %v4138 = vunpack.c.l.b16 %v4006
    %v4139 = vunpack.c.l.b16 %v4007
    %v4140 = vunpack.c.l.b16 %v4008
    %v4141 = vunpack.c.l.b16 %v4009
    %v4142 = vunpack.c.l.b16 %v4010
    %v4143 = vunpack.c.l.b16 %v4011
    %v4144 = vunpack.c.l.b16 %v4012
    %v4145 = vunpack.c.l.b16 %v4013
    %v4146 = vunpack.c.l.b16 %v4014
    %v4147 = vunpack.c.l.b16 %v4015
    %v4148 = vunpack.c.l.b16 %v4016
    %v4149 = vunpack.c.l.b16 %v4017
    %v4150 = vunpack.c.l.b16 %v4018
    %v4151 = vunpack.c.l.b16 %v4019
    %v4152 = vunpack.c.l.b16 %v4020
    %v4153 = vunpack.c.l.b16 %v4021
    %v4154 = vunpack.c.l.b16 %v4022
    %v4155 = vunpack.c.l.b16 %v4023
    %v4156 = vunpack.c.l.b16 %v4024
    %v4157 = vunpack.c.l.b16 %v4025
    %v4158 = vunpack.c.l.b16 %v4026
    %v4159 = vunpack.c.l.b16 %v4027
    %v4160 = vunpack.c.l.b16 %v4028
    %v4161 = vunpack.c.l.b16 %v4029
    %v4162 = vunpack.c.l.b16 %v4030
    %v4163 = vunpack.c.l.b16 %v4031
    %v4164 = vunpack.c.l.b16 %v4032
    %v4165 = vpack.c.b16 %v4102, %v4101
    %v4166 = vpack.c.b16 %v4104, %v4103
    %v4167 = vpack.c.b16 %v4106, %v4105
    %v4168 = vpack.c.b16 %v4108, %v4107
    %v4169 = vpack.c.b16 %v4110, %v4109
    %v4170 = vpack.c.b16 %v4112, %v4111
    %v4171 = vpack.c.b16 %v4114, %v4113
    %v4172 = vpack.c.b16 %v4116, %v4115
    %v4173 = vpack.c.b16 %v4118, %v4117
    %v4174 = vpack.c.b16 %v4120, %v4119
    %v4175 = vpack.c.b16 %v4122, %v4121
    %v4176 = vpack.c.b16 %v4124, %v4123
    %v4177 = vpack.c.b16 %v4126, %v4125
    %v4178 = vpack.c.b16 %v4128, %v4127
    %v4179 = vpack.c.b16 %v4130, %v4129
    %v4180 = vpack.c.b16 %v4132, %v4131
    %v4181 = vpack.c.b16 %v4134, %v4133
    %v4182 = vpack.c.b16 %v4136, %v4135
    %v4183 = vpack.c.b16 %v4138, %v4137
    %v4184 = vpack.c.b16 %v4140, %v4139
    %v4185 = vpack.c.b16 %v4142, %v4141
    %v4186 = vpack.c.b16 %v4144, %v4143
    %v4187 = vpack.c.b16 %v4146, %v4145
    %v4188 = vpack.c.b16 %v4148, %v4147
    %v4189 = vpack.c.b16 %v4150, %v4149
    %v4190 = vpack.c.b16 %v4152, %v4151
    %v4191 = vpack.c.b16 %v4154, %v4153
    %v4192 = vpack.c.b16 %v4156, %v4155
    %v4193 = vpack.c.b16 %v4158, %v4157
    %v4194 = vpack.c.b16 %v4160, %v4159
    %v4195 = vpack.c.b16 %v4162, %v4161
    %v4196 = vpack.c.b16 %v4164, %v4163
    %4229 = vmatprep.subr.bf16.mxu0 0
    %4230 = vmatpush1.bf16.msra.mxu0 %v4165
    %4231 = vmatprep.subr.bf16.mxu0 0
    %4232 = vmatpush1.bf16.msra.mxu0 %v4166
    %4233 = vmatprep.subr.bf16.mxu0 0
    %4234 = vmatpush1.bf16.msra.mxu0 %v4167
    %4235 = vmatprep.subr.bf16.mxu0 0
    %4236 = vmatpush1.bf16.msra.mxu0 %v4168
    %4237 = vmatprep.subr.bf16.mxu0 0
    %4238 = vmatpush1.bf16.msra.mxu0 %v4169
    %4239 = vmatprep.subr.bf16.mxu0 0
    %4240 = vmatpush1.bf16.msra.mxu0 %v4170
    %4241 = vmatprep.subr.bf16.mxu0 0
    %4242 = vmatpush1.bf16.msra.mxu0 %v4171
    %4243 = vmatprep.subr.bf16.mxu0 0
    %4244 = vmatpush1.bf16.msra.mxu0 %v4172
    %4245 = vmatprep.subr.bf16.mxu0 0
    %4246 = vmatpush1.bf16.msra.mxu0 %v4173
    %4247 = vmatprep.subr.bf16.mxu0 0
    %4248 = vmatpush1.bf16.msra.mxu0 %v4174
    %4249 = vmatprep.subr.bf16.mxu0 0
    %4250 = vmatpush1.bf16.msra.mxu0 %v4175
    %4251 = vmatprep.subr.bf16.mxu0 0
    %4252 = vmatpush1.bf16.msra.mxu0 %v4176
    %4253 = vmatprep.subr.bf16.mxu0 0
    %4254 = vmatpush1.bf16.msra.mxu0 %v4177
    %4255 = vmatprep.subr.bf16.mxu0 0
    %4256 = vmatpush1.bf16.msra.mxu0 %v4178
    %4257 = vmatprep.subr.bf16.mxu0 0
    %4258 = vmatpush1.bf16.msra.mxu0 %v4179
    %4259 = vmatprep.subr.bf16.mxu0 0
    %4260 = vmatpush1.bf16.msra.mxu0 %v4180
    %4261 = vmatprep.mubr.bf16.mxu0 %v3966
    %4262 = vmatmul.mubr.bf16.gmra.mrb[0].mxu0 %v3965
    %v4263 = vpop.f32.mrb[0].mxu0
    %v4264 = vadd.f32 %v4036, %v4263
    %v4265 = vpop.f32.mrb[0].mxu0
    %v4266 = vpop.f32.mrb[0].mxu0
    %v4267 = vpop.f32.mrb[0].mxu0
    %4268 = vdwg.mxu0
    %4269 = vmatprep.subr.bf16.mxu0 0
    %4270 = vmatpush1.bf16.msra.mxu0 %v4181
    %4271 = vmatprep.subr.bf16.mxu0 0
    %4272 = vmatpush1.bf16.msra.mxu0 %v4182
    %4273 = vmatprep.subr.bf16.mxu0 0
    %4274 = vmatpush1.bf16.msra.mxu0 %v4183
    %4275 = vmatprep.subr.bf16.mxu0 0
    %4276 = vmatpush1.bf16.msra.mxu0 %v4184
    %4277 = vmatprep.subr.bf16.mxu0 0
    %4278 = vmatpush1.bf16.msra.mxu0 %v4185
    %4279 = vmatprep.subr.bf16.mxu0 0
    %4280 = vmatpush1.bf16.msra.mxu0 %v4186
    %4281 = vmatprep.subr.bf16.mxu0 0
    %4282 = vmatpush1.bf16.msra.mxu0 %v4187
    %4283 = vmatprep.subr.bf16.mxu0 0
    %4284 = vmatpush1.bf16.msra.mxu0 %v4188
    %4285 = vmatprep.subr.bf16.mxu0 0
    %4286 = vmatpush1.bf16.msra.mxu0 %v4189
    %4287 = vmatprep.subr.bf16.mxu0 0
    %4288 = vmatpush1.bf16.msra.mxu0 %v4190
    %4289 = vmatprep.subr.bf16.mxu0 0
    %4290 = vmatpush1.bf16.msra.mxu0 %v4191
    %4291 = vmatprep.subr.bf16.mxu0 0
    %4292 = vmatpush1.bf16.msra.mxu0 %v4192
    %4293 = vmatprep.subr.bf16.mxu0 0
    %4294 = vmatpush1.bf16.msra.mxu0 %v4193
    %4295 = vmatprep.subr.bf16.mxu0 0
    %4296 = vmatpush1.bf16.msra.mxu0 %v4194
    %4297 = vmatprep.subr.bf16.mxu0 0
    %4298 = vmatpush1.bf16.msra.mxu0 %v4195
    %4299 = vmatprep.subr.bf16.mxu0 0
    %4300 = vmatpush1.bf16.msra.mxu0 %v4196
    %4301 = vmatprep.mubr.bf16.mxu0 %v3968
    %4302 = vmatmul.mubr.bf16.gmra.mrb[0].mxu0 %v3967
    %v4303 = vpop.f32.mrb[0].mxu0
    %v4304 = vadd.f32 %v4264, %v4303
    %v4305 = vpop.f32.mrb[0].mxu0
    %v4306 = vpop.f32.mrb[0].mxu0
    %v4307 = vpop.f32.mrb[0].mxu0
    %4308 = vdwg.mxu0
    %vm4309 = vcmp.gt.f32.partialorder %v4304, 0.0
    %v4310 = vmul.f32 %v4304, 0.01
    %v4311 = vsel %vm4309, %v4304, %v4310
    %v4312 = vlaneseq
    %v4313 = vshrl.u32 %v4312, 7
    %v4314 = vsub.s32 2, %v4313
    %v4315 = vrot.slane %v140, %v4314
    %4316 = vmatprep.subr.mxu0 0.0
    %4317 = vmatpush1.msra.mxu0 %v102
    %4318 = vmatprep.subr.mxu0 0.0
    %4319 = vmatpush1.msra.mxu0 %v103
    %4320 = vmatprep.subr.mxu0 0.0
    %4321 = vmatpush1.msra.mxu0 %v104
    %4322 = vmatprep.subr.mxu0 0.0
    %4323 = vmatpush1.msra.mxu0 %v105
    %4324 = vmatprep.subr.mxu0 0.0
    %4325 = vmatpush1.msra.mxu0 %v106
    %4326 = vmatprep.subr.mxu0 0.0
    %4327 = vmatpush1.msra.mxu0 %v107
    %4328 = vmatprep.subr.mxu0 0.0
    %4329 = vmatpush1.msra.mxu0 %v108
    %4330 = vmatprep.subr.mxu0 0.0
    %4331 = vmatpush1.msra.mxu0 %v109
    %4332 = vmatprep.subr.mxu0 0.0
    %4333 = vmatpush1.msra.mxu0 %v110
    %4334 = vmatprep.subr.mxu0 0.0
    %4335 = vmatpush1.msra.mxu0 %v111
    %4336 = vmatprep.subr.mxu0 0.0
    %4337 = vmatpush1.msra.mxu0 %v112
    %4338 = vmatprep.subr.mxu0 0.0
    %4339 = vmatpush1.msra.mxu0 %v113
    %4340 = vmatprep.subr.mxu0 0.0
    %4341 = vmatpush1.msra.mxu0 %v114
    %4342 = vmatprep.subr.mxu0 0.0
    %4343 = vmatpush1.msra.mxu0 %v115
    %4344 = vmatprep.subr.mxu0 0.0
    %4345 = vmatpush1.msra.mxu0 %v116
    %4346 = vmatprep.subr.mxu0 0.0
    %4347 = vmatpush1.msra.mxu0 %v117
    %4348 = vmatprep.subr.mxu0 0.0
    %4349 = vmatpush1.msra.mxu0 0.0
    %4350 = vmatprep.subr.mxu0 0.0
    %4351 = vmatpush1.msra.mxu0 0.0
    %4352 = vmatprep.subr.mxu0 0.0
    %4353 = vmatpush1.msra.mxu0 0.0
    %4354 = vmatprep.subr.mxu0 0.0
    %4355 = vmatpush1.msra.mxu0 0.0
    %4356 = vmatprep.subr.mxu0 0.0
    %4357 = vmatpush1.msra.mxu0 0.0
    %4358 = vmatprep.subr.mxu0 0.0
    %4359 = vmatpush1.msra.mxu0 0.0
    %4360 = vmatprep.subr.mxu0 0.0
    %4361 = vmatpush1.msra.mxu0 0.0
    %4362 = vmatprep.subr.mxu0 0.0
    %4363 = vmatpush1.msra.mxu0 0.0
    %4364 = vmatprep.subr.mxu0 0.0
    %4365 = vmatpush1.msra.mxu0 0.0
    %4366 = vmatprep.subr.mxu0 0.0
    %4367 = vmatpush1.msra.mxu0 0.0
    %4368 = vmatprep.subr.mxu0 0.0
    %4369 = vmatpush1.msra.mxu0 0.0
    %4370 = vmatprep.subr.mxu0 0.0
    %4371 = vmatpush1.msra.mxu0 0.0
    %4372 = vmatprep.subr.mxu0 0.0
    %4373 = vmatpush1.msra.mxu0 0.0
    %4374 = vmatprep.subr.mxu0 0.0
    %4375 = vmatpush1.msra.mxu0 0.0
    %4376 = vmatprep.subr.mxu0 0.0
    %4377 = vmatpush1.msra.mxu0 0.0
    %4378 = vmatprep.subr.mxu0 0.0
    %4379 = vmatpush1.msra.mxu0 0.0
    %4380 = vmatprep.mubr.f32.mxu0 0.0
    %4381 = vmatmul.mubr.f32.gmra.mrb[0].mxu0 %v4311
    %v4382 = vpop.f32.mrb[0].mxu0
    %v4383 = vadd.f32 %v4315, %v4382
    %v4384 = vpop.f32.mrb[0].mxu0
    %4385 = vdwg.mxu0
    %vm4386 = vcmp.gt.f32.partialorder %v4383, 0.0
    %v4387 = vmul.f32 %v4383, 0.01
    %v4388 = vsel %vm4386, %v4383, %v4387
    %v4389 = vlaneseq
    %v4390 = vshrl.u32 %v4389, 7
    %v4391 = vsub.s32 3, %v4390
    %v4392 = vrot.slane %v140, %v4391
    %vm4393 = vcmask 244736
    %v4395 = vsel %vm4393, %v4388, 0
    %vm4397 = vcmask 1045504
    %v4399 = vsel %vm4397, %v121, 0
    %4401 = vmatprep.subr.mxu0 0.0
    %4402 = vmatpush1.msra.mxu0 %v118
    %4403 = vmatprep.subr.mxu0 0.0
    %4404 = vmatpush1.msra.mxu0 %v119
    %4405 = vmatprep.subr.mxu0 0.0
    %4406 = vmatpush1.msra.mxu0 %v120
    %4407 = vmatprep.subr.mxu0 0.0
    %4408 = vmatpush1.msra.mxu0 %v4399
    %4409 = vmatprep.subr.mxu0 0.0
    %4410 = vmatpush1.msra.mxu0 0.0
    %4411 = vmatprep.subr.mxu0 0.0
    %4412 = vmatpush1.msra.mxu0 0.0
    %4413 = vmatprep.subr.mxu0 0.0
    %4414 = vmatpush1.msra.mxu0 0.0
    %4415 = vmatprep.subr.mxu0 0.0
    %4416 = vmatpush1.msra.mxu0 0.0
    %4417 = vmatprep.subr.mxu0 0.0
    %4418 = vmatpush1.msra.mxu0 0.0
    %4419 = vmatprep.subr.mxu0 0.0
    %4420 = vmatpush1.msra.mxu0 0.0
    %4421 = vmatprep.subr.mxu0 0.0
    %4422 = vmatpush1.msra.mxu0 0.0
    %4423 = vmatprep.subr.mxu0 0.0
    %4424 = vmatpush1.msra.mxu0 0.0
    %4425 = vmatprep.subr.mxu0 0.0
    %4426 = vmatpush1.msra.mxu0 0.0
    %4427 = vmatprep.subr.mxu0 0.0
    %4428 = vmatpush1.msra.mxu0 0.0
    %4429 = vmatprep.subr.mxu0 0.0
    %4430 = vmatpush1.msra.mxu0 0.0
    %4431 = vmatprep.subr.mxu0 0.0
    %4432 = vmatpush1.msra.mxu0 0.0
    %4433 = vmatprep.subr.mxu0 0.0
    %4434 = vmatpush1.msra.mxu0 0.0
    %4435 = vmatprep.subr.mxu0 0.0
    %4436 = vmatpush1.msra.mxu0 0.0
    %4437 = vmatprep.subr.mxu0 0.0
    %4438 = vmatpush1.msra.mxu0 0.0
    %4439 = vmatprep.subr.mxu0 0.0
    %4440 = vmatpush1.msra.mxu0 0.0
    %4441 = vmatprep.subr.mxu0 0.0
    %4442 = vmatpush1.msra.mxu0 0.0
    %4443 = vmatprep.subr.mxu0 0.0
    %4444 = vmatpush1.msra.mxu0 0.0
    %4445 = vmatprep.subr.mxu0 0.0
    %4446 = vmatpush1.msra.mxu0 0.0
    %4447 = vmatprep.subr.mxu0 0.0
    %4448 = vmatpush1.msra.mxu0 0.0
    %4449 = vmatprep.subr.mxu0 0.0
    %4450 = vmatpush1.msra.mxu0 0.0
    %4451 = vmatprep.subr.mxu0 0.0
    %4452 = vmatpush1.msra.mxu0 0.0
    %4453 = vmatprep.subr.mxu0 0.0
    %4454 = vmatpush1.msra.mxu0 0.0
    %4455 = vmatprep.subr.mxu0 0.0
    %4456 = vmatpush1.msra.mxu0 0.0
    %4457 = vmatprep.subr.mxu0 0.0
    %4458 = vmatpush1.msra.mxu0 0.0
    %4459 = vmatprep.subr.mxu0 0.0
    %4460 = vmatpush1.msra.mxu0 0.0
    %4461 = vmatprep.subr.mxu0 0.0
    %4462 = vmatpush1.msra.mxu0 0.0
    %4463 = vmatprep.subr.mxu0 0.0
    %4464 = vmatpush1.msra.mxu0 0.0
    %4465 = vmatprep.mubr.f32.mxu0 0.0
    %4466 = vmatmul.mubr.f32.gmra.mrb[0].mxu0 %v4395
    %v4467 = vpop.f32.mrb[0].mxu0
    %v4468 = vadd.f32 %v4392, %v4467
    %v4469 = vpop.f32.mrb[0].mxu0
    %4470 = vdwg.mxu0
    %vm4471 = vcmp.gt.f32.partialorder %v4468, 0.0
    %v4472 = vmul.f32 %v4468, 0.01
    %v4473 = vsel %vm4471, %v4468, %v4472
    %v4474 = vld [vmem:[#allocation4] sm:$0xf]
    %v4475 = vlaneseq
    %v4476 = vshrl.u32 %v4475, 7
    %v4477 = vsub.s32 4, %v4476
    %v4478 = vrot.slane %v140, %v4477
    %vm4479 = vcmask 64512
    %v4481 = vsel %vm4479, %v4474, 0
    %4483 = vmatprep.subr.mxu0 0.0
    %4484 = vmatpush1.msra.mxu0 %v122
    %4485 = vmatprep.subr.mxu0 0.0
    %4486 = vmatpush1.msra.mxu0 0.0
    %4487 = vmatprep.subr.mxu0 0.0
    %4488 = vmatpush1.msra.mxu0 0.0
    %4489 = vmatprep.subr.mxu0 0.0
    %4490 = vmatpush1.msra.mxu0 0.0
    %4491 = vmatprep.subr.mxu0 0.0
    %4492 = vmatpush1.msra.mxu0 0.0
    %4493 = vmatprep.subr.mxu0 0.0
    %4494 = vmatpush1.msra.mxu0 0.0
    %4495 = vmatprep.subr.mxu0 0.0
    %4496 = vmatpush1.msra.mxu0 0.0
    %4497 = vmatprep.subr.mxu0 0.0
    %4498 = vmatpush1.msra.mxu0 0.0
    %4499 = vmatprep.subr.mxu0 0.0
    %4500 = vmatpush1.msra.mxu0 0.0
    %4501 = vmatprep.subr.mxu0 0.0
    %4502 = vmatpush1.msra.mxu0 0.0
    %4503 = vmatprep.subr.mxu0 0.0
    %4504 = vmatpush1.msra.mxu0 0.0
    %4505 = vmatprep.subr.mxu0 0.0
    %4506 = vmatpush1.msra.mxu0 0.0
    %4507 = vmatprep.subr.mxu0 0.0
    %4508 = vmatpush1.msra.mxu0 0.0
    %4509 = vmatprep.subr.mxu0 0.0
    %4510 = vmatpush1.msra.mxu0 0.0
    %4511 = vmatprep.subr.mxu0 0.0
    %4512 = vmatpush1.msra.mxu0 0.0
    %4513 = vmatprep.subr.mxu0 0.0
    %4514 = vmatpush1.msra.mxu0 0.0
    %4515 = vmatprep.subr.mxu0 0.0
    %4516 = vmatpush1.msra.mxu0 0.0
    %4517 = vmatprep.subr.mxu0 0.0
    %4518 = vmatpush1.msra.mxu0 0.0
    %4519 = vmatprep.subr.mxu0 0.0
    %4520 = vmatpush1.msra.mxu0 0.0
    %4521 = vmatprep.subr.mxu0 0.0
    %4522 = vmatpush1.msra.mxu0 0.0
    %4523 = vmatprep.subr.mxu0 0.0
    %4524 = vmatpush1.msra.mxu0 0.0
    %4525 = vmatprep.subr.mxu0 0.0
    %4526 = vmatpush1.msra.mxu0 0.0
    %4527 = vmatprep.subr.mxu0 0.0
    %4528 = vmatpush1.msra.mxu0 0.0
    %4529 = vmatprep.subr.mxu0 0.0
    %4530 = vmatpush1.msra.mxu0 0.0
    %4531 = vmatprep.subr.mxu0 0.0
    %4532 = vmatpush1.msra.mxu0 0.0
    %4533 = vmatprep.subr.mxu0 0.0
    %4534 = vmatpush1.msra.mxu0 0.0
    %4535 = vmatprep.subr.mxu0 0.0
    %4536 = vmatpush1.msra.mxu0 0.0
    %4537 = vmatprep.subr.mxu0 0.0
    %4538 = vmatpush1.msra.mxu0 0.0
    %4539 = vmatprep.subr.mxu0 0.0
    %4540 = vmatpush1.msra.mxu0 0.0
    %4541 = vmatprep.subr.mxu0 0.0
    %4542 = vmatpush1.msra.mxu0 0.0
    %4543 = vmatprep.subr.mxu0 0.0
    %4544 = vmatpush1.msra.mxu0 0.0
    %4545 = vmatprep.subr.mxu0 0.0
    %4546 = vmatpush1.msra.mxu0 0.0
    %4547 = vmatprep.mubr.f32.mxu0 0.0
    %4548 = vmatmul.mubr.f32.gmra.mrb[0].mxu0 %v4481
    %v4549 = vpop.f32.mrb[0].mxu0
    %v4550 = vadd.f32 %v4478, %v4549
    %v4551 = vpop.f32.mrb[0].mxu0
    %4552 = vdwg.mxu0
    %vm4553 = vcmp.gt.f32.partialorder %v4550, 0.0
    %v4554 = vmul.f32 %v4550, 0.01
    %v4555 = vsel %vm4553, %v4550, %v4554
    %v4556 = vlaneseq
    %v4557 = vshrl.u32 %v4556, 7
    %v4558 = vsub.s32 5, %v4557
    %v4559 = vrot.slane %v140, %v4558
    %v4560 = vmul.f32 %v4555, %v4559
    %v4561 = vlaneseq
    %v4562 = vshrl.u32 %v4561, 7
    %v4563 = vsub.s32 6, %v4562
    %v4564 = vrot.slane %v140, %v4563
    %v4565 = vadd.f32 %v4560, %v4564
    %v4566 = vlaneseq
    %v4567 = vshrl.u32 %v4566, 7
    %v4568 = vsub.s32 7, %v4567
    %v4569 = vrot.slane %v140, %v4568
    %v4571 = vsel %vm4479, %v4473, 0
    %v4574 = vsel %vm4479, %v4565, 0
    %4576 = vmatprep.subr.mxu0 0.0
    %4577 = vmatpush1.msra.mxu0 %v123
    %4578 = vmatprep.subr.mxu0 0.0
    %4579 = vmatpush1.msra.mxu0 0.0
    %4580 = vmatprep.subr.mxu0 0.0
    %4581 = vmatpush1.msra.mxu0 0.0
    %4582 = vmatprep.subr.mxu0 0.0
    %4583 = vmatpush1.msra.mxu0 0.0
    %4584 = vmatprep.subr.mxu0 0.0
    %4585 = vmatpush1.msra.mxu0 0.0
    %4586 = vmatprep.subr.mxu0 0.0
    %4587 = vmatpush1.msra.mxu0 0.0
    %4588 = vmatprep.subr.mxu0 0.0
    %4589 = vmatpush1.msra.mxu0 0.0
    %4590 = vmatprep.subr.mxu0 0.0
    %4591 = vmatpush1.msra.mxu0 0.0
    %4592 = vmatprep.subr.mxu0 0.0
    %4593 = vmatpush1.msra.mxu0 0.0
    %4594 = vmatprep.subr.mxu0 0.0
    %4595 = vmatpush1.msra.mxu0 0.0
    %4596 = vmatprep.subr.mxu0 0.0
    %4597 = vmatpush1.msra.mxu0 0.0
    %4598 = vmatprep.subr.mxu0 0.0
    %4599 = vmatpush1.msra.mxu0 0.0
    %4600 = vmatprep.subr.mxu0 0.0
    %4601 = vmatpush1.msra.mxu0 0.0
    %4602 = vmatprep.subr.mxu0 0.0
    %4603 = vmatpush1.msra.mxu0 0.0
    %4604 = vmatprep.subr.mxu0 0.0
    %4605 = vmatpush1.msra.mxu0 0.0
    %4606 = vmatprep.subr.mxu0 0.0
    %4607 = vmatpush1.msra.mxu0 0.0
    %4608 = vmatprep.subr.mxu0 0.0
    %4609 = vmatpush1.msra.mxu0 0.0
    %4610 = vmatprep.subr.mxu0 0.0
    %4611 = vmatpush1.msra.mxu0 0.0
    %4612 = vmatprep.subr.mxu0 0.0
    %4613 = vmatpush1.msra.mxu0 0.0
    %4614 = vmatprep.subr.mxu0 0.0
    %4615 = vmatpush1.msra.mxu0 0.0
    %4616 = vmatprep.subr.mxu0 0.0
    %4617 = vmatpush1.msra.mxu0 0.0
    %4618 = vmatprep.subr.mxu0 0.0
    %4619 = vmatpush1.msra.mxu0 0.0
    %4620 = vmatprep.subr.mxu0 0.0
    %4621 = vmatpush1.msra.mxu0 0.0
    %4622 = vmatprep.subr.mxu0 0.0
    %4623 = vmatpush1.msra.mxu0 0.0
    %4624 = vmatprep.subr.mxu0 0.0
    %4625 = vmatpush1.msra.mxu0 0.0
    %4626 = vmatprep.subr.mxu0 0.0
    %4627 = vmatpush1.msra.mxu0 0.0
    %4628 = vmatprep.subr.mxu0 0.0
    %4629 = vmatpush1.msra.mxu0 0.0
    %4630 = vmatprep.subr.mxu0 0.0
    %4631 = vmatpush1.msra.mxu0 0.0
    %4632 = vmatprep.subr.mxu0 0.0
    %4633 = vmatpush1.msra.mxu0 0.0
    %4634 = vmatprep.subr.mxu0 0.0
    %4635 = vmatpush1.msra.mxu0 0.0
    %4636 = vmatprep.subr.mxu0 0.0
    %4637 = vmatpush1.msra.mxu0 0.0
    %4638 = vmatprep.subr.mxu0 0.0
    %4639 = vmatpush1.msra.mxu0 0.0
    %4640 = vmatprep.mubr.f32.mxu0 0.0
    %4641 = vmatmul.mubr.f32.gmra.mrb[0].mxu0 %v4571
    %v4642 = vpop.f32.mrb[0].mxu0
    %v4643 = vadd.f32 %v4569, %v4642
    %v4644 = vpop.f32.mrb[0].mxu0
    %4645 = vmatprep.mubr.f32.mxu0 0.0
    %4646 = vmatmul.mubr.f32.gmra.mrb[0].mxu0 %v4574
    %v4647 = vpop.f32.mrb[0].mxu0
    %v4648 = vadd.f32 %v4569, %v4647
    %v4649 = vpop.f32.mrb[0].mxu0
    %4650 = vdwg.mxu0
    %4652 = vrot.lane.b32.xlu0 %v4643, 120
    %v4653 = vpop.permute.xlu0 %4652
    %v4655 = vrot.slane %v4643, 4
    %4658 = vrot.lane.b32.xlu0 %v4648, 8
    %v4659 = vpop.permute.xlu0 %4658
    %v4661 = vsel %vm4479, %v4653, %v4655
    %vm4662 = vcmask 130048
    %v4663 = vsel %vm4662, %v4661, %v4659
    %4664 = vrot.lane.b32.xlu0 %v4643, 112
    %v4665 = vpop.permute.xlu0 %4664
    %4667 = vrot.lane.b32.xlu0 %v4655, 120
    %v4668 = vpop.permute.xlu0 %4667
    %v4670 = vsel %vm4479, %v4665, %v4668
    %v4671 = vsel %vm4662, %v4670, %v4648
    %v4673 = vrot.slane %v4663, 4
    %vm4675 = vcmask 1043456
    %v4676 = vsel %vm4675, %v4663, %v4673
    %v4678 = vrot.slane %v4671, 4
    %v4680 = vsel %vm4675, %v4671, %v4678
    %4681 = vrot.lane.b32.xlu0 %v4643, 8
    %v4682 = vpop.permute.xlu0 %4681
    %4684 = vrot.lane.b32.xlu0 %v4643, 16
    %v4685 = vpop.permute.xlu0 %4684
    %4686 = vrot.lane.b32.xlu0 %v4648, 16
    %v4687 = vpop.permute.xlu0 %4686
    %v4690 = vsel %vm4479, %v4643, %v4682
    %v4691 = vsel %vm4479, %v4648, %v4659
    %v4692 = vsel %vm4662, %v4690, %v4685
    %v4693 = vsel %vm4662, %v4691, %v4687
    %v4694 = vmul.f32 %v4692, %v4676
    %v4695 = vmul.f32 %v4693, %v4663
    %vm4696 = vcmask 195584
    %v4698 = vsel %vm4696, %v4694, 0
    %v4701 = vsel %vm4696, %v4695, 0
    %4703 = vmatprep.subr.mxu0 0.0
    %4704 = vmatpush1.msra.mxu0 %v132
    %4705 = vmatprep.subr.mxu0 0.0
    %4706 = vmatpush1.msra.mxu0 %v133
    %4707 = vmatprep.subr.mxu0 0.0
    %4708 = vmatpush1.msra.mxu0 %v134
    %4709 = vmatprep.subr.mxu0 0.0
    %4710 = vmatpush1.msra.mxu0 0.0
    %4711 = vmatprep.subr.mxu0 0.0
    %4712 = vmatpush1.msra.mxu0 0.0
    %4713 = vmatprep.subr.mxu0 0.0
    %4714 = vmatpush1.msra.mxu0 0.0
    %4715 = vmatprep.subr.mxu0 0.0
    %4716 = vmatpush1.msra.mxu0 0.0
    %4717 = vmatprep.subr.mxu0 0.0
    %4718 = vmatpush1.msra.mxu0 0.0
    %4719 = vmatprep.subr.mxu0 0.0
    %4720 = vmatpush1.msra.mxu0 0.0
    %4721 = vmatprep.subr.mxu0 0.0
    %4722 = vmatpush1.msra.mxu0 0.0
    %4723 = vmatprep.subr.mxu0 0.0
    %4724 = vmatpush1.msra.mxu0 0.0
    %4725 = vmatprep.subr.mxu0 0.0
    %4726 = vmatpush1.msra.mxu0 0.0
    %4727 = vmatprep.subr.mxu0 0.0
    %4728 = vmatpush1.msra.mxu0 0.0
    %4729 = vmatprep.subr.mxu0 0.0
    %4730 = vmatpush1.msra.mxu0 0.0
    %4731 = vmatprep.subr.mxu0 0.0
    %4732 = vmatpush1.msra.mxu0 0.0
    %4733 = vmatprep.subr.mxu0 0.0
    %4734 = vmatpush1.msra.mxu0 0.0
    %4735 = vmatprep.subr.mxu0 0.0
    %4736 = vmatpush1.msra.mxu0 0.0
    %4737 = vmatprep.subr.mxu0 0.0
    %4738 = vmatpush1.msra.mxu0 0.0
    %4739 = vmatprep.subr.mxu0 0.0
    %4740 = vmatpush1.msra.mxu0 0.0
    %4741 = vmatprep.subr.mxu0 0.0
    %4742 = vmatpush1.msra.mxu0 0.0
    %4743 = vmatprep.subr.mxu0 0.0
    %4744 = vmatpush1.msra.mxu0 0.0
    %4745 = vmatprep.subr.mxu0 0.0
    %4746 = vmatpush1.msra.mxu0 0.0
    %4747 = vmatprep.subr.mxu0 0.0
    %4748 = vmatpush1.msra.mxu0 0.0
    %4749 = vmatprep.subr.mxu0 0.0
    %4750 = vmatpush1.msra.mxu0 0.0
    %4751 = vmatprep.subr.mxu0 0.0
    %4752 = vmatpush1.msra.mxu0 0.0
    %4753 = vmatprep.subr.mxu0 0.0
    %4754 = vmatpush1.msra.mxu0 0.0
    %4755 = vmatprep.subr.mxu0 0.0
    %4756 = vmatpush1.msra.mxu0 0.0
    %4757 = vmatprep.subr.mxu0 0.0
    %4758 = vmatpush1.msra.mxu0 0.0
    %4759 = vmatprep.subr.mxu0 0.0
    %4760 = vmatpush1.msra.mxu0 0.0
    %4761 = vmatprep.subr.mxu0 0.0
    %4762 = vmatpush1.msra.mxu0 0.0
    %4763 = vmatprep.subr.mxu0 0.0
    %4764 = vmatpush1.msra.mxu0 0.0
    %4765 = vmatprep.subr.mxu0 0.0
    %4766 = vmatpush1.msra.mxu0 0.0
    %4767 = vmatprep.mubr.f32.mxu0 0.0
    %4768 = vmatmul.mubr.f32.gmra.mrb[0].mxu0 %v4698
    %v4769 = vpop.f32.mrb[0].mxu0
    %v4770 = vadd.f32 0.0, %v4769
    %v4771 = vpop.f32.mrb[0].mxu0
    %4772 = vmatprep.mubr.f32.mxu0 0.0
    %4773 = vmatmul.mubr.f32.gmra.mrb[0].mxu0 %v4701
    %v4774 = vpop.f32.mrb[0].mxu0
    %v4775 = vadd.f32 0.0, %v4774
    %v4776 = vpop.f32.mrb[0].mxu0
    %4777 = vdwg.mxu0
    %v4778 = vmul.f32 %v4770, 0.5
    %v4779 = vmul.f32 %v4775, 0.5
    %4782 = vrot.lane.b32.xlu0 %v4778, 126
    %v4783 = vpop.permute.xlu0 %4782
    %4784 = vrot.lane.b32.xlu0 %v4779, 126
    %v4785 = vpop.permute.xlu0 %4784
    %v4788 = vmax.f32 %v4778, %v4783
    %v4789 = vmax.f32 %v4779, %v4785
    %4790 = vrot.lane.b32.xlu0 %v4778, 124
    %v4791 = vpop.permute.xlu0 %4790
    %4792 = vrot.lane.b32.xlu0 %v4779, 124
    %v4793 = vpop.permute.xlu0 %4792
    %v4796 = vmax.f32 %v4788, %v4791
    %v4797 = vmax.f32 %v4789, %v4793
    %4800 = vrot.lane.b32.xlu0 %v4796, 2
    %v4801 = vpop.permute.xlu0 %4800
    %4802 = vrot.lane.b32.xlu0 %v4797, 2
    %v4803 = vpop.permute.xlu0 %4802
    %4806 = vrot.lane.b32.xlu0 %v4796, 4
    %v4807 = vpop.permute.xlu0 %4806
    %4808 = vrot.lane.b32.xlu0 %v4797, 4
    %v4809 = vpop.permute.xlu0 %4808
    %vm4812 = vcmask 15360
    %v4813 = vsel %vm4812, %v4796, %v4801
    %v4814 = vsel %vm4812, %v4797, %v4803
    %vm4815 = vcmask 31744
    %v4816 = vsel %vm4815, %v4813, %v4807
    %v4817 = vsel %vm4815, %v4814, %v4809
    %v4818 = vsub.f32 %v4778, %v4816
    %v4819 = vsub.f32 %v4779, %v4817
    %v4820 = vmul.f32 %v4818, 1.442695
    %v4821 = vpow.pop %v4820
    %v4822 = vmul.f32 %v4819, 1.442695
    %v4823 = vpow.pop %v4822
    %4826 = vrot.lane.b32.xlu0 %v4821, 126
    %v4827 = vpop.permute.xlu0 %4826
    %4828 = vrot.lane.b32.xlu0 %v4823, 126
    %v4829 = vpop.permute.xlu0 %4828
    %v4832 = vadd.f32 %v4821, %v4827
    %v4833 = vadd.f32 %v4823, %v4829
    %4834 = vrot.lane.b32.xlu0 %v4821, 124
    %v4835 = vpop.permute.xlu0 %4834
    %4836 = vrot.lane.b32.xlu0 %v4823, 124
    %v4837 = vpop.permute.xlu0 %4836
    %v4840 = vadd.f32 %v4832, %v4835
    %v4841 = vadd.f32 %v4833, %v4837
    %vm4842 = vcmask 48128
    %v4843 = vsel %vm4842, %v4821, 0
    %v4845 = vsel %vm4842, %v4823, 0
    %v4848 = vsel %vm4397, %v135, 0
    %4850 = vmatprep.subr.mxu0 0.0
    %4851 = vmatpush1.msra.mxu0 %v4848
    %4852 = vmatprep.subr.mxu0 0.0
    %4853 = vmatpush1.msra.mxu0 0.0
    %4854 = vmatprep.subr.mxu0 0.0
    %4855 = vmatpush1.msra.mxu0 0.0
    %4856 = vmatprep.subr.mxu0 0.0
    %4857 = vmatpush1.msra.mxu0 0.0
    %4858 = vmatprep.subr.mxu0 0.0
    %4859 = vmatpush1.msra.mxu0 0.0
    %4860 = vmatprep.subr.mxu0 0.0
    %4861 = vmatpush1.msra.mxu0 0.0
    %4862 = vmatprep.subr.mxu0 0.0
    %4863 = vmatpush1.msra.mxu0 0.0
    %4864 = vmatprep.subr.mxu0 0.0
    %4865 = vmatpush1.msra.mxu0 0.0
    %4866 = vmatprep.subr.mxu0 0.0
    %4867 = vmatpush1.msra.mxu0 0.0
    %4868 = vmatprep.subr.mxu0 0.0
    %4869 = vmatpush1.msra.mxu0 0.0
    %4870 = vmatprep.subr.mxu0 0.0
    %4871 = vmatpush1.msra.mxu0 0.0
    %4872 = vmatprep.subr.mxu0 0.0
    %4873 = vmatpush1.msra.mxu0 0.0
    %4874 = vmatprep.subr.mxu0 0.0
    %4875 = vmatpush1.msra.mxu0 0.0
    %4876 = vmatprep.subr.mxu0 0.0
    %4877 = vmatpush1.msra.mxu0 0.0
    %4878 = vmatprep.subr.mxu0 0.0
    %4879 = vmatpush1.msra.mxu0 0.0
    %4880 = vmatprep.subr.mxu0 0.0
    %4881 = vmatpush1.msra.mxu0 0.0
    %4882 = vmatprep.subr.mxu0 0.0
    %4883 = vmatpush1.msra.mxu0 0.0
    %4884 = vmatprep.subr.mxu0 0.0
    %4885 = vmatpush1.msra.mxu0 0.0
    %4886 = vmatprep.subr.mxu0 0.0
    %4887 = vmatpush1.msra.mxu0 0.0
    %4888 = vmatprep.subr.mxu0 0.0
    %4889 = vmatpush1.msra.mxu0 0.0
    %4890 = vmatprep.subr.mxu0 0.0
    %4891 = vmatpush1.msra.mxu0 0.0
    %4892 = vmatprep.subr.mxu0 0.0
    %4893 = vmatpush1.msra.mxu0 0.0
    %4894 = vmatprep.subr.mxu0 0.0
    %4895 = vmatpush1.msra.mxu0 0.0
    %4896 = vmatprep.subr.mxu0 0.0
    %4897 = vmatpush1.msra.mxu0 0.0
    %4898 = vmatprep.subr.mxu0 0.0
    %4899 = vmatpush1.msra.mxu0 0.0
    %4900 = vmatprep.subr.mxu0 0.0
    %4901 = vmatpush1.msra.mxu0 0.0
    %4902 = vmatprep.subr.mxu0 0.0
    %4903 = vmatpush1.msra.mxu0 0.0
    %4904 = vmatprep.subr.mxu0 0.0
    %4905 = vmatpush1.msra.mxu0 0.0
    %4906 = vmatprep.subr.mxu0 0.0
    %4907 = vmatpush1.msra.mxu0 0.0
    %4908 = vmatprep.subr.mxu0 0.0
    %4909 = vmatpush1.msra.mxu0 0.0
    %4910 = vmatprep.subr.mxu0 0.0
    %4911 = vmatpush1.msra.mxu0 0.0
    %4912 = vmatprep.subr.mxu0 0.0
    %4913 = vmatpush1.msra.mxu0 0.0
    %4914 = vmatprep.mubr.f32.mxu0 0.0
    %4915 = vmatmul.mubr.f32.gmra.mrb[0].mxu0 %v4843
    %v4916 = vpop.f32.mrb[0].mxu0
    %v4917 = vadd.f32 0.0, %v4916
    %v4918 = vpop.f32.mrb[0].mxu0
    %4919 = vmatprep.mubr.f32.mxu0 0.0
    %4920 = vmatmul.mubr.f32.gmra.mrb[0].mxu0 %v4845
    %v4921 = vpop.f32.mrb[0].mxu0
    %v4922 = vadd.f32 0.0, %v4921
    %v4923 = vpop.f32.mrb[0].mxu0
    %4924 = vdwg.mxu0
    %v4925 = vmul.f32 %v4917, %v4680
    %v4926 = vmul.f32 %v4922, %v4671
    %v4928 = vsel %vm4696, %v4925, 0
    %v4931 = vsel %vm4696, %v4926, 0
    %4933 = vmatprep.subr.mxu0 0.0
    %4934 = vmatpush1.msra.mxu0 %v136
    %4935 = vmatprep.subr.mxu0 0.0
    %4936 = vmatpush1.msra.mxu0 %v137
    %4937 = vmatprep.subr.mxu0 0.0
    %4938 = vmatpush1.msra.mxu0 %v138
    %4939 = vmatprep.subr.mxu0 0.0
    %4940 = vmatpush1.msra.mxu0 0.0
    %4941 = vmatprep.subr.mxu0 0.0
    %4942 = vmatpush1.msra.mxu0 0.0
    %4943 = vmatprep.subr.mxu0 0.0
    %4944 = vmatpush1.msra.mxu0 0.0
    %4945 = vmatprep.subr.mxu0 0.0
    %4946 = vmatpush1.msra.mxu0 0.0
    %4947 = vmatprep.subr.mxu0 0.0
    %4948 = vmatpush1.msra.mxu0 0.0
    %4949 = vmatprep.subr.mxu0 0.0
    %4950 = vmatpush1.msra.mxu0 0.0
    %4951 = vmatprep.subr.mxu0 0.0
    %4952 = vmatpush1.msra.mxu0 0.0
    %4953 = vmatprep.subr.mxu0 0.0
    %4954 = vmatpush1.msra.mxu0 0.0
    %4955 = vmatprep.subr.mxu0 0.0
    %4956 = vmatpush1.msra.mxu0 0.0
    %4957 = vmatprep.subr.mxu0 0.0
    %4958 = vmatpush1.msra.mxu0 0.0
    %4959 = vmatprep.subr.mxu0 0.0
    %4960 = vmatpush1.msra.mxu0 0.0
    %4961 = vmatprep.subr.mxu0 0.0
    %4962 = vmatpush1.msra.mxu0 0.0
    %4963 = vmatprep.subr.mxu0 0.0
    %4964 = vmatpush1.msra.mxu0 0.0
    %4965 = vmatprep.subr.mxu0 0.0
    %4966 = vmatpush1.msra.mxu0 0.0
    %4967 = vmatprep.subr.mxu0 0.0
    %4968 = vmatpush1.msra.mxu0 0.0
    %4969 = vmatprep.subr.mxu0 0.0
    %4970 = vmatpush1.msra.mxu0 0.0
    %4971 = vmatprep.subr.mxu0 0.0
    %4972 = vmatpush1.msra.mxu0 0.0
    %4973 = vmatprep.subr.mxu0 0.0
    %4974 = vmatpush1.msra.mxu0 0.0
    %4975 = vmatprep.subr.mxu0 0.0
    %4976 = vmatpush1.msra.mxu0 0.0
    %4977 = vmatprep.subr.mxu0 0.0
    %4978 = vmatpush1.msra.mxu0 0.0
    %4979 = vmatprep.subr.mxu0 0.0
    %4980 = vmatpush1.msra.mxu0 0.0
    %4981 = vmatprep.subr.mxu0 0.0
    %4982 = vmatpush1.msra.mxu0 0.0
    %4983 = vmatprep.subr.mxu0 0.0
    %4984 = vmatpush1.msra.mxu0 0.0
    %4985 = vmatprep.subr.mxu0 0.0
    %4986 = vmatpush1.msra.mxu0 0.0
    %4987 = vmatprep.subr.mxu0 0.0
    %4988 = vmatpush1.msra.mxu0 0.0
    %4989 = vmatprep.subr.mxu0 0.0
    %4990 = vmatpush1.msra.mxu0 0.0
    %4991 = vmatprep.subr.mxu0 0.0
    %4992 = vmatpush1.msra.mxu0 0.0
    %4993 = vmatprep.subr.mxu0 0.0
    %4994 = vmatpush1.msra.mxu0 0.0
    %4995 = vmatprep.subr.mxu0 0.0
    %4996 = vmatpush1.msra.mxu0 0.0
    %4997 = vmatprep.mubr.f32.mxu0 0.0
    %4998 = vmatmul.mubr.f32.gmra.mrb[0].mxu0 %v4928
    %v4999 = vpop.f32.mrb[0].mxu0
    %v5000 = vadd.f32 0.0, %v4999
    %v5001 = vpop.f32.mrb[0].mxu0
    %5002 = vmatprep.mubr.f32.mxu0 0.0
    %5003 = vmatmul.mubr.f32.gmra.mrb[0].mxu0 %v4931
    %v5004 = vpop.f32.mrb[0].mxu0
    %v5005 = vadd.f32 0.0, %v5004
    %v5006 = vpop.f32.mrb[0].mxu0
    %5007 = vdwg.mxu0
    %v5009 = vsel %vm4812, %v4840, 0
    %v5012 = vsel %vm4812, %v4841, 0
    %vm5014 = vcmask 1041408
    %v5016 = vsel %vm5014, %v139, 0
    %5018 = vmatprep.subr.mxu0 0.0
    %5019 = vmatpush1.msra.mxu0 %v5016
    %5020 = vmatprep.subr.mxu0 0.0
    %5021 = vmatpush1.msra.mxu0 0.0
    %5022 = vmatprep.subr.mxu0 0.0
    %5023 = vmatpush1.msra.mxu0 0.0
    %5024 = vmatprep.subr.mxu0 0.0
    %5025 = vmatpush1.msra.mxu0 0.0
    %5026 = vmatprep.subr.mxu0 0.0
    %5027 = vmatpush1.msra.mxu0 0.0
    %5028 = vmatprep.subr.mxu0 0.0
    %5029 = vmatpush1.msra.mxu0 0.0
    %5030 = vmatprep.subr.mxu0 0.0
    %5031 = vmatpush1.msra.mxu0 0.0
    %5032 = vmatprep.subr.mxu0 0.0
    %5033 = vmatpush1.msra.mxu0 0.0
    %5034 = vmatprep.subr.mxu0 0.0
    %5035 = vmatpush1.msra.mxu0 0.0
    %5036 = vmatprep.subr.mxu0 0.0
    %5037 = vmatpush1.msra.mxu0 0.0
    %5038 = vmatprep.subr.mxu0 0.0
    %5039 = vmatpush1.msra.mxu0 0.0
    %5040 = vmatprep.subr.mxu0 0.0
    %5041 = vmatpush1.msra.mxu0 0.0
    %5042 = vmatprep.subr.mxu0 0.0
    %5043 = vmatpush1.msra.mxu0 0.0
    %5044 = vmatprep.subr.mxu0 0.0
    %5045 = vmatpush1.msra.mxu0 0.0
    %5046 = vmatprep.subr.mxu0 0.0
    %5047 = vmatpush1.msra.mxu0 0.0
    %5048 = vmatprep.subr.mxu0 0.0
    %5049 = vmatpush1.msra.mxu0 0.0
    %5050 = vmatprep.subr.mxu0 0.0
    %5051 = vmatpush1.msra.mxu0 0.0
    %5052 = vmatprep.subr.mxu0 0.0
    %5053 = vmatpush1.msra.mxu0 0.0
    %5054 = vmatprep.subr.mxu0 0.0
    %5055 = vmatpush1.msra.mxu0 0.0
    %5056 = vmatprep.subr.mxu0 0.0
    %5057 = vmatpush1.msra.mxu0 0.0
    %5058 = vmatprep.subr.mxu0 0.0
    %5059 = vmatpush1.msra.mxu0 0.0
    %5060 = vmatprep.subr.mxu0 0.0
    %5061 = vmatpush1.msra.mxu0 0.0
    %5062 = vmatprep.subr.mxu0 0.0
    %5063 = vmatpush1.msra.mxu0 0.0
    %5064 = vmatprep.subr.mxu0 0.0
    %5065 = vmatpush1.msra.mxu0 0.0
    %5066 = vmatprep.subr.mxu0 0.0
    %5067 = vmatpush1.msra.mxu0 0.0
    %5068 = vmatprep.subr.mxu0 0.0
    %5069 = vmatpush1.msra.mxu0 0.0
    %5070 = vmatprep.subr.mxu0 0.0
    %5071 = vmatpush1.msra.mxu0 0.0
    %5072 = vmatprep.subr.mxu0 0.0
    %5073 = vmatpush1.msra.mxu0 0.0
    %5074 = vmatprep.subr.mxu0 0.0
    %5075 = vmatpush1.msra.mxu0 0.0
    %5076 = vmatprep.subr.mxu0 0.0
    %5077 = vmatpush1.msra.mxu0 0.0
    %5078 = vmatprep.subr.mxu0 0.0
    %5079 = vmatpush1.msra.mxu0 0.0
    %5080 = vmatprep.subr.mxu0 0.0
    %5081 = vmatpush1.msra.mxu0 0.0
    %5082 = vmatprep.mubr.f32.mxu0 0.0
    %5083 = vmatmul.mubr.f32.gmra.mrb[0].mxu0 %v5009
    %v5084 = vpop.f32.mrb[0].mxu0
    %v5085 = vadd.f32 0.0, %v5084
    %v5086 = vpop.f32.mrb[0].mxu0
    %5087 = vmatprep.mubr.f32.mxu0 0.0
    %5088 = vmatmul.mubr.f32.gmra.mrb[0].mxu0 %v5012
    %v5089 = vpop.f32.mrb[0].mxu0
    %v5090 = vadd.f32 0.0, %v5089
    %v5091 = vpop.f32.mrb[0].mxu0
    %5092 = vdwg.mxu0
    %v5093 = vrcp.pop %v5085
    %v5094 = vmul.f32 %v5000, %v5093
    %v5095 = vrcp.pop %v5090
    %v5096 = vmul.f32 %v5005, %v5095
    %v5097 = vlaneseq
    %v5098 = vshrl.u32 %v5097, 7
    %v5099 = vsub.s32 0, %v5098
    %v5100 = vrot.slane %v144, %v5099
    %v5102 = vsel %vm4479, %v5094, 0
    %v5105 = vsel %vm4479, %v5096, 0
    %5107 = vmatprep.subr.mxu0 0.0
    %5108 = vmatpush1.msra.mxu0 %v124
    %5109 = vmatprep.subr.mxu0 0.0
    %5110 = vmatpush1.msra.mxu0 0.0
    %5111 = vmatprep.subr.mxu0 0.0
    %5112 = vmatpush1.msra.mxu0 0.0
    %5113 = vmatprep.subr.mxu0 0.0
    %5114 = vmatpush1.msra.mxu0 0.0
    %5115 = vmatprep.subr.mxu0 0.0
    %5116 = vmatpush1.msra.mxu0 0.0
    %5117 = vmatprep.subr.mxu0 0.0
    %5118 = vmatpush1.msra.mxu0 0.0
    %5119 = vmatprep.subr.mxu0 0.0
    %5120 = vmatpush1.msra.mxu0 0.0
    %5121 = vmatprep.subr.mxu0 0.0
    %5122 = vmatpush1.msra.mxu0 0.0
    %5123 = vmatprep.subr.mxu0 0.0
    %5124 = vmatpush1.msra.mxu0 0.0
    %5125 = vmatprep.subr.mxu0 0.0
    %5126 = vmatpush1.msra.mxu0 0.0
    %5127 = vmatprep.subr.mxu0 0.0
    %5128 = vmatpush1.msra.mxu0 0.0
    %5129 = vmatprep.subr.mxu0 0.0
    %5130 = vmatpush1.msra.mxu0 0.0
    %5131 = vmatprep.subr.mxu0 0.0
    %5132 = vmatpush1.msra.mxu0 0.0
    %5133 = vmatprep.subr.mxu0 0.0
    %5134 = vmatpush1.msra.mxu0 0.0
    %5135 = vmatprep.subr.mxu0 0.0
    %5136 = vmatpush1.msra.mxu0 0.0
    %5137 = vmatprep.subr.mxu0 0.0
    %5138 = vmatpush1.msra.mxu0 0.0
    %5139 = vmatprep.subr.mxu0 0.0
    %5140 = vmatpush1.msra.mxu0 0.0
    %5141 = vmatprep.subr.mxu0 0.0
    %5142 = vmatpush1.msra.mxu0 0.0
    %5143 = vmatprep.subr.mxu0 0.0
    %5144 = vmatpush1.msra.mxu0 0.0
    %5145 = vmatprep.subr.mxu0 0.0
    %5146 = vmatpush1.msra.mxu0 0.0
    %5147 = vmatprep.subr.mxu0 0.0
    %5148 = vmatpush1.msra.mxu0 0.0
    %5149 = vmatprep.subr.mxu0 0.0
    %5150 = vmatpush1.msra.mxu0 0.0
    %5151 = vmatprep.subr.mxu0 0.0
    %5152 = vmatpush1.msra.mxu0 0.0
    %5153 = vmatprep.subr.mxu0 0.0
    %5154 = vmatpush1.msra.mxu0 0.0
    %5155 = vmatprep.subr.mxu0 0.0
    %5156 = vmatpush1.msra.mxu0 0.0
    %5157 = vmatprep.subr.mxu0 0.0
    %5158 = vmatpush1.msra.mxu0 0.0
    %5159 = vmatprep.subr.mxu0 0.0
    %5160 = vmatpush1.msra.mxu0 0.0
    %5161 = vmatprep.subr.mxu0 0.0
    %5162 = vmatpush1.msra.mxu0 0.0
    %5163 = vmatprep.subr.mxu0 0.0
    %5164 = vmatpush1.msra.mxu0 0.0
    %5165 = vmatprep.subr.mxu0 0.0
    %5166 = vmatpush1.msra.mxu0 0.0
    %5167 = vmatprep.subr.mxu0 0.0
    %5168 = vmatpush1.msra.mxu0 0.0
    %5169 = vmatprep.subr.mxu0 0.0
    %5170 = vmatpush1.msra.mxu0 0.0
    %5171 = vmatprep.mubr.f32.mxu0 0.0
    %5172 = vmatmul.mubr.f32.gmra.mrb[0].mxu0 %v5102
    %v5173 = vpop.f32.mrb[0].mxu0
    %v5174 = vadd.f32 %v5100, %v5173
    %v5175 = vpop.f32.mrb[0].mxu0
    %5176 = vmatprep.mubr.f32.mxu0 0.0
    %5177 = vmatmul.mubr.f32.gmra.mrb[0].mxu0 %v5105
    %v5178 = vpop.f32.mrb[0].mxu0
    %v5179 = vadd.f32 %v5100, %v5178
    %v5180 = vpop.f32.mrb[0].mxu0
    %5181 = vdwg.mxu0
    %v5182 = vadd.f32 %v4473, %v5174
    %v5183 = vadd.f32 %v4565, %v5179
    %v5184 = vsel %vm4479, %v5182, 0.0
    %5185 = vadd.xlane.f32.xlu0 %v5184
    %v5186 = vpop.xlane.xlu0 %5185
    %vm5187 = vcmask 60416
    %v5188 = vsel %vm5187, %v5183, 0.0
    %5189 = vadd.xlane.f32.xlu0 %v5188
    %v5190 = vpop.xlane.xlu0 %5189
    %v5191 = vrcp.pop 8.0
    %v5192 = vmul.f32 %v5186, %v5191
    %v5193 = vmul.f32 %v5190, %v5191
    %v5194 = vsub.f32 %v5182, %v5192
    %v5195 = vsub.f32 %v5183, %v5193
    %v5196 = vmul.f32 %v5194, %v5194
    %v5197 = vmul.f32 %v5195, %v5195
    %v5198 = vsel %vm4479, %v5196, 0.0
    %5199 = vadd.xlane.f32.xlu0 %v5198
    %v5200 = vpop.xlane.xlu0 %5199
    %v5201 = vsel %vm5187, %v5197, 0.0
    %5202 = vadd.xlane.f32.xlu0 %v5201
    %v5203 = vpop.xlane.xlu0 %5202
    %v5204 = vmul.f32 %v5200, %v5191
    %v5205 = vmul.f32 %v5203, %v5191
    %v5206 = vadd.f32 %v5204, 1e-05
    %v5207 = vadd.f32 %v5205, 1e-05
    %v5208 = vrsqrt.pop %v5206
    %v5209 = vrsqrt.pop %v5207
    %v5210 = vmul.f32 %v5194, %v5208
    %v5211 = vmul.f32 %v5195, %v5209
    %v5212 = vlaneseq
    %v5213 = vshrl.u32 %v5212, 7
    %v5214 = vsub.s32 1, %v5213
    %v5215 = vrot.slane %v144, %v5214
    %v5216 = vmul.f32 %v5210, %v5215
    %v5217 = vmul.f32 %v5211, %v5215
    %v5218 = vlaneseq
    %v5219 = vshrl.u32 %v5218, 7
    %v5220 = vsub.s32 2, %v5219
    %v5221 = vrot.slane %v144, %v5220
    %v5222 = vadd.f32 %v5216, %v5221
    %v5223 = vadd.f32 %v5217, %v5221
    %v5224 = vlaneseq
    %v5225 = vshrl.u32 %v5224, 7
    %v5226 = vsub.s32 3, %v5225
    %v5227 = vrot.slane %v144, %v5226
    %v5229 = vsel %vm4479, %v5222, 0
    %v5232 = vsel %vm4479, %v5223, 0
    %5234 = vmatprep.subr.mxu0 0.0
    %5235 = vmatpush1.msra.mxu0 %v125
    %5236 = vmatprep.subr.mxu0 0.0
    %5237 = vmatpush1.msra.mxu0 0.0
    %5238 = vmatprep.subr.mxu0 0.0
    %5239 = vmatpush1.msra.mxu0 0.0
    %5240 = vmatprep.subr.mxu0 0.0
    %5241 = vmatpush1.msra.mxu0 0.0
    %5242 = vmatprep.subr.mxu0 0.0
    %5243 = vmatpush1.msra.mxu0 0.0
    %5244 = vmatprep.subr.mxu0 0.0
    %5245 = vmatpush1.msra.mxu0 0.0
    %5246 = vmatprep.subr.mxu0 0.0
    %5247 = vmatpush1.msra.mxu0 0.0
    %5248 = vmatprep.subr.mxu0 0.0
    %5249 = vmatpush1.msra.mxu0 0.0
    %5250 = vmatprep.subr.mxu0 0.0
    %5251 = vmatpush1.msra.mxu0 0.0
    %5252 = vmatprep.subr.mxu0 0.0
    %5253 = vmatpush1.msra.mxu0 0.0
    %5254 = vmatprep.subr.mxu0 0.0
    %5255 = vmatpush1.msra.mxu0 0.0
    %5256 = vmatprep.subr.mxu0 0.0
    %5257 = vmatpush1.msra.mxu0 0.0
    %5258 = vmatprep.subr.mxu0 0.0
    %5259 = vmatpush1.msra.mxu0 0.0
    %5260 = vmatprep.subr.mxu0 0.0
    %5261 = vmatpush1.msra.mxu0 0.0
    %5262 = vmatprep.subr.mxu0 0.0
    %5263 = vmatpush1.msra.mxu0 0.0
    %5264 = vmatprep.subr.mxu0 0.0
    %5265 = vmatpush1.msra.mxu0 0.0
    %5266 = vmatprep.subr.mxu0 0.0
    %5267 = vmatpush1.msra.mxu0 0.0
    %5268 = vmatprep.subr.mxu0 0.0
    %5269 = vmatpush1.msra.mxu0 0.0
    %5270 = vmatprep.subr.mxu0 0.0
    %5271 = vmatpush1.msra.mxu0 0.0
    %5272 = vmatprep.subr.mxu0 0.0
    %5273 = vmatpush1.msra.mxu0 0.0
    %5274 = vmatprep.subr.mxu0 0.0
    %5275 = vmatpush1.msra.mxu0 0.0
    %5276 = vmatprep.subr.mxu0 0.0
    %5277 = vmatpush1.msra.mxu0 0.0
    %5278 = vmatprep.subr.mxu0 0.0
    %5279 = vmatpush1.msra.mxu0 0.0
    %5280 = vmatprep.subr.mxu0 0.0
    %5281 = vmatpush1.msra.mxu0 0.0
    %5282 = vmatprep.subr.mxu0 0.0
    %5283 = vmatpush1.msra.mxu0 0.0
    %5284 = vmatprep.subr.mxu0 0.0
    %5285 = vmatpush1.msra.mxu0 0.0
    %5286 = vmatprep.subr.mxu0 0.0
    %5287 = vmatpush1.msra.mxu0 0.0
    %5288 = vmatprep.subr.mxu0 0.0
    %5289 = vmatpush1.msra.mxu0 0.0
    %5290 = vmatprep.subr.mxu0 0.0
    %5291 = vmatpush1.msra.mxu0 0.0
    %5292 = vmatprep.subr.mxu0 0.0
    %5293 = vmatpush1.msra.mxu0 0.0
    %5294 = vmatprep.subr.mxu0 0.0
    %5295 = vmatpush1.msra.mxu0 0.0
    %5296 = vmatprep.subr.mxu0 0.0
    %5297 = vmatpush1.msra.mxu0 0.0
    %5298 = vmatprep.mubr.f32.mxu0 0.0
    %5299 = vmatmul.mubr.f32.gmra.mrb[0].mxu0 %v5229
    %v5300 = vpop.f32.mrb[0].mxu0
    %v5301 = vadd.f32 %v5227, %v5300
    %v5302 = vpop.f32.mrb[0].mxu0
    %5303 = vmatprep.mubr.f32.mxu0 0.0
    %5304 = vmatmul.mubr.f32.gmra.mrb[0].mxu0 %v5232
    %v5305 = vpop.f32.mrb[0].mxu0
    %v5306 = vadd.f32 %v5227, %v5305
    %v5307 = vpop.f32.mrb[0].mxu0
    %5308 = vdwg.mxu0
    %vm5309 = vcmp.gt.f32.partialorder %v5301, 0.0
    %vm5310 = vcmp.gt.f32.partialorder %v5306, 0.0
    %v5311 = vmul.f32 %v5301, 0.01
    %v5312 = vmul.f32 %v5306, 0.01
    %v5313 = vsel %vm5309, %v5301, %v5311
    %v5314 = vsel %vm5310, %v5306, %v5312
    %v5315 = vlaneseq
    %v5316 = vshrl.u32 %v5315, 7
    %v5317 = vsub.s32 4, %v5316
    %v5318 = vrot.slane %v144, %v5317
    %v5320 = vsel %vm4696, %v5313, 0
    %v5323 = vsel %vm4696, %v5314, 0
    %5325 = vmatprep.subr.mxu0 0.0
    %5326 = vmatpush1.msra.mxu0 %v126
    %5327 = vmatprep.subr.mxu0 0.0
    %5328 = vmatpush1.msra.mxu0 %v127
    %5329 = vmatprep.subr.mxu0 0.0
    %5330 = vmatpush1.msra.mxu0 %v128
    %5331 = vmatprep.subr.mxu0 0.0
    %5332 = vmatpush1.msra.mxu0 0.0
    %5333 = vmatprep.subr.mxu0 0.0
    %5334 = vmatpush1.msra.mxu0 0.0
    %5335 = vmatprep.subr.mxu0 0.0
    %5336 = vmatpush1.msra.mxu0 0.0
    %5337 = vmatprep.subr.mxu0 0.0
    %5338 = vmatpush1.msra.mxu0 0.0
    %5339 = vmatprep.subr.mxu0 0.0
    %5340 = vmatpush1.msra.mxu0 0.0
    %5341 = vmatprep.subr.mxu0 0.0
    %5342 = vmatpush1.msra.mxu0 0.0
    %5343 = vmatprep.subr.mxu0 0.0
    %5344 = vmatpush1.msra.mxu0 0.0
    %5345 = vmatprep.subr.mxu0 0.0
    %5346 = vmatpush1.msra.mxu0 0.0
    %5347 = vmatprep.subr.mxu0 0.0
    %5348 = vmatpush1.msra.mxu0 0.0
    %5349 = vmatprep.subr.mxu0 0.0
    %5350 = vmatpush1.msra.mxu0 0.0
    %5351 = vmatprep.subr.mxu0 0.0
    %5352 = vmatpush1.msra.mxu0 0.0
    %5353 = vmatprep.subr.mxu0 0.0
    %5354 = vmatpush1.msra.mxu0 0.0
    %5355 = vmatprep.subr.mxu0 0.0
    %5356 = vmatpush1.msra.mxu0 0.0
    %5357 = vmatprep.subr.mxu0 0.0
    %5358 = vmatpush1.msra.mxu0 0.0
    %5359 = vmatprep.subr.mxu0 0.0
    %5360 = vmatpush1.msra.mxu0 0.0
    %5361 = vmatprep.subr.mxu0 0.0
    %5362 = vmatpush1.msra.mxu0 0.0
    %5363 = vmatprep.subr.mxu0 0.0
    %5364 = vmatpush1.msra.mxu0 0.0
    %5365 = vmatprep.subr.mxu0 0.0
    %5366 = vmatpush1.msra.mxu0 0.0
    %5367 = vmatprep.subr.mxu0 0.0
    %5368 = vmatpush1.msra.mxu0 0.0
    %5369 = vmatprep.subr.mxu0 0.0
    %5370 = vmatpush1.msra.mxu0 0.0
    %5371 = vmatprep.subr.mxu0 0.0
    %5372 = vmatpush1.msra.mxu0 0.0
    %5373 = vmatprep.subr.mxu0 0.0
    %5374 = vmatpush1.msra.mxu0 0.0
    %5375 = vmatprep.subr.mxu0 0.0
    %5376 = vmatpush1.msra.mxu0 0.0
    %5377 = vmatprep.subr.mxu0 0.0
    %5378 = vmatpush1.msra.mxu0 0.0
    %5379 = vmatprep.subr.mxu0 0.0
    %5380 = vmatpush1.msra.mxu0 0.0
    %5381 = vmatprep.subr.mxu0 0.0
    %5382 = vmatpush1.msra.mxu0 0.0
    %5383 = vmatprep.subr.mxu0 0.0
    %5384 = vmatpush1.msra.mxu0 0.0
    %5385 = vmatprep.subr.mxu0 0.0
    %5386 = vmatpush1.msra.mxu0 0.0
    %5387 = vmatprep.subr.mxu0 0.0
    %5388 = vmatpush1.msra.mxu0 0.0
    %5389 = vmatprep.mubr.f32.mxu0 0.0
    %5390 = vmatmul.mubr.f32.gmra.mrb[0].mxu0 %v5320
    %v5391 = vpop.f32.mrb[0].mxu0
    %v5392 = vadd.f32 %v5318, %v5391
    %v5393 = vpop.f32.mrb[0].mxu0
    %5394 = vmatprep.mubr.f32.mxu0 0.0
    %5395 = vmatmul.mubr.f32.gmra.mrb[0].mxu0 %v5323
    %v5396 = vpop.f32.mrb[0].mxu0
    %v5397 = vadd.f32 %v5318, %v5396
    %v5398 = vpop.f32.mrb[0].mxu0
    %5399 = vdwg.mxu0
    %v5400 = vadd.f32 %v5222, %v5392
    %v5401 = vadd.f32 %v5223, %v5397
    %v5402 = vsel %vm4479, %v5400, 0.0
    %5403 = vadd.xlane.f32.xlu0 %v5402
    %v5404 = vpop.xlane.xlu0 %5403
    %v5405 = vsel %vm5187, %v5401, 0.0
    %5406 = vadd.xlane.f32.xlu0 %v5405
    %v5407 = vpop.xlane.xlu0 %5406
    %v5408 = vmul.f32 %v5404, %v5191
    %v5409 = vmul.f32 %v5407, %v5191
    %v5410 = vsub.f32 %v5400, %v5408
    %v5411 = vsub.f32 %v5401, %v5409
    %v5412 = vmul.f32 %v5410, %v5410
    %v5413 = vmul.f32 %v5411, %v5411
    %v5414 = vsel %vm4479, %v5412, 0.0
    %5415 = vadd.xlane.f32.xlu0 %v5414
    %v5416 = vpop.xlane.xlu0 %5415
    %v5417 = vsel %vm5187, %v5413, 0.0
    %5418 = vadd.xlane.f32.xlu0 %v5417
    %v5419 = vpop.xlane.xlu0 %5418
    %v5420 = vmul.f32 %v5416, %v5191
    %v5421 = vmul.f32 %v5419, %v5191
    %v5422 = vadd.f32 %v5420, 1e-05
    %v5423 = vadd.f32 %v5421, 1e-05
    %v5424 = vrsqrt.pop %v5422
    %v5425 = vrsqrt.pop %v5423
    %v5426 = vmul.f32 %v5410, %v5424
    %v5427 = vmul.f32 %v5411, %v5425
    %v5428 = vlaneseq
    %v5429 = vshrl.u32 %v5428, 7
    %v5430 = vsub.s32 5, %v5429
    %v5431 = vrot.slane %v144, %v5430
    %v5432 = vmul.f32 %v5426, %v5431
    %v5433 = vmul.f32 %v5427, %v5431
    %v5434 = vlaneseq
    %v5435 = vshrl.u32 %v5434, 7
    %v5436 = vsub.s32 6, %v5435
    %v5437 = vrot.slane %v144, %v5436
    %v5438 = vadd.f32 %v5432, %v5437
    %v5439 = vadd.f32 %v5433, %v5437
    %v5441 = vrot.slane %v5438, 4
    %5442 = vrot.lane.b32.xlu0 %v5441, 8
    %v5443 = vpop.permute.xlu0 %5442
    %5446 = vrot.lane.b32.xlu0 %v5439, 16
    %v5447 = vpop.permute.xlu0 %5446
    %v5449 = vsel %vm4479, %v5438, %v5443
    %v5450 = vsel %vm4662, %v5449, %v5447
    %v5451 = vlaneseq
    %v5452 = vshrl.u32 %v5451, 7
    %v5453 = vsub.s32 7, %v5452
    %v5454 = vrot.slane %v144, %v5453
    %v5456 = vsel %vm4696, %v5450, 0
    %5458 = vmatprep.subr.mxu0 0.0
    %5459 = vmatpush1.msra.mxu0 %v129
    %5460 = vmatprep.subr.mxu0 0.0
    %5461 = vmatpush1.msra.mxu0 %v130
    %5462 = vmatprep.subr.mxu0 0.0
    %5463 = vmatpush1.msra.mxu0 %v131
    %5464 = vmatprep.subr.mxu0 0.0
    %5465 = vmatpush1.msra.mxu0 0.0
    %5466 = vmatprep.subr.mxu0 0.0
    %5467 = vmatpush1.msra.mxu0 0.0
    %5468 = vmatprep.subr.mxu0 0.0
    %5469 = vmatpush1.msra.mxu0 0.0
    %5470 = vmatprep.subr.mxu0 0.0
    %5471 = vmatpush1.msra.mxu0 0.0
    %5472 = vmatprep.subr.mxu0 0.0
    %5473 = vmatpush1.msra.mxu0 0.0
    %5474 = vmatprep.subr.mxu0 0.0
    %5475 = vmatpush1.msra.mxu0 0.0
    %5476 = vmatprep.subr.mxu0 0.0
    %5477 = vmatpush1.msra.mxu0 0.0
    %5478 = vmatprep.subr.mxu0 0.0
    %5479 = vmatpush1.msra.mxu0 0.0
    %5480 = vmatprep.subr.mxu0 0.0
    %5481 = vmatpush1.msra.mxu0 0.0
    %5482 = vmatprep.subr.mxu0 0.0
    %5483 = vmatpush1.msra.mxu0 0.0
    %5484 = vmatprep.subr.mxu0 0.0
    %5485 = vmatpush1.msra.mxu0 0.0
    %5486 = vmatprep.subr.mxu0 0.0
    %5487 = vmatpush1.msra.mxu0 0.0
    %5488 = vmatprep.subr.mxu0 0.0
    %5489 = vmatpush1.msra.mxu0 0.0
    %5490 = vmatprep.subr.mxu0 0.0
    %5491 = vmatpush1.msra.mxu0 0.0
    %5492 = vmatprep.subr.mxu0 0.0
    %5493 = vmatpush1.msra.mxu0 0.0
    %5494 = vmatprep.subr.mxu0 0.0
    %5495 = vmatpush1.msra.mxu0 0.0
    %5496 = vmatprep.subr.mxu0 0.0
    %5497 = vmatpush1.msra.mxu0 0.0
    %5498 = vmatprep.subr.mxu0 0.0
    %5499 = vmatpush1.msra.mxu0 0.0
    %5500 = vmatprep.subr.mxu0 0.0
    %5501 = vmatpush1.msra.mxu0 0.0
    %5502 = vmatprep.subr.mxu0 0.0
    %5503 = vmatpush1.msra.mxu0 0.0
    %5504 = vmatprep.subr.mxu0 0.0
    %5505 = vmatpush1.msra.mxu0 0.0
    %5506 = vmatprep.subr.mxu0 0.0
    %5507 = vmatpush1.msra.mxu0 0.0
    %5508 = vmatprep.subr.mxu0 0.0
    %5509 = vmatpush1.msra.mxu0 0.0
    %5510 = vmatprep.subr.mxu0 0.0
    %5511 = vmatpush1.msra.mxu0 0.0
    %5512 = vmatprep.subr.mxu0 0.0
    %5513 = vmatpush1.msra.mxu0 0.0
    %5514 = vmatprep.subr.mxu0 0.0
    %5515 = vmatpush1.msra.mxu0 0.0
    %5516 = vmatprep.subr.mxu0 0.0
    %5517 = vmatpush1.msra.mxu0 0.0
    %5518 = vmatprep.subr.mxu0 0.0
    %5519 = vmatpush1.msra.mxu0 0.0
    %5520 = vmatprep.subr.mxu0 0.0
    %5521 = vmatpush1.msra.mxu0 0.0
    %5522 = vmatprep.mubr.f32.mxu0 0.0
    %5523 = vmatmul.mubr.f32.gmra.mrb[0].mxu0 %v5456
    %v5524 = vpop.f32.mrb[0].mxu0
    %v5525 = vadd.f32 %v5454, %v5524
    %v5526 = vpop.f32.mrb[0].mxu0
    %5527 = vdwg.mxu0
    %vm5528 = vcmask 3072
    %5529 = vst.msk [vmem:[%s6] sm:$0xf] %vm5528, %v5525
    // Predicated region
    $region50: #{tpu_custom_call.1} parent=1 // pred_check
      _
    $region51: #{tpu_custom_call.1} parent=1 // pred_check_branch
      %5531 = sbr.rel (0) target = $region53
    $region52: #{tpu_custom_call.1} parent=1 // pred_region
      _
    $region53: #{tpu_custom_call.1} parent=1 // pred_fallthru
      _
    // Predicated region
    $region54: #{tpu_custom_call.1} parent=1 // pred_check
      _
    $region55: #{tpu_custom_call.1} parent=1 // pred_check_branch
      %5533 = sbr.rel (0) target = $region57
    $region56: #{tpu_custom_call.1} parent=1 // pred_region
      _
    $region57: #{tpu_custom_call.1} parent=1 // pred_fallthru
      _
    %5534 = vsyncpa [#allocation3], 1
    %5535 = vsyncpa [#allocation5], 1
    %5536 = vsyncpa [#allocation8], 1
    %5537 = vsyncpa [#allocation11], 1

</llo_original>
